<compile_context>
chip_gen: v6e
topology: v6e:2x2x1
jax: 0.10.0
libtpu: 0.0.40
codegen_flags: <defaults>
</compile_context>

<pallas_src>
import jax
import jax.numpy as jnp
from jax.experimental import pallas as pl
from jax.experimental.pallas import tpu as pltpu

LANES = 128
SUBLANES = 8
M_TILE_CAP = 512  # keeps (4 patches + out) per step well under v7x scoped VMEM


def _round_up(x, m):
    return (x + m - 1) // m * m


def _choose_m_tile(m, cap=M_TILE_CAP):
    """Pick an M tile (multiple of 8) and the padded M that it divides."""
    ma = _round_up(m, SUBLANES)
    if ma <= cap:
        return ma, ma
    return cap, _round_up(ma, cap)


# ---------------------------------------------------------------------------
# Pallas kernels
# ---------------------------------------------------------------------------
def _conv_pool_kernel(p00, p01, p10, p11, w_ref, b_ref, o_ref):
    """Fused im2col-GEMM + bias + ReLU + 2x2 maxpool.

    p_qr holds im2col patches whose conv-output position is pool-window corner
    (q, r); max over the four dots == maxpool(relu(conv)) since the bias is
    shared and ReLU is monotonic.
    """
    w = w_ref[...]
    d = jnp.dot(p00[...], w, preferred_element_type=jnp.float32)
    d = jnp.maximum(d, jnp.dot(p01[...], w, preferred_element_type=jnp.float32))
    d = jnp.maximum(d, jnp.dot(p10[...], w, preferred_element_type=jnp.float32))
    d = jnp.maximum(d, jnp.dot(p11[...], w, preferred_element_type=jnp.float32))
    o_ref[...] = jnp.maximum(d + b_ref[...], 0.0)


def _fc_fused_kernel(x_ref, w1, b1, w2, b2, w3, b3, o_ref):
    """fc1+ReLU -> fc2+ReLU -> fc3 chained in VMEM; only logits are stored."""
    h = jnp.dot(x_ref[...], w1[...], preferred_element_type=jnp.float32) + b1[...]
    h = jnp.maximum(h, 0.0)
    h = jnp.dot(h, w2[...], preferred_element_type=jnp.float32) + b2[...]
    h = jnp.maximum(h, 0.0)
    o_ref[...] = jnp.dot(h, w3[...], preferred_element_type=jnp.float32) + b3[...]


# ---------------------------------------------------------------------------
# Conv + pool stage
# ---------------------------------------------------------------------------
def _pooled_patches(x_nhwc, KH, KW, qi, qj, ph, pw, Kp, Mp):
    """im2col patches for pool-window corner (qi, qj), padded to (Mp, Kp)."""
    B, H, W, C = x_nhwc.shape
    cols = []
    for kh in range(KH):
        for kw in range(KW):
            r0, c0 = qi + kh, qj + kw
            cols.append(x_nhwc[:, r0:r0 + 2 * ph:2, c0:c0 + 2 * pw:2, :])
    p = jnp.stack(cols, axis=3)                       # [B, ph, pw, KH*KW, C]
    p = p.reshape(B * ph * pw, KH * KW * C)           # feature order (kh,kw,c)
    M, K = p.shape
    return jnp.pad(p, ((0, Mp - M), (0, Kp - K)))


def conv_pool_stage(x_nhwc, w_pad, b_pad, KH, KW, oc):
    """relu(conv(x)) followed by 2x2 maxpool, fused in one Pallas call.

    x_nhwc: [B, H, W, C]; w_pad: [Kp, 128] (flattened (kh,kw,c) order);
    b_pad: [1, 128].  Returns [B, oh//2, ow//2, oc].
    """
    B, H, W, C = x_nhwc.shape
    oh, ow = H - KH + 1, W - KW + 1
    assert oh % 2 == 0 and ow % 2 == 0, "maxpool(2,2) needs even conv output"
    ph, pw = oh // 2, ow // 2
    Kp = w_pad.shape[0]
    M = B * ph * pw
    tile_m, Mp = _choose_m_tile(M)

    patches = [
        _pooled_patches(x_nhwc, KH, KW, qi, qj, ph, pw, Kp, Mp)
        for qi in (0, 1) for qj in (0, 1)
    ]

    cost = pl.CostEstimate(
        flops=2 * 4 * Mp * Kp * LANES,
        transcendentals=0,
        bytes_accessed=4 * (4 * Mp * Kp + Kp * LANES + Mp * LANES),
    )
    out = pl.pallas_call(
        _conv_pool_kernel,
        grid=(Mp // tile_m,),
        out_shape=jax.ShapeDtypeStruct((Mp, LANES), jnp.float32),
        in_specs=[
            pl.BlockSpec((tile_m, Kp), lambda i: (i, 0)),
            pl.BlockSpec((tile_m, Kp), lambda i: (i, 0)),
            pl.BlockSpec((tile_m, Kp), lambda i: (i, 0)),
            pl.BlockSpec((tile_m, Kp), lambda i: (i, 0)),
            pl.BlockSpec((Kp, LANES), lambda i: (0, 0)),
            pl.BlockSpec((1, LANES), lambda i: (0, 0)),
        ],
        out_specs=pl.BlockSpec((tile_m, LANES), lambda i: (i, 0)),
        compiler_params=pltpu.CompilerParams(
            dimension_semantics=("parallel",)),
        cost_estimate=cost,
    )(*patches, w_pad, b_pad)

    return out[:M, :oc].reshape(B, ph, pw, oc)


# ---------------------------------------------------------------------------
# Fused FC head
# ---------------------------------------------------------------------------
def fc_fused(x2d, fc_params):
    """x2d: [B, 400] with feature order (h, w, c).  Returns logits [B, 10]."""
    w1, b1, w2, b2, w3, b3 = fc_params
    B, K = x2d.shape
    Kp = w1.shape[0]
    tile_b, Bp = _choose_m_tile(B)
    xp = jnp.pad(x2d, ((0, Bp - B), (0, Kp - K)))

    cost = pl.CostEstimate(
        flops=2 * Bp * (Kp * LANES + LANES * LANES + LANES * LANES),
        transcendentals=0,
        bytes_accessed=4 * (Bp * Kp + Kp * LANES + 2 * LANES * LANES
                            + Bp * LANES),
    )
    out = pl.pallas_call(
        _fc_fused_kernel,
        grid=(Bp // tile_b,),
        out_shape=jax.ShapeDtypeStruct((Bp, LANES), jnp.float32),
        in_specs=[
            pl.BlockSpec((tile_b, Kp), lambda i: (i, 0)),
            pl.BlockSpec((Kp, LANES), lambda i: (0, 0)),
            pl.BlockSpec((1, LANES), lambda i: (0, 0)),
            pl.BlockSpec((LANES, LANES), lambda i: (0, 0)),
            pl.BlockSpec((1, LANES), lambda i: (0, 0)),
            pl.BlockSpec((LANES, LANES), lambda i: (0, 0)),
            pl.BlockSpec((1, LANES), lambda i: (0, 0)),
        ],
        out_specs=pl.BlockSpec((tile_b, LANES), lambda i: (i, 0)),
        compiler_params=pltpu.CompilerParams(
            dimension_semantics=("parallel",)),
        cost_estimate=cost,
    )(xp, w1, b1, w2, b2, w3, b3)
    return out[:B, :10]


# ---------------------------------------------------------------------------
# Parameters: PyTorch-layout init + one-time Pallas-layout preparation
# ---------------------------------------------------------------------------
def init_params(key):
    """Deterministic PyTorch-like uniform(-1/sqrt(fan_in), +) init, torch layout."""
    def uniform(k, shape, fan_in):
        bound = 1.0 / jnp.sqrt(jnp.float32(fan_in))
        return jax.random.uniform(k, shape, jnp.float32, -bound, bound)

    ks = jax.random.split(key, 10)
    return {
        "conv1_w": uniform(ks[0], (6, 3, 5, 5), 3 * 5 * 5),
        "conv1_b": uniform(ks[1], (6,), 3 * 5 * 5),
        "conv2_w": uniform(ks[2], (16, 6, 5, 5), 6 * 5 * 5),
        "conv2_b": uniform(ks[3], (16,), 6 * 5 * 5),
        "fc1_w": uniform(ks[4], (120, 400), 400),   # PyTorch Linear: [out, in]
        "fc1_b": uniform(ks[5], (120,), 400),
        "fc2_w": uniform(ks[6], (84, 120), 120),
        "fc2_b": uniform(ks[7], (84,), 120),
        "fc3_w": uniform(ks[8], (10, 84), 84),
        "fc3_b": uniform(ks[9], (10,), 84),
    }


def prepare_params(p):
    """One-time (hoisted out of forward) transpose + pad to MXU layouts."""
    def prep_conv(w, b):
        OC, IC, KH, KW = w.shape
        K = KH * KW * IC
        Kp = _round_up(K, LANES)
        # match patch feature order (kh, kw, ic)
        wf = jnp.transpose(w, (2, 3, 1, 0)).reshape(K, OC)
        wp = jnp.zeros((Kp, LANES), jnp.float32).at[:K, :OC].set(wf)
        bp = jnp.zeros((1, LANES), jnp.float32).at[0, :OC].set(b)
        return wp, bp

    def prep_fc(w, b, Kp):
        OUT, IN = w.shape
        wp = jnp.zeros((Kp, LANES), jnp.float32).at[:IN, :OUT].set(w.T)
        bp = jnp.zeros((1, LANES), jnp.float32).at[0, :OUT].set(b)
        return wp, bp

    c1w, c1b = prep_conv(p["conv1_w"], p["conv1_b"])
    c2w, c2b = prep_conv(p["conv2_w"], p["conv2_b"])
    # torch flatten order is (c, h, w); our channel-last activation flattens
    # as (h, w, c) -> permute fc1 weight columns accordingly.
    fc1_w = (p["fc1_w"].reshape(120, 16, 5, 5)
             .transpose(0, 2, 3, 1).reshape(120, 400))
    f1w, f1b = prep_fc(fc1_w, p["fc1_b"], _round_up(400, LANES))
    f2w, f2b = prep_fc(p["fc2_w"], p["fc2_b"], LANES)
    f3w, f3b = prep_fc(p["fc3_w"], p["fc3_b"], LANES)
    return {
        "conv1": (c1w, c1b),
        "conv2": (c2w, c2b),
        "fc": (f1w, f1b, f2w, f2b, f3w, f3b),
    }


# ---------------------------------------------------------------------------
# Forward
# ---------------------------------------------------------------------------
def net_forward(x_nchw, pp):
    x = jnp.transpose(x_nchw, (0, 2, 3, 1))                       # NHWC once
    x = conv_pool_stage(x, *pp["conv1"], KH=5, KW=5, oc=6)        # [B,14,14,6]
    x = conv_pool_stage(x, *pp["conv2"], KH=5, KW=5, oc=16)       # [B,5,5,16]
    B = x.shape[0]
    x = x.reshape(B, 5 * 5 * 16)                                  # (h, w, c)
    return fc_fused(x, pp["fc"])                                  # [B,10]


if __name__ == "__main__":
    key = jax.random.PRNGKey(0)
    k_x, k_p = jax.random.split(key)
    # forward implies 32x32 spatial (16*5*5 after two conv5 + pool2 stages)
    x = jax.random.normal(k_x, (2, 3, 32, 32), jnp.float32)
    params = init_params(k_p)
    prepped = prepare_params(params)          # weight padding hoisted, done once

    fwd = jax.jit(net_forward)
    out = jax.block_until_ready(fwd(x, prepped))
    assert out.shape == (2, 10) and out.dtype == jnp.float32
    print("KERNEL_OK")
</pallas_src>

<mosaic_0001>
module attributes {stable_mosaic.version = 11 : i64} {
  func.func @_conv_pool_kernel(%arg0: i32, %arg1: memref<392x128xf32, #tpu.memory_space<vmem>>, %arg2: memref<392x128xf32, #tpu.memory_space<vmem>>, %arg3: memref<392x128xf32, #tpu.memory_space<vmem>>, %arg4: memref<392x128xf32, #tpu.memory_space<vmem>>, %arg5: memref<128x128xf32, #tpu.memory_space<vmem>>, %arg6: memref<1x128xf32, #tpu.memory_space<vmem>>, %arg7: memref<392x128xf32, #tpu.memory_space<vmem>>) attributes {dimension_semantics = [#tpu.dimension_semantics<parallel>], iteration_bounds = array<i64: 1>, scalar_prefetch = 0 : i64, scratch_operands = 0 : i64, tpu.core_type = #tpu.core_type<tc>, window_params = [{transform_indices = @transform_0, window_bounds = array<i64: 392, 128>}, {transform_indices = @transform_1, window_bounds = array<i64: 392, 128>}, {transform_indices = @transform_2, window_bounds = array<i64: 392, 128>}, {transform_indices = @transform_3, window_bounds = array<i64: 392, 128>}, {pipeline_mode = #tpu.pipeline_mode<synchronous>, transform_indices = @transform_4, window_bounds = array<i64: 128, 128>}, {pipeline_mode = #tpu.pipeline_mode<synchronous>, transform_indices = @transform_5, window_bounds = array<i64: 1, 128>}, {transform_indices = @transform_6, window_bounds = array<i64: 392, 128>}]} {
    %c0 = arith.constant 0 : index
    %c0_0 = arith.constant 0 : index
    %0 = vector.load %arg5[%c0, %c0_0] : memref<128x128xf32, #tpu.memory_space<vmem>>, vector<128x128xf32>
    %c0_1 = arith.constant 0 : index
    %c0_2 = arith.constant 0 : index
    %1 = vector.load %arg1[%c0_1, %c0_2] : memref<392x128xf32, #tpu.memory_space<vmem>>, vector<392x128xf32>
    %cst = arith.constant dense<0.000000e+00> : vector<392x128xf32>
    %2 = tpu.matmul %1, %0, %cst {dimension_numbers = #tpu.dot_dimension_numbers<[1], [0], [0], [1], [0, 0, 1, 1], [], []>} : vector<392x128xf32>, vector<128x128xf32>, vector<392x128xf32> -> vector<392x128xf32>
    %c0_3 = arith.constant 0 : index
    %c0_4 = arith.constant 0 : index
    %3 = vector.load %arg2[%c0_3, %c0_4] : memref<392x128xf32, #tpu.memory_space<vmem>>, vector<392x128xf32>
    %cst_5 = arith.constant dense<0.000000e+00> : vector<392x128xf32>
    %4 = tpu.matmul %3, %0, %cst_5 {dimension_numbers = #tpu.dot_dimension_numbers<[1], [0], [0], [1], [0, 0, 1, 1], [], []>} : vector<392x128xf32>, vector<128x128xf32>, vector<392x128xf32> -> vector<392x128xf32>
    %5 = arith.maximumf %2, %4 : vector<392x128xf32>
    %c0_6 = arith.constant 0 : index
    %c0_7 = arith.constant 0 : index
    %6 = vector.load %arg3[%c0_6, %c0_7] : memref<392x128xf32, #tpu.memory_space<vmem>>, vector<392x128xf32>
    %cst_8 = arith.constant dense<0.000000e+00> : vector<392x128xf32>
    %7 = tpu.matmul %6, %0, %cst_8 {dimension_numbers = #tpu.dot_dimension_numbers<[1], [0], [0], [1], [0, 0, 1, 1], [], []>} : vector<392x128xf32>, vector<128x128xf32>, vector<392x128xf32> -> vector<392x128xf32>
    %8 = arith.maximumf %5, %7 : vector<392x128xf32>
    %c0_9 = arith.constant 0 : index
    %c0_10 = arith.constant 0 : index
    %9 = vector.load %arg4[%c0_9, %c0_10] : memref<392x128xf32, #tpu.memory_space<vmem>>, vector<392x128xf32>
    %cst_11 = arith.constant dense<0.000000e+00> : vector<392x128xf32>
    %10 = tpu.matmul %9, %0, %cst_11 {dimension_numbers = #tpu.dot_dimension_numbers<[1], [0], [0], [1], [0, 0, 1, 1], [], []>} : vector<392x128xf32>, vector<128x128xf32>, vector<392x128xf32> -> vector<392x128xf32>
    %11 = arith.maximumf %8, %10 : vector<392x128xf32>
    %c0_12 = arith.constant 0 : index
    %c0_13 = arith.constant 0 : index
    %12 = vector.load %arg6[%c0_12, %c0_13] : memref<1x128xf32, #tpu.memory_space<vmem>>, vector<1x128xf32>
    %13 = vector.broadcast %12 : vector<1x128xf32> to vector<392x128xf32>
    %14 = arith.addf %11, %13 : vector<392x128xf32>
    %cst_14 = arith.constant 0.000000e+00 : f32
    %15 = vector.broadcast %cst_14 : f32 to vector<392x128xf32>
    %16 = arith.maximumf %14, %15 : vector<392x128xf32>
    %c0_15 = arith.constant 0 : index
    %c0_16 = arith.constant 0 : index
    %17 = vector.load %arg7[%c0_15, %c0_16] : memref<392x128xf32, #tpu.memory_space<vmem>>, vector<392x128xf32>
    tpu.vector_store %arg7[%c0_15, %c0_16], %16 {strides = array<i32>} : memref<392x128xf32, #tpu.memory_space<vmem>>, vector<392x128xf32>,
    return
  }
  func.func @transform_0(%arg0: i32) -> (i32, i32) {
    %c0_i32 = arith.constant 0 : i32
    %c0_i32_0 = arith.constant 0 : i32
    return %arg0, %c0_i32 : i32, i32
  }
  func.func @transform_1(%arg0: i32) -> (i32, i32) {
    %c0_i32 = arith.constant 0 : i32
    %c0_i32_0 = arith.constant 0 : i32
    return %arg0, %c0_i32 : i32, i32
  }
  func.func @transform_2(%arg0: i32) -> (i32, i32) {
    %c0_i32 = arith.constant 0 : i32
    %c0_i32_0 = arith.constant 0 : i32
    return %arg0, %c0_i32 : i32, i32
  }
  func.func @transform_3(%arg0: i32) -> (i32, i32) {
    %c0_i32 = arith.constant 0 : i32
    %c0_i32_0 = arith.constant 0 : i32
    return %arg0, %c0_i32 : i32, i32
  }
  func.func @transform_4(%arg0: i32) -> (i32, i32) {
    %c0_i32 = arith.constant 0 : i32
    %c0_i32_0 = arith.constant 0 : i32
    %c0_i32_1 = arith.constant 0 : i32
    return %c0_i32, %c0_i32_0 : i32, i32
  }
  func.func @transform_5(%arg0: i32) -> (i32, i32) {
    %c0_i32 = arith.constant 0 : i32
    %c0_i32_0 = arith.constant 0 : i32
    %c0_i32_1 = arith.constant 0 : i32
    return %c0_i32, %c0_i32_0 : i32, i32
  }
  func.func @transform_6(%arg0: i32) -> (i32, i32) {
    %c0_i32 = arith.constant 0 : i32
    %c0_i32_0 = arith.constant 0 : i32
    return %arg0, %c0_i32 : i32, i32
  }
}

module attributes {stable_mosaic.version = 11 : i64} {
  func.func @_conv_pool_kernel(%arg0: i32, %arg1: memref<56x256xf32, #tpu.memory_space<vmem>>, %arg2: memref<56x256xf32, #tpu.memory_space<vmem>>, %arg3: memref<56x256xf32, #tpu.memory_space<vmem>>, %arg4: memref<56x256xf32, #tpu.memory_space<vmem>>, %arg5: memref<256x128xf32, #tpu.memory_space<vmem>>, %arg6: memref<1x128xf32, #tpu.memory_space<vmem>>, %arg7: memref<56x128xf32, #tpu.memory_space<vmem>>) attributes {dimension_semantics = [#tpu.dimension_semantics<parallel>], iteration_bounds = array<i64: 1>, scalar_prefetch = 0 : i64, scratch_operands = 0 : i64, tpu.core_type = #tpu.core_type<tc>, window_params = [{transform_indices = @transform_0, window_bounds = array<i64: 56, 256>}, {transform_indices = @transform_1, window_bounds = array<i64: 56, 256>}, {transform_indices = @transform_2, window_bounds = array<i64: 56, 256>}, {transform_indices = @transform_3, window_bounds = array<i64: 56, 256>}, {pipeline_mode = #tpu.pipeline_mode<synchronous>, transform_indices = @transform_4, window_bounds = array<i64: 256, 128>}, {pipeline_mode = #tpu.pipeline_mode<synchronous>, transform_indices = @transform_5, window_bounds = array<i64: 1, 128>}, {transform_indices = @transform_6, window_bounds = array<i64: 56, 128>}]} {
    %c0 = arith.constant 0 : index
    %c0_0 = arith.constant 0 : index
    %0 = vector.load %arg5[%c0, %c0_0] : memref<256x128xf32, #tpu.memory_space<vmem>>, vector<256x128xf32>
    %c0_1 = arith.constant 0 : index
    %c0_2 = arith.constant 0 : index
    %1 = vector.load %arg1[%c0_1, %c0_2] : memref<56x256xf32, #tpu.memory_space<vmem>>, vector<56x256xf32>
    %cst = arith.constant dense<0.000000e+00> : vector<56x128xf32>
    %2 = tpu.matmul %1, %0, %cst {dimension_numbers = #tpu.dot_dimension_numbers<[1], [0], [0], [1], [0, 0, 1, 1], [], []>} : vector<56x256xf32>, vector<256x128xf32>, vector<56x128xf32> -> vector<56x128xf32>
    %c0_3 = arith.constant 0 : index
    %c0_4 = arith.constant 0 : index
    %3 = vector.load %arg2[%c0_3, %c0_4] : memref<56x256xf32, #tpu.memory_space<vmem>>, vector<56x256xf32>
    %cst_5 = arith.constant dense<0.000000e+00> : vector<56x128xf32>
    %4 = tpu.matmul %3, %0, %cst_5 {dimension_numbers = #tpu.dot_dimension_numbers<[1], [0], [0], [1], [0, 0, 1, 1], [], []>} : vector<56x256xf32>, vector<256x128xf32>, vector<56x128xf32> -> vector<56x128xf32>
    %5 = arith.maximumf %2, %4 : vector<56x128xf32>
    %c0_6 = arith.constant 0 : index
    %c0_7 = arith.constant 0 : index
    %6 = vector.load %arg3[%c0_6, %c0_7] : memref<56x256xf32, #tpu.memory_space<vmem>>, vector<56x256xf32>
    %cst_8 = arith.constant dense<0.000000e+00> : vector<56x128xf32>
    %7 = tpu.matmul %6, %0, %cst_8 {dimension_numbers = #tpu.dot_dimension_numbers<[1], [0], [0], [1], [0, 0, 1, 1], [], []>} : vector<56x256xf32>, vector<256x128xf32>, vector<56x128xf32> -> vector<56x128xf32>
    %8 = arith.maximumf %5, %7 : vector<56x128xf32>
    %c0_9 = arith.constant 0 : index
    %c0_10 = arith.constant 0 : index
    %9 = vector.load %arg4[%c0_9, %c0_10] : memref<56x256xf32, #tpu.memory_space<vmem>>, vector<56x256xf32>
    %cst_11 = arith.constant dense<0.000000e+00> : vector<56x128xf32>
    %10 = tpu.matmul %9, %0, %cst_11 {dimension_numbers = #tpu.dot_dimension_numbers<[1], [0], [0], [1], [0, 0, 1, 1], [], []>} : vector<56x256xf32>, vector<256x128xf32>, vector<56x128xf32> -> vector<56x128xf32>
    %11 = arith.maximumf %8, %10 : vector<56x128xf32>
    %c0_12 = arith.constant 0 : index
    %c0_13 = arith.constant 0 : index
    %12 = vector.load %arg6[%c0_12, %c0_13] : memref<1x128xf32, #tpu.memory_space<vmem>>, vector<1x128xf32>
    %13 = vector.broadcast %12 : vector<1x128xf32> to vector<56x128xf32>
    %14 = arith.addf %11, %13 : vector<56x128xf32>
    %cst_14 = arith.constant 0.000000e+00 : f32
    %15 = vector.broadcast %cst_14 : f32 to vector<56x128xf32>
    %16 = arith.maximumf %14, %15 : vector<56x128xf32>
    %c0_15 = arith.constant 0 : index
    %c0_16 = arith.constant 0 : index
    %17 = vector.load %arg7[%c0_15, %c0_16] : memref<56x128xf32, #tpu.memory_space<vmem>>, vector<56x128xf32>
    tpu.vector_store %arg7[%c0_15, %c0_16], %16 {strides = array<i32>} : memref<56x128xf32, #tpu.memory_space<vmem>>, vector<56x128xf32>,
    return
  }
  func.func @transform_0(%arg0: i32) -> (i32, i32) {
    %c0_i32 = arith.constant 0 : i32
    %c0_i32_0 = arith.constant 0 : i32
    return %arg0, %c0_i32 : i32, i32
  }
  func.func @transform_1(%arg0: i32) -> (i32, i32) {
    %c0_i32 = arith.constant 0 : i32
    %c0_i32_0 = arith.constant 0 : i32
    return %arg0, %c0_i32 : i32, i32
  }
  func.func @transform_2(%arg0: i32) -> (i32, i32) {
    %c0_i32 = arith.constant 0 : i32
    %c0_i32_0 = arith.constant 0 : i32
    return %arg0, %c0_i32 : i32, i32
  }
  func.func @transform_3(%arg0: i32) -> (i32, i32) {
    %c0_i32 = arith.constant 0 : i32
    %c0_i32_0 = arith.constant 0 : i32
    return %arg0, %c0_i32 : i32, i32
  }
  func.func @transform_4(%arg0: i32) -> (i32, i32) {
    %c0_i32 = arith.constant 0 : i32
    %c0_i32_0 = arith.constant 0 : i32
    %c0_i32_1 = arith.constant 0 : i32
    return %c0_i32, %c0_i32_0 : i32, i32
  }
  func.func @transform_5(%arg0: i32) -> (i32, i32) {
    %c0_i32 = arith.constant 0 : i32
    %c0_i32_0 = arith.constant 0 : i32
    %c0_i32_1 = arith.constant 0 : i32
    return %c0_i32, %c0_i32_0 : i32, i32
  }
  func.func @transform_6(%arg0: i32) -> (i32, i32) {
    %c0_i32 = arith.constant 0 : i32
    %c0_i32_0 = arith.constant 0 : i32
    return %arg0, %c0_i32 : i32, i32
  }
}

module attributes {stable_mosaic.version = 11 : i64} {
  func.func @_fc_fused_kernel(%arg0: i32, %arg1: memref<8x512xf32, #tpu.memory_space<vmem>>, %arg2: memref<512x128xf32, #tpu.memory_space<vmem>>, %arg3: memref<1x128xf32, #tpu.memory_space<vmem>>, %arg4: memref<128x128xf32, #tpu.memory_space<vmem>>, %arg5: memref<1x128xf32, #tpu.memory_space<vmem>>, %arg6: memref<128x128xf32, #tpu.memory_space<vmem>>, %arg7: memref<1x128xf32, #tpu.memory_space<vmem>>, %arg8: memref<8x128xf32, #tpu.memory_space<vmem>>) attributes {dimension_semantics = [#tpu.dimension_semantics<parallel>], iteration_bounds = array<i64: 1>, scalar_prefetch = 0 : i64, scratch_operands = 0 : i64, tpu.core_type = #tpu.core_type<tc>, window_params = [{transform_indices = @transform_0, window_bounds = array<i64: 8, 512>}, {pipeline_mode = #tpu.pipeline_mode<synchronous>, transform_indices = @transform_1, window_bounds = array<i64: 512, 128>}, {pipeline_mode = #tpu.pipeline_mode<synchronous>, transform_indices = @transform_2, window_bounds = array<i64: 1, 128>}, {pipeline_mode = #tpu.pipeline_mode<synchronous>, transform_indices = @transform_3, window_bounds = array<i64: 128, 128>}, {pipeline_mode = #tpu.pipeline_mode<synchronous>, transform_indices = @transform_4, window_bounds = array<i64: 1, 128>}, {pipeline_mode = #tpu.pipeline_mode<synchronous>, transform_indices = @transform_5, window_bounds = array<i64: 128, 128>}, {pipeline_mode = #tpu.pipeline_mode<synchronous>, transform_indices = @transform_6, window_bounds = array<i64: 1, 128>}, {transform_indices = @transform_7, window_bounds = array<i64: 8, 128>}]} {
    %c0 = arith.constant 0 : index
    %c0_0 = arith.constant 0 : index
    %0 = vector.load %arg1[%c0, %c0_0] : memref<8x512xf32, #tpu.memory_space<vmem>>, vector<8x512xf32>
    %c0_1 = arith.constant 0 : index
    %c0_2 = arith.constant 0 : index
    %1 = vector.load %arg2[%c0_1, %c0_2] : memref<512x128xf32, #tpu.memory_space<vmem>>, vector<512x128xf32>
    %cst = arith.constant dense<0.000000e+00> : vector<8x128xf32>
    %2 = tpu.matmul %0, %1, %cst {dimension_numbers = #tpu.dot_dimension_numbers<[1], [0], [0], [1], [0, 0, 1, 1], [], []>} : vector<8x512xf32>, vector<512x128xf32>, vector<8x128xf32> -> vector<8x128xf32>
    %c0_3 = arith.constant 0 : index
    %c0_4 = arith.constant 0 : index
    %3 = vector.load %arg3[%c0_3, %c0_4] : memref<1x128xf32, #tpu.memory_space<vmem>>, vector<1x128xf32>
    %4 = vector.broadcast %3 : vector<1x128xf32> to vector<8x128xf32>
    %5 = arith.addf %2, %4 : vector<8x128xf32>
    %cst_5 = arith.constant 0.000000e+00 : f32
    %6 = vector.broadcast %cst_5 : f32 to vector<8x128xf32>
    %7 = arith.maximumf %5, %6 : vector<8x128xf32>
    %c0_6 = arith.constant 0 : index
    %c0_7 = arith.constant 0 : index
    %8 = vector.load %arg4[%c0_6, %c0_7] : memref<128x128xf32, #tpu.memory_space<vmem>>, vector<128x128xf32>
    %cst_8 = arith.constant dense<0.000000e+00> : vector<8x128xf32>
    %9 = tpu.matmul %7, %8, %cst_8 {dimension_numbers = #tpu.dot_dimension_numbers<[1], [0], [0], [1], [0, 0, 1, 1], [], []>} : vector<8x128xf32>, vector<128x128xf32>, vector<8x128xf32> -> vector<8x128xf32>
    %c0_9 = arith.constant 0 : index
    %c0_10 = arith.constant 0 : index
    %10 = vector.load %arg5[%c0_9, %c0_10] : memref<1x128xf32, #tpu.memory_space<vmem>>, vector<1x128xf32>
    %11 = vector.broadcast %10 : vector<1x128xf32> to vector<8x128xf32>
    %12 = arith.addf %9, %11 : vector<8x128xf32>
    %cst_11 = arith.constant 0.000000e+00 : f32
    %13 = vector.broadcast %cst_11 : f32 to vector<8x128xf32>
    %14 = arith.maximumf %12, %13 : vector<8x128xf32>
    %c0_12 = arith.constant 0 : index
    %c0_13 = arith.constant 0 : index
    %15 = vector.load %arg6[%c0_12, %c0_13] : memref<128x128xf32, #tpu.memory_space<vmem>>, vector<128x128xf32>
    %cst_14 = arith.constant dense<0.000000e+00> : vector<8x128xf32>
    %16 = tpu.matmul %14, %15, %cst_14 {dimension_numbers = #tpu.dot_dimension_numbers<[1], [0], [0], [1], [0, 0, 1, 1], [], []>} : vector<8x128xf32>, vector<128x128xf32>, vector<8x128xf32> -> vector<8x128xf32>
    %c0_15 = arith.constant 0 : index
    %c0_16 = arith.constant 0 : index
    %17 = vector.load %arg7[%c0_15, %c0_16] : memref<1x128xf32, #tpu.memory_space<vmem>>, vector<1x128xf32>
    %18 = vector.broadcast %17 : vector<1x128xf32> to vector<8x128xf32>
    %19 = arith.addf %16, %18 : vector<8x128xf32>
    %c0_17 = arith.constant 0 : index
    %c0_18 = arith.constant 0 : index
    %20 = vector.load %arg8[%c0_17, %c0_18] : memref<8x128xf32, #tpu.memory_space<vmem>>, vector<8x128xf32>
    tpu.vector_store %arg8[%c0_17, %c0_18], %19 {strides = array<i32>} : memref<8x128xf32, #tpu.memory_space<vmem>>, vector<8x128xf32>,
    return
  }
  func.func @transform_0(%arg0: i32) -> (i32, i32) {
    %c0_i32 = arith.constant 0 : i32
    %c0_i32_0 = arith.constant 0 : i32
    return %arg0, %c0_i32 : i32, i32
  }
  func.func @transform_1(%arg0: i32) -> (i32, i32) {
    %c0_i32 = arith.constant 0 : i32
    %c0_i32_0 = arith.constant 0 : i32
    %c0_i32_1 = arith.constant 0 : i32
    return %c0_i32, %c0_i32_0 : i32, i32
  }
  func.func @transform_2(%arg0: i32) -> (i32, i32) {
    %c0_i32 = arith.constant 0 : i32
    %c0_i32_0 = arith.constant 0 : i32
    %c0_i32_1 = arith.constant 0 : i32
    return %c0_i32, %c0_i32_0 : i32, i32
  }
  func.func @transform_3(%arg0: i32) -> (i32, i32) {
    %c0_i32 = arith.constant 0 : i32
    %c0_i32_0 = arith.constant 0 : i32
    %c0_i32_1 = arith.constant 0 : i32
    return %c0_i32, %c0_i32_0 : i32, i32
  }
  func.func @transform_4(%arg0: i32) -> (i32, i32) {
    %c0_i32 = arith.constant 0 : i32
    %c0_i32_0 = arith.constant 0 : i32
    %c0_i32_1 = arith.constant 0 : i32
    return %c0_i32, %c0_i32_0 : i32, i32
  }
  func.func @transform_5(%arg0: i32) -> (i32, i32) {
    %c0_i32 = arith.constant 0 : i32
    %c0_i32_0 = arith.constant 0 : i32
    %c0_i32_1 = arith.constant 0 : i32
    return %c0_i32, %c0_i32_0 : i32, i32
  }
  func.func @transform_6(%arg0: i32) -> (i32, i32) {
    %c0_i32 = arith.constant 0 : i32
    %c0_i32_0 = arith.constant 0 : i32
    %c0_i32_1 = arith.constant 0 : i32
    return %c0_i32, %c0_i32_0 : i32, i32
  }
  func.func @transform_7(%arg0: i32) -> (i32, i32) {
    %c0_i32 = arith.constant 0 : i32
    %c0_i32_0 = arith.constant 0 : i32
    return %arg0, %c0_i32 : i32, i32
  }
}

</mosaic_0001>

<llo_original>
// kernel: net_forward.3
$region0: #{net_forward.3}
  #allocation0 [shape = 'u32[]', space=smem, size = 0x4, offset = 0x4, fixed_abs, tag = 'smem constant byte address 0x4 - core index']
  #allocation1 [shape = 'u32[144,128]{1,0:T(1,128)}', space=vmem, size = 0x12000, scoped, tag = 'internal scratch']
  %s0 = inlined_call_operand.vmem [shape: f32[392,128], index: 0, kind: input, shape index: {}]
  %s1 = inlined_call_operand.vmem [shape: f32[392,128], index: 1, kind: input, shape index: {}]
  %s2 = inlined_call_operand.vmem [shape: f32[392,128], index: 2, kind: input, shape index: {}]
  %s3 = inlined_call_operand.vmem [shape: f32[392,128], index: 3, kind: input, shape index: {}]
  %s4 = inlined_call_operand.vmem [shape: f32[128,128], index: 4, kind: input, shape index: {}]
  %s5 = inlined_call_operand.vmem [shape: f32[1,128], index: 5, kind: input, shape index: {}]
  %s6 = inlined_call_operand.vmem [shape: f32[392,128], index: 6, kind: output, shape index: {}]
  %s7 = sld [smem:[#allocation0]]
  $region34: #{net_forward.3} parent=0
    _
  %s9 = ssub.s32 1, %s7
  %s10 = scalar_select 0, %s9, %s7
  // Predicated region
  $region2: #{net_forward.3} parent=0 // pred_check
    _
  $region3: #{net_forward.3} parent=0 // pred_check_branch
    %12 = sbr.rel (0) target = $region5
  $region4: #{net_forward.3} parent=0 // pred_region
    _
  $region5: #{net_forward.3} parent=0 // pred_fallthru
    _
  // Predicated region
  $region6: #{net_forward.3} parent=0 // pred_check
    _
  $region7: #{net_forward.3} parent=0 // pred_check_branch
    %14 = sbr.rel (0) target = $region9
  $region8: #{net_forward.3} parent=0 // pred_region
    _
  $region9: #{net_forward.3} parent=0 // pred_fallthru
    _
  // Predicated region
  $region10: #{net_forward.3} parent=0 // pred_check
    _
  $region11: #{net_forward.3} parent=0 // pred_check_branch
    %16 = sbr.rel (0) target = $region13
  $region12: #{net_forward.3} parent=0 // pred_region
    _
  $region13: #{net_forward.3} parent=0 // pred_fallthru
    _
  // Predicated region
  $region14: #{net_forward.3} parent=0 // pred_check
    _
  $region15: #{net_forward.3} parent=0 // pred_check_branch
    %18 = sbr.rel (0) target = $region17
  $region16: #{net_forward.3} parent=0 // pred_region
    _
  $region17: #{net_forward.3} parent=0 // pred_fallthru
    _
  // Predicated region
  $region18: #{net_forward.3} parent=0 // pred_check
    _
  $region19: #{net_forward.3} parent=0 // pred_check_branch
    %20 = sbr.rel (0) target = $region21
  $region20: #{net_forward.3} parent=0 // pred_region
    _
  $region21: #{net_forward.3} parent=0 // pred_fallthru
    _
  // Predicated region
  $region22: #{net_forward.3} parent=0 // pred_check
    _
  $region23: #{net_forward.3} parent=0 // pred_check_branch
    %22 = sbr.rel (0) target = $region25
  $region24: #{net_forward.3} parent=0 // pred_region
    _
  $region25: #{net_forward.3} parent=0 // pred_fallthru
    _
  %v23 = vld [vmem:[%s4] sm:$0xff]
  %v24 = vld [vmem:[%s4 + $0x8] sm:$0xff]
  %v25 = vld [vmem:[%s4 + $0x10] sm:$0xff]
  %v26 = vld [vmem:[%s4 + $0x18] sm:$0xff]
  %v27 = vld [vmem:[%s4 + $0x20] sm:$0xff]
  %v28 = vld [vmem:[%s4 + $0x28] sm:$0xff]
  %v29 = vld [vmem:[%s4 + $0x30] sm:$0xff]
  %v30 = vld [vmem:[%s4 + $0x38] sm:$0xff]
  %v31 = vld [vmem:[%s4 + $0x40] sm:$0xff]
  %v32 = vld [vmem:[%s4 + $0x48] sm:$0xff]
  %v33 = vld [vmem:[%s4 + $0x50] sm:$0xff]
  %v34 = vld [vmem:[%s4 + $0x58] sm:$0xff]
  %v35 = vld [vmem:[%s4 + $0x60] sm:$0xff]
  %v36 = vld [vmem:[%s4 + $0x68] sm:$0xff]
  %v37 = vld [vmem:[%s4 + $0x70] sm:$0xff]
  %v38 = vld [vmem:[%s4 + $0x78] sm:$0xff]
  %v39 = vld [vmem:[%s0] sm:$0xff]
  %v40 = vld [vmem:[%s0 + $0x8] sm:$0xff]
  %v41 = vld [vmem:[%s0 + $0x10] sm:$0xff]
  %v42 = vld [vmem:[%s0 + $0x18] sm:$0xff]
  %v43 = vld [vmem:[%s0 + $0x20] sm:$0xff]
  %v44 = vld [vmem:[%s0 + $0x28] sm:$0xff]
  %v45 = vld [vmem:[%s0 + $0x30] sm:$0xff]
  %v46 = vld [vmem:[%s0 + $0x38] sm:$0xff]
  %v47 = vld [vmem:[%s0 + $0x40] sm:$0xff]
  %v48 = vld [vmem:[%s0 + $0x48] sm:$0xff]
  %v49 = vld [vmem:[%s0 + $0x50] sm:$0xff]
  %v50 = vld [vmem:[%s0 + $0x58] sm:$0xff]
  %v51 = vld [vmem:[%s0 + $0x60] sm:$0xff]
  %v52 = vld [vmem:[%s0 + $0x68] sm:$0xff]
  %v53 = vld [vmem:[%s0 + $0x70] sm:$0xff]
  %v54 = vld [vmem:[%s0 + $0x78] sm:$0xff]
  %v55 = vld [vmem:[%s0 + $0x80] sm:$0xff]
  %v56 = vld [vmem:[%s0 + $0x88] sm:$0xff]
  %v57 = vld [vmem:[%s0 + $0x90] sm:$0xff]
  %v58 = vld [vmem:[%s0 + $0x98] sm:$0xff]
  %v59 = vld [vmem:[%s0 + $0xa0] sm:$0xff]
  %v60 = vld [vmem:[%s0 + $0xa8] sm:$0xff]
  %v61 = vld [vmem:[%s0 + $0xb0] sm:$0xff]
  %v62 = vld [vmem:[%s0 + $0xb8] sm:$0xff]
  %v63 = vld [vmem:[%s0 + $0xc0] sm:$0xff]
  %v64 = vld [vmem:[%s0 + $0xc8] sm:$0xff]
  %v65 = vld [vmem:[%s0 + $0xd0] sm:$0xff]
  %v66 = vld [vmem:[%s0 + $0xd8] sm:$0xff]
  %v67 = vld [vmem:[%s0 + $0xe0] sm:$0xff]
  %v68 = vld [vmem:[%s0 + $0xe8] sm:$0xff]
  %v69 = vld [vmem:[%s0 + $0xf0] sm:$0xff]
  %v70 = vld [vmem:[%s0 + $0xf8] sm:$0xff]
  %v71 = vld [vmem:[%s0 + $0x100] sm:$0xff]
  %v72 = vld [vmem:[%s0 + $0x108] sm:$0xff]
  %v73 = vld [vmem:[%s0 + $0x110] sm:$0xff]
  %v74 = vld [vmem:[%s0 + $0x118] sm:$0xff]
  %v75 = vld [vmem:[%s0 + $0x120] sm:$0xff]
  %v76 = vld [vmem:[%s0 + $0x128] sm:$0xff]
  %v77 = vld [vmem:[%s0 + $0x130] sm:$0xff]
  %v78 = vld [vmem:[%s0 + $0x138] sm:$0xff]
  %v79 = vld [vmem:[%s0 + $0x140] sm:$0xff]
  %v80 = vld [vmem:[%s0 + $0x148] sm:$0xff]
  %v81 = vld [vmem:[%s0 + $0x150] sm:$0xff]
  %v82 = vld [vmem:[%s0 + $0x158] sm:$0xff]
  %v83 = vld [vmem:[%s0 + $0x160] sm:$0xff]
  %v84 = vld [vmem:[%s0 + $0x168] sm:$0xff]
  %v85 = vld [vmem:[%s0 + $0x170] sm:$0xff]
  %v86 = vld [vmem:[%s0 + $0x178] sm:$0xff]
  %v87 = vld [vmem:[%s0 + $0x180] sm:$0xff]
  %88 = vmatprep.subr.mxu0 0.0
  %89 = vmatpush1.msra.mxu0 %v38
  %90 = vmatprep.subr.mxu0 0.0
  %91 = vmatpush1.msra.mxu0 %v37
  %92 = vmatprep.subr.mxu0 0.0
  %93 = vmatpush1.msra.mxu0 %v36
  %94 = vmatprep.subr.mxu0 0.0
  %95 = vmatpush1.msra.mxu0 %v35
  %96 = vmatprep.subr.mxu0 0.0
  %97 = vmatpush1.msra.mxu0 %v34
  %98 = vmatprep.subr.mxu0 0.0
  %99 = vmatpush1.msra.mxu0 %v33
  %100 = vmatprep.subr.mxu0 0.0
  %101 = vmatpush1.msra.mxu0 %v32
  %102 = vmatprep.subr.mxu0 0.0
  %103 = vmatpush1.msra.mxu0 %v31
  %104 = vmatprep.subr.mxu0 0.0
  %105 = vmatpush1.msra.mxu0 %v30
  %106 = vmatprep.subr.mxu0 0.0
  %107 = vmatpush1.msra.mxu0 %v29
  %108 = vmatprep.subr.mxu0 0.0
  %109 = vmatpush1.msra.mxu0 %v28
  %110 = vmatprep.subr.mxu0 0.0
  %111 = vmatpush1.msra.mxu0 %v27
  %112 = vmatprep.subr.mxu0 0.0
  %113 = vmatpush1.msra.mxu0 %v26
  %114 = vmatprep.subr.mxu0 0.0
  %115 = vmatpush1.msra.mxu0 %v25
  %116 = vmatprep.subr.mxu0 0.0
  %117 = vmatpush1.msra.mxu0 %v24
  %118 = vmatprep.subr.mxu0 0.0
  %119 = vmatpush1.msra.mxu0 %v23
  %120 = vmatprep.subr.mxu0 0.0
  %121 = vmatpush2.msra.mxu0 0.0
  %122 = vmatprep.subr.mxu0 0.0
  %123 = vmatpush2.msra.mxu0 0.0
  %124 = vmatprep.subr.mxu0 0.0
  %125 = vmatpush2.msra.mxu0 0.0
  %126 = vmatprep.subr.mxu0 0.0
  %127 = vmatpush2.msra.mxu0 0.0
  %128 = vmatprep.subr.mxu0 0.0
  %129 = vmatpush2.msra.mxu0 0.0
  %130 = vmatprep.subr.mxu0 0.0
  %131 = vmatpush2.msra.mxu0 0.0
  %132 = vmatprep.subr.mxu0 0.0
  %133 = vmatpush2.msra.mxu0 0.0
  %134 = vmatprep.subr.mxu0 0.0
  %135 = vmatpush2.msra.mxu0 0.0
  %136 = vmatprep.subr.mxu0 0.0
  %137 = vmatpush2.msra.mxu0 0.0
  %138 = vmatprep.subr.mxu0 0.0
  %139 = vmatpush2.msra.mxu0 0.0
  %140 = vmatprep.subr.mxu0 0.0
  %141 = vmatpush2.msra.mxu0 0.0
  %142 = vmatprep.subr.mxu0 0.0
  %143 = vmatpush2.msra.mxu0 0.0
  %144 = vmatprep.subr.mxu0 0.0
  %145 = vmatpush2.msra.mxu0 0.0
  %146 = vmatprep.subr.mxu0 0.0
  %147 = vmatpush2.msra.mxu0 0.0
  %148 = vmatprep.subr.mxu0 0.0
  %149 = vmatpush2.msra.mxu0 0.0
  %150 = vmatprep.subr.mxu0 0.0
  %151 = vmatpush2.msra.mxu0 0.0
  %152 = vmatprep.mubr.f32.mxu0 0.0
  %153 = vmatmul.mubr.f32.gmra.mxu0 %v39
  %v154 = vpop.f32.mrf.mxu0
  %v155 = vadd.f32 0.0, %v154
  %v156 = vpop.f32.mrf.mxu0
  %157 = vmatprep.mubr.f32.mxu0 0.0
  %158 = vmatmul.mubr.f32.gmra.mxu0 %v40
  %v159 = vpop.f32.mrf.mxu0
  %v160 = vadd.f32 0.0, %v159
  %v161 = vpop.f32.mrf.mxu0
  %162 = vmatprep.mubr.f32.mxu0 0.0
  %163 = vmatmul.mubr.f32.gmra.mxu0 %v41
  %v164 = vpop.f32.mrf.mxu0
  %v165 = vadd.f32 0.0, %v164
  %v166 = vpop.f32.mrf.mxu0
  %167 = vmatprep.mubr.f32.mxu0 0.0
  %168 = vmatmul.mubr.f32.gmra.mxu0 %v42
  %v169 = vpop.f32.mrf.mxu0
  %v170 = vadd.f32 0.0, %v169
  %v171 = vpop.f32.mrf.mxu0
  %172 = vmatprep.mubr.f32.mxu0 0.0
  %173 = vmatmul.mubr.f32.gmra.mxu0 %v43
  %v174 = vpop.f32.mrf.mxu0
  %v175 = vadd.f32 0.0, %v174
  %v176 = vpop.f32.mrf.mxu0
  %177 = vmatprep.mubr.f32.mxu0 0.0
  %178 = vmatmul.mubr.f32.gmra.mxu0 %v44
  %v179 = vpop.f32.mrf.mxu0
  %v180 = vadd.f32 0.0, %v179
  %v181 = vpop.f32.mrf.mxu0
  %182 = vmatprep.mubr.f32.mxu0 0.0
  %183 = vmatmul.mubr.f32.gmra.mxu0 %v45
  %v184 = vpop.f32.mrf.mxu0
  %v185 = vadd.f32 0.0, %v184
  %v186 = vpop.f32.mrf.mxu0
  %187 = vmatprep.mubr.f32.mxu0 0.0
  %188 = vmatmul.mubr.f32.gmra.mxu0 %v46
  %v189 = vpop.f32.mrf.mxu0
  %v190 = vadd.f32 0.0, %v189
  %v191 = vpop.f32.mrf.mxu0
  %192 = vmatprep.mubr.f32.mxu0 0.0
  %193 = vmatmul.mubr.f32.gmra.mxu0 %v47
  %v194 = vpop.f32.mrf.mxu0
  %v195 = vadd.f32 0.0, %v194
  %v196 = vpop.f32.mrf.mxu0
  %197 = vmatprep.mubr.f32.mxu0 0.0
  %198 = vmatmul.mubr.f32.gmra.mxu0 %v48
  %v199 = vpop.f32.mrf.mxu0
  %v200 = vadd.f32 0.0, %v199
  %v201 = vpop.f32.mrf.mxu0
  %202 = vmatprep.mubr.f32.mxu0 0.0
  %203 = vmatmul.mubr.f32.gmra.mxu0 %v49
  %v204 = vpop.f32.mrf.mxu0
  %v205 = vadd.f32 0.0, %v204
  %v206 = vpop.f32.mrf.mxu0
  %207 = vmatprep.mubr.f32.mxu0 0.0
  %208 = vmatmul.mubr.f32.gmra.mxu0 %v50
  %v209 = vpop.f32.mrf.mxu0
  %v210 = vadd.f32 0.0, %v209
  %v211 = vpop.f32.mrf.mxu0
  %212 = vmatprep.mubr.f32.mxu0 0.0
  %213 = vmatmul.mubr.f32.gmra.mxu0 %v51
  %v214 = vpop.f32.mrf.mxu0
  %v215 = vadd.f32 0.0, %v214
  %v216 = vpop.f32.mrf.mxu0
  %217 = vmatprep.mubr.f32.mxu0 0.0
  %218 = vmatmul.mubr.f32.gmra.mxu0 %v52
  %v219 = vpop.f32.mrf.mxu0
  %v220 = vadd.f32 0.0, %v219
  %v221 = vpop.f32.mrf.mxu0
  %222 = vmatprep.mubr.f32.mxu0 0.0
  %223 = vmatmul.mubr.f32.gmra.mxu0 %v53
  %v224 = vpop.f32.mrf.mxu0
  %v225 = vadd.f32 0.0, %v224
  %v226 = vpop.f32.mrf.mxu0
  %227 = vmatprep.mubr.f32.mxu0 0.0
  %228 = vmatmul.mubr.f32.gmra.mxu0 %v54
  %v229 = vpop.f32.mrf.mxu0
  %v230 = vadd.f32 0.0, %v229
  %v231 = vpop.f32.mrf.mxu0
  %232 = vmatprep.mubr.f32.mxu0 0.0
  %233 = vmatmul.mubr.f32.gmra.mxu0 %v55
  %v234 = vpop.f32.mrf.mxu0
  %v235 = vadd.f32 0.0, %v234
  %v236 = vpop.f32.mrf.mxu0
  %237 = vmatprep.mubr.f32.mxu0 0.0
  %238 = vmatmul.mubr.f32.gmra.mxu0 %v56
  %v239 = vpop.f32.mrf.mxu0
  %v240 = vadd.f32 0.0, %v239
  %v241 = vpop.f32.mrf.mxu0
  %242 = vmatprep.mubr.f32.mxu0 0.0
  %243 = vmatmul.mubr.f32.gmra.mxu0 %v57
  %v244 = vpop.f32.mrf.mxu0
  %v245 = vadd.f32 0.0, %v244
  %v246 = vpop.f32.mrf.mxu0
  %247 = vmatprep.mubr.f32.mxu0 0.0
  %248 = vmatmul.mubr.f32.gmra.mxu0 %v58
  %v249 = vpop.f32.mrf.mxu0
  %v250 = vadd.f32 0.0, %v249
  %v251 = vpop.f32.mrf.mxu0
  %252 = vmatprep.mubr.f32.mxu0 0.0
  %253 = vmatmul.mubr.f32.gmra.mxu0 %v59
  %v254 = vpop.f32.mrf.mxu0
  %v255 = vadd.f32 0.0, %v254
  %v256 = vpop.f32.mrf.mxu0
  %257 = vmatprep.mubr.f32.mxu0 0.0
  %258 = vmatmul.mubr.f32.gmra.mxu0 %v60
  %v259 = vpop.f32.mrf.mxu0
  %v260 = vadd.f32 0.0, %v259
  %v261 = vpop.f32.mrf.mxu0
  %262 = vmatprep.mubr.f32.mxu0 0.0
  %263 = vmatmul.mubr.f32.gmra.mxu0 %v61
  %v264 = vpop.f32.mrf.mxu0
  %v265 = vadd.f32 0.0, %v264
  %v266 = vpop.f32.mrf.mxu0
  %267 = vmatprep.mubr.f32.mxu0 0.0
  %268 = vmatmul.mubr.f32.gmra.mxu0 %v62
  %v269 = vpop.f32.mrf.mxu0
  %v270 = vadd.f32 0.0, %v269
  %v271 = vpop.f32.mrf.mxu0
  %272 = vmatprep.mubr.f32.mxu0 0.0
  %273 = vmatmul.mubr.f32.gmra.mxu0 %v63
  %v274 = vpop.f32.mrf.mxu0
  %v275 = vadd.f32 0.0, %v274
  %v276 = vpop.f32.mrf.mxu0
  %277 = vmatprep.mubr.f32.mxu0 0.0
  %278 = vmatmul.mubr.f32.gmra.mxu0 %v64
  %v279 = vpop.f32.mrf.mxu0
  %v280 = vadd.f32 0.0, %v279
  %v281 = vpop.f32.mrf.mxu0
  %282 = vmatprep.mubr.f32.mxu0 0.0
  %283 = vmatmul.mubr.f32.gmra.mxu0 %v65
  %v284 = vpop.f32.mrf.mxu0
  %v285 = vadd.f32 0.0, %v284
  %v286 = vpop.f32.mrf.mxu0
  %287 = vmatprep.mubr.f32.mxu0 0.0
  %288 = vmatmul.mubr.f32.gmra.mxu0 %v66
  %v289 = vpop.f32.mrf.mxu0
  %v290 = vadd.f32 0.0, %v289
  %v291 = vpop.f32.mrf.mxu0
  %292 = vmatprep.mubr.f32.mxu0 0.0
  %293 = vmatmul.mubr.f32.gmra.mxu0 %v67
  %v294 = vpop.f32.mrf.mxu0
  %v295 = vadd.f32 0.0, %v294
  %v296 = vpop.f32.mrf.mxu0
  %297 = vmatprep.mubr.f32.mxu0 0.0
  %298 = vmatmul.mubr.f32.gmra.mxu0 %v68
  %v299 = vpop.f32.mrf.mxu0
  %v300 = vadd.f32 0.0, %v299
  %v301 = vpop.f32.mrf.mxu0
  %302 = vmatprep.mubr.f32.mxu0 0.0
  %303 = vmatmul.mubr.f32.gmra.mxu0 %v69
  %v304 = vpop.f32.mrf.mxu0
  %v305 = vadd.f32 0.0, %v304
  %v306 = vpop.f32.mrf.mxu0
  %307 = vmatprep.mubr.f32.mxu0 0.0
  %308 = vmatmul.mubr.f32.gmra.mxu0 %v70
  %v309 = vpop.f32.mrf.mxu0
  %v310 = vadd.f32 0.0, %v309
  %v311 = vpop.f32.mrf.mxu0
  %312 = vmatprep.mubr.f32.mxu0 0.0
  %313 = vmatmul.mubr.f32.gmra.mxu0 %v71
  %v314 = vpop.f32.mrf.mxu0
  %v315 = vadd.f32 0.0, %v314
  %v316 = vpop.f32.mrf.mxu0
  %317 = vmatprep.mubr.f32.mxu0 0.0
  %318 = vmatmul.mubr.f32.gmra.mxu0 %v72
  %v319 = vpop.f32.mrf.mxu0
  %v320 = vadd.f32 0.0, %v319
  %v321 = vpop.f32.mrf.mxu0
  %322 = vmatprep.mubr.f32.mxu0 0.0
  %323 = vmatmul.mubr.f32.gmra.mxu0 %v73
  %v324 = vpop.f32.mrf.mxu0
  %v325 = vadd.f32 0.0, %v324
  %v326 = vpop.f32.mrf.mxu0
  %327 = vmatprep.mubr.f32.mxu0 0.0
  %328 = vmatmul.mubr.f32.gmra.mxu0 %v74
  %v329 = vpop.f32.mrf.mxu0
  %v330 = vadd.f32 0.0, %v329
  %v331 = vpop.f32.mrf.mxu0
  %332 = vmatprep.mubr.f32.mxu0 0.0
  %333 = vmatmul.mubr.f32.gmra.mxu0 %v75
  %v334 = vpop.f32.mrf.mxu0
  %v335 = vadd.f32 0.0, %v334
  %v336 = vpop.f32.mrf.mxu0
  %337 = vmatprep.mubr.f32.mxu0 0.0
  %338 = vmatmul.mubr.f32.gmra.mxu0 %v76
  %v339 = vpop.f32.mrf.mxu0
  %v340 = vadd.f32 0.0, %v339
  %v341 = vpop.f32.mrf.mxu0
  %342 = vmatprep.mubr.f32.mxu0 0.0
  %343 = vmatmul.mubr.f32.gmra.mxu0 %v77
  %v344 = vpop.f32.mrf.mxu0
  %v345 = vadd.f32 0.0, %v344
  %v346 = vpop.f32.mrf.mxu0
  %347 = vmatprep.mubr.f32.mxu0 0.0
  %348 = vmatmul.mubr.f32.gmra.mxu0 %v78
  %v349 = vpop.f32.mrf.mxu0
  %v350 = vadd.f32 0.0, %v349
  %v351 = vpop.f32.mrf.mxu0
  %352 = vmatprep.mubr.f32.mxu0 0.0
  %353 = vmatmul.mubr.f32.gmra.mxu0 %v79
  %v354 = vpop.f32.mrf.mxu0
  %v355 = vadd.f32 0.0, %v354
  %v356 = vpop.f32.mrf.mxu0
  %357 = vmatprep.mubr.f32.mxu0 0.0
  %358 = vmatmul.mubr.f32.gmra.mxu0 %v80
  %v359 = vpop.f32.mrf.mxu0
  %v360 = vadd.f32 0.0, %v359
  %v361 = vpop.f32.mrf.mxu0
  %362 = vmatprep.mubr.f32.mxu0 0.0
  %363 = vmatmul.mubr.f32.gmra.mxu0 %v81
  %v364 = vpop.f32.mrf.mxu0
  %v365 = vadd.f32 0.0, %v364
  %v366 = vpop.f32.mrf.mxu0
  %367 = vmatprep.mubr.f32.mxu0 0.0
  %368 = vmatmul.mubr.f32.gmra.mxu0 %v82
  %v369 = vpop.f32.mrf.mxu0
  %v370 = vadd.f32 0.0, %v369
  %v371 = vpop.f32.mrf.mxu0
  %372 = vmatprep.mubr.f32.mxu0 0.0
  %373 = vmatmul.mubr.f32.gmra.mxu0 %v83
  %v374 = vpop.f32.mrf.mxu0
  %v375 = vadd.f32 0.0, %v374
  %v376 = vpop.f32.mrf.mxu0
  %377 = vmatprep.mubr.f32.mxu0 0.0
  %378 = vmatmul.mubr.f32.gmra.mxu0 %v84
  %v379 = vpop.f32.mrf.mxu0
  %v380 = vadd.f32 0.0, %v379
  %v381 = vpop.f32.mrf.mxu0
  %382 = vmatprep.mubr.f32.mxu0 0.0
  %383 = vmatmul.mubr.f32.gmra.mxu0 %v85
  %v384 = vpop.f32.mrf.mxu0
  %v385 = vadd.f32 0.0, %v384
  %v386 = vpop.f32.mrf.mxu0
  %387 = vmatprep.mubr.f32.mxu0 0.0
  %388 = vmatmul.mubr.f32.gmra.mxu0 %v86
  %v389 = vpop.f32.mrf.mxu0
  %v390 = vadd.f32 0.0, %v389
  %v391 = vpop.f32.mrf.mxu0
  %392 = vmatprep.mubr.f32.mxu0 0.0
  %393 = vmatmul.mubr.f32.gmra.mxu0 %v87
  %v394 = vpop.f32.mrf.mxu0
  %v395 = vadd.f32 0.0, %v394
  %v396 = vpop.f32.mrf.mxu0
  %397 = vdwg.mxu0
  %v398 = vld [vmem:[%s1] sm:$0xff]
  %v399 = vld [vmem:[%s1 + $0x8] sm:$0xff]
  %v400 = vld [vmem:[%s1 + $0x10] sm:$0xff]
  %v401 = vld [vmem:[%s1 + $0x18] sm:$0xff]
  %v402 = vld [vmem:[%s1 + $0x20] sm:$0xff]
  %v403 = vld [vmem:[%s1 + $0x28] sm:$0xff]
  %v404 = vld [vmem:[%s1 + $0x30] sm:$0xff]
  %v405 = vld [vmem:[%s1 + $0x38] sm:$0xff]
  %v406 = vld [vmem:[%s1 + $0x40] sm:$0xff]
  %v407 = vld [vmem:[%s1 + $0x48] sm:$0xff]
  %v408 = vld [vmem:[%s1 + $0x50] sm:$0xff]
  %v409 = vld [vmem:[%s1 + $0x58] sm:$0xff]
  %v410 = vld [vmem:[%s1 + $0x60] sm:$0xff]
  %v411 = vld [vmem:[%s1 + $0x68] sm:$0xff]
  %v412 = vld [vmem:[%s1 + $0x70] sm:$0xff]
  %v413 = vld [vmem:[%s1 + $0x78] sm:$0xff]
  %v414 = vld [vmem:[%s1 + $0x80] sm:$0xff]
  %v415 = vld [vmem:[%s1 + $0x88] sm:$0xff]
  %v416 = vld [vmem:[%s1 + $0x90] sm:$0xff]
  %v417 = vld [vmem:[%s1 + $0x98] sm:$0xff]
  %v418 = vld [vmem:[%s1 + $0xa0] sm:$0xff]
  %v419 = vld [vmem:[%s1 + $0xa8] sm:$0xff]
  %v420 = vld [vmem:[%s1 + $0xb0] sm:$0xff]
  %v421 = vld [vmem:[%s1 + $0xb8] sm:$0xff]
  %v422 = vld [vmem:[%s1 + $0xc0] sm:$0xff]
  %v423 = vld [vmem:[%s1 + $0xc8] sm:$0xff]
  %v424 = vld [vmem:[%s1 + $0xd0] sm:$0xff]
  %v425 = vld [vmem:[%s1 + $0xd8] sm:$0xff]
  %v426 = vld [vmem:[%s1 + $0xe0] sm:$0xff]
  %v427 = vld [vmem:[%s1 + $0xe8] sm:$0xff]
  %v428 = vld [vmem:[%s1 + $0xf0] sm:$0xff]
  %v429 = vld [vmem:[%s1 + $0xf8] sm:$0xff]
  %v430 = vld [vmem:[%s1 + $0x100] sm:$0xff]
  %v431 = vld [vmem:[%s1 + $0x108] sm:$0xff]
  %v432 = vld [vmem:[%s1 + $0x110] sm:$0xff]
  %v433 = vld [vmem:[%s1 + $0x118] sm:$0xff]
  %v434 = vld [vmem:[%s1 + $0x120] sm:$0xff]
  %v435 = vld [vmem:[%s1 + $0x128] sm:$0xff]
  %v436 = vld [vmem:[%s1 + $0x130] sm:$0xff]
  %v437 = vld [vmem:[%s1 + $0x138] sm:$0xff]
  %v438 = vld [vmem:[%s1 + $0x140] sm:$0xff]
  %v439 = vld [vmem:[%s1 + $0x148] sm:$0xff]
  %v440 = vld [vmem:[%s1 + $0x150] sm:$0xff]
  %v441 = vld [vmem:[%s1 + $0x158] sm:$0xff]
  %v442 = vld [vmem:[%s1 + $0x160] sm:$0xff]
  %v443 = vld [vmem:[%s1 + $0x168] sm:$0xff]
  %v444 = vld [vmem:[%s1 + $0x170] sm:$0xff]
  %v445 = vld [vmem:[%s1 + $0x178] sm:$0xff]
  %v446 = vld [vmem:[%s1 + $0x180] sm:$0xff]
  %447 = vmatprep.subr.mxu0 0.0
  %448 = vmatpush1.msra.mxu0 %v38
  %449 = vmatprep.subr.mxu0 0.0
  %450 = vmatpush1.msra.mxu0 %v37
  %451 = vmatprep.subr.mxu0 0.0
  %452 = vmatpush1.msra.mxu0 %v36
  %453 = vmatprep.subr.mxu0 0.0
  %454 = vmatpush1.msra.mxu0 %v35
  %455 = vmatprep.subr.mxu0 0.0
  %456 = vmatpush1.msra.mxu0 %v34
  %457 = vmatprep.subr.mxu0 0.0
  %458 = vmatpush1.msra.mxu0 %v33
  %459 = vmatprep.subr.mxu0 0.0
  %460 = vmatpush1.msra.mxu0 %v32
  %461 = vmatprep.subr.mxu0 0.0
  %462 = vmatpush1.msra.mxu0 %v31
  %463 = vmatprep.subr.mxu0 0.0
  %464 = vmatpush1.msra.mxu0 %v30
  %465 = vmatprep.subr.mxu0 0.0
  %466 = vmatpush1.msra.mxu0 %v29
  %467 = vmatprep.subr.mxu0 0.0
  %468 = vmatpush1.msra.mxu0 %v28
  %469 = vmatprep.subr.mxu0 0.0
  %470 = vmatpush1.msra.mxu0 %v27
  %471 = vmatprep.subr.mxu0 0.0
  %472 = vmatpush1.msra.mxu0 %v26
  %473 = vmatprep.subr.mxu0 0.0
  %474 = vmatpush1.msra.mxu0 %v25
  %475 = vmatprep.subr.mxu0 0.0
  %476 = vmatpush1.msra.mxu0 %v24
  %477 = vmatprep.subr.mxu0 0.0
  %478 = vmatpush1.msra.mxu0 %v23
  %479 = vmatprep.subr.mxu0 0.0
  %480 = vmatpush2.msra.mxu0 0.0
  %481 = vmatprep.subr.mxu0 0.0
  %482 = vmatpush2.msra.mxu0 0.0
  %483 = vmatprep.subr.mxu0 0.0
  %484 = vmatpush2.msra.mxu0 0.0
  %485 = vmatprep.subr.mxu0 0.0
  %486 = vmatpush2.msra.mxu0 0.0
  %487 = vmatprep.subr.mxu0 0.0
  %488 = vmatpush2.msra.mxu0 0.0
  %489 = vmatprep.subr.mxu0 0.0
  %490 = vmatpush2.msra.mxu0 0.0
  %491 = vmatprep.subr.mxu0 0.0
  %492 = vmatpush2.msra.mxu0 0.0
  %493 = vmatprep.subr.mxu0 0.0
  %494 = vmatpush2.msra.mxu0 0.0
  %495 = vmatprep.subr.mxu0 0.0
  %496 = vmatpush2.msra.mxu0 0.0
  %497 = vmatprep.subr.mxu0 0.0
  %498 = vmatpush2.msra.mxu0 0.0
  %499 = vmatprep.subr.mxu0 0.0
  %500 = vmatpush2.msra.mxu0 0.0
  %501 = vmatprep.subr.mxu0 0.0
  %502 = vmatpush2.msra.mxu0 0.0
  %503 = vmatprep.subr.mxu0 0.0
  %504 = vmatpush2.msra.mxu0 0.0
  %505 = vmatprep.subr.mxu0 0.0
  %506 = vmatpush2.msra.mxu0 0.0
  %507 = vmatprep.subr.mxu0 0.0
  %508 = vmatpush2.msra.mxu0 0.0
  %509 = vmatprep.subr.mxu0 0.0
  %510 = vmatpush2.msra.mxu0 0.0
  %511 = vmatprep.mubr.f32.mxu0 0.0
  %512 = vmatmul.mubr.f32.gmra.mxu0 %v398
  %v513 = vpop.f32.mrf.mxu0
  %v514 = vadd.f32 0.0, %v513
  %v515 = vpop.f32.mrf.mxu0
  %516 = vmatprep.mubr.f32.mxu0 0.0
  %517 = vmatmul.mubr.f32.gmra.mxu0 %v399
  %v518 = vpop.f32.mrf.mxu0
  %v519 = vadd.f32 0.0, %v518
  %v520 = vpop.f32.mrf.mxu0
  %521 = vmatprep.mubr.f32.mxu0 0.0
  %522 = vmatmul.mubr.f32.gmra.mxu0 %v400
  %v523 = vpop.f32.mrf.mxu0
  %v524 = vadd.f32 0.0, %v523
  %v525 = vpop.f32.mrf.mxu0
  %526 = vmatprep.mubr.f32.mxu0 0.0
  %527 = vmatmul.mubr.f32.gmra.mxu0 %v401
  %v528 = vpop.f32.mrf.mxu0
  %v529 = vadd.f32 0.0, %v528
  %v530 = vpop.f32.mrf.mxu0
  %531 = vmatprep.mubr.f32.mxu0 0.0
  %532 = vmatmul.mubr.f32.gmra.mxu0 %v402
  %v533 = vpop.f32.mrf.mxu0
  %v534 = vadd.f32 0.0, %v533
  %v535 = vpop.f32.mrf.mxu0
  %536 = vmatprep.mubr.f32.mxu0 0.0
  %537 = vmatmul.mubr.f32.gmra.mxu0 %v403
  %v538 = vpop.f32.mrf.mxu0
  %v539 = vadd.f32 0.0, %v538
  %v540 = vpop.f32.mrf.mxu0
  %541 = vmatprep.mubr.f32.mxu0 0.0
  %542 = vmatmul.mubr.f32.gmra.mxu0 %v404
  %v543 = vpop.f32.mrf.mxu0
  %v544 = vadd.f32 0.0, %v543
  %v545 = vpop.f32.mrf.mxu0
  %546 = vmatprep.mubr.f32.mxu0 0.0
  %547 = vmatmul.mubr.f32.gmra.mxu0 %v405
  %v548 = vpop.f32.mrf.mxu0
  %v549 = vadd.f32 0.0, %v548
  %v550 = vpop.f32.mrf.mxu0
  %551 = vmatprep.mubr.f32.mxu0 0.0
  %552 = vmatmul.mubr.f32.gmra.mxu0 %v406
  %v553 = vpop.f32.mrf.mxu0
  %v554 = vadd.f32 0.0, %v553
  %v555 = vpop.f32.mrf.mxu0
  %556 = vmatprep.mubr.f32.mxu0 0.0
  %557 = vmatmul.mubr.f32.gmra.mxu0 %v407
  %v558 = vpop.f32.mrf.mxu0
  %v559 = vadd.f32 0.0, %v558
  %v560 = vpop.f32.mrf.mxu0
  %561 = vmatprep.mubr.f32.mxu0 0.0
  %562 = vmatmul.mubr.f32.gmra.mxu0 %v408
  %v563 = vpop.f32.mrf.mxu0
  %v564 = vadd.f32 0.0, %v563
  %v565 = vpop.f32.mrf.mxu0
  %566 = vmatprep.mubr.f32.mxu0 0.0
  %567 = vmatmul.mubr.f32.gmra.mxu0 %v409
  %v568 = vpop.f32.mrf.mxu0
  %v569 = vadd.f32 0.0, %v568
  %v570 = vpop.f32.mrf.mxu0
  %571 = vmatprep.mubr.f32.mxu0 0.0
  %572 = vmatmul.mubr.f32.gmra.mxu0 %v410
  %v573 = vpop.f32.mrf.mxu0
  %v574 = vadd.f32 0.0, %v573
  %v575 = vpop.f32.mrf.mxu0
  %576 = vmatprep.mubr.f32.mxu0 0.0
  %577 = vmatmul.mubr.f32.gmra.mxu0 %v411
  %v578 = vpop.f32.mrf.mxu0
  %v579 = vadd.f32 0.0, %v578
  %v580 = vpop.f32.mrf.mxu0
  %581 = vmatprep.mubr.f32.mxu0 0.0
  %582 = vmatmul.mubr.f32.gmra.mxu0 %v412
  %v583 = vpop.f32.mrf.mxu0
  %v584 = vadd.f32 0.0, %v583
  %v585 = vpop.f32.mrf.mxu0
  %586 = vmatprep.mubr.f32.mxu0 0.0
  %587 = vmatmul.mubr.f32.gmra.mxu0 %v413
  %v588 = vpop.f32.mrf.mxu0
  %v589 = vadd.f32 0.0, %v588
  %v590 = vpop.f32.mrf.mxu0
  %591 = vmatprep.mubr.f32.mxu0 0.0
  %592 = vmatmul.mubr.f32.gmra.mxu0 %v414
  %v593 = vpop.f32.mrf.mxu0
  %v594 = vadd.f32 0.0, %v593
  %v595 = vpop.f32.mrf.mxu0
  %596 = vmatprep.mubr.f32.mxu0 0.0
  %597 = vmatmul.mubr.f32.gmra.mxu0 %v415
  %v598 = vpop.f32.mrf.mxu0
  %v599 = vadd.f32 0.0, %v598
  %v600 = vpop.f32.mrf.mxu0
  %601 = vmatprep.mubr.f32.mxu0 0.0
  %602 = vmatmul.mubr.f32.gmra.mxu0 %v416
  %v603 = vpop.f32.mrf.mxu0
  %v604 = vadd.f32 0.0, %v603
  %v605 = vpop.f32.mrf.mxu0
  %606 = vmatprep.mubr.f32.mxu0 0.0
  %607 = vmatmul.mubr.f32.gmra.mxu0 %v417
  %v608 = vpop.f32.mrf.mxu0
  %v609 = vadd.f32 0.0, %v608
  %v610 = vpop.f32.mrf.mxu0
  %611 = vmatprep.mubr.f32.mxu0 0.0
  %612 = vmatmul.mubr.f32.gmra.mxu0 %v418
  %v613 = vpop.f32.mrf.mxu0
  %v614 = vadd.f32 0.0, %v613
  %v615 = vpop.f32.mrf.mxu0
  %616 = vmatprep.mubr.f32.mxu0 0.0
  %617 = vmatmul.mubr.f32.gmra.mxu0 %v419
  %v618 = vpop.f32.mrf.mxu0
  %v619 = vadd.f32 0.0, %v618
  %v620 = vpop.f32.mrf.mxu0
  %621 = vmatprep.mubr.f32.mxu0 0.0
  %622 = vmatmul.mubr.f32.gmra.mxu0 %v420
  %v623 = vpop.f32.mrf.mxu0
  %v624 = vadd.f32 0.0, %v623
  %v625 = vpop.f32.mrf.mxu0
  %626 = vmatprep.mubr.f32.mxu0 0.0
  %627 = vmatmul.mubr.f32.gmra.mxu0 %v421
  %v628 = vpop.f32.mrf.mxu0
  %v629 = vadd.f32 0.0, %v628
  %v630 = vpop.f32.mrf.mxu0
  %631 = vmatprep.mubr.f32.mxu0 0.0
  %632 = vmatmul.mubr.f32.gmra.mxu0 %v422
  %v633 = vpop.f32.mrf.mxu0
  %v634 = vadd.f32 0.0, %v633
  %v635 = vpop.f32.mrf.mxu0
  %636 = vmatprep.mubr.f32.mxu0 0.0
  %637 = vmatmul.mubr.f32.gmra.mxu0 %v423
  %v638 = vpop.f32.mrf.mxu0
  %v639 = vadd.f32 0.0, %v638
  %v640 = vpop.f32.mrf.mxu0
  %641 = vmatprep.mubr.f32.mxu0 0.0
  %642 = vmatmul.mubr.f32.gmra.mxu0 %v424
  %v643 = vpop.f32.mrf.mxu0
  %v644 = vadd.f32 0.0, %v643
  %v645 = vpop.f32.mrf.mxu0
  %646 = vmatprep.mubr.f32.mxu0 0.0
  %647 = vmatmul.mubr.f32.gmra.mxu0 %v425
  %v648 = vpop.f32.mrf.mxu0
  %v649 = vadd.f32 0.0, %v648
  %v650 = vpop.f32.mrf.mxu0
  %651 = vmatprep.mubr.f32.mxu0 0.0
  %652 = vmatmul.mubr.f32.gmra.mxu0 %v426
  %v653 = vpop.f32.mrf.mxu0
  %v654 = vadd.f32 0.0, %v653
  %v655 = vpop.f32.mrf.mxu0
  %656 = vmatprep.mubr.f32.mxu0 0.0
  %657 = vmatmul.mubr.f32.gmra.mxu0 %v427
  %v658 = vpop.f32.mrf.mxu0
  %v659 = vadd.f32 0.0, %v658
  %v660 = vpop.f32.mrf.mxu0
  %661 = vmatprep.mubr.f32.mxu0 0.0
  %662 = vmatmul.mubr.f32.gmra.mxu0 %v428
  %v663 = vpop.f32.mrf.mxu0
  %v664 = vadd.f32 0.0, %v663
  %v665 = vpop.f32.mrf.mxu0
  %666 = vmatprep.mubr.f32.mxu0 0.0
  %667 = vmatmul.mubr.f32.gmra.mxu0 %v429
  %v668 = vpop.f32.mrf.mxu0
  %v669 = vadd.f32 0.0, %v668
  %v670 = vpop.f32.mrf.mxu0
  %671 = vmatprep.mubr.f32.mxu0 0.0
  %672 = vmatmul.mubr.f32.gmra.mxu0 %v430
  %v673 = vpop.f32.mrf.mxu0
  %v674 = vadd.f32 0.0, %v673
  %v675 = vpop.f32.mrf.mxu0
  %676 = vmatprep.mubr.f32.mxu0 0.0
  %677 = vmatmul.mubr.f32.gmra.mxu0 %v431
  %v678 = vpop.f32.mrf.mxu0
  %v679 = vadd.f32 0.0, %v678
  %v680 = vpop.f32.mrf.mxu0
  %681 = vmatprep.mubr.f32.mxu0 0.0
  %682 = vmatmul.mubr.f32.gmra.mxu0 %v432
  %v683 = vpop.f32.mrf.mxu0
  %v684 = vadd.f32 0.0, %v683
  %v685 = vpop.f32.mrf.mxu0
  %686 = vmatprep.mubr.f32.mxu0 0.0
  %687 = vmatmul.mubr.f32.gmra.mxu0 %v433
  %v688 = vpop.f32.mrf.mxu0
  %v689 = vadd.f32 0.0, %v688
  %v690 = vpop.f32.mrf.mxu0
  %691 = vmatprep.mubr.f32.mxu0 0.0
  %692 = vmatmul.mubr.f32.gmra.mxu0 %v434
  %v693 = vpop.f32.mrf.mxu0
  %v694 = vadd.f32 0.0, %v693
  %v695 = vpop.f32.mrf.mxu0
  %696 = vmatprep.mubr.f32.mxu0 0.0
  %697 = vmatmul.mubr.f32.gmra.mxu0 %v435
  %v698 = vpop.f32.mrf.mxu0
  %v699 = vadd.f32 0.0, %v698
  %v700 = vpop.f32.mrf.mxu0
  %701 = vmatprep.mubr.f32.mxu0 0.0
  %702 = vmatmul.mubr.f32.gmra.mxu0 %v436
  %v703 = vpop.f32.mrf.mxu0
  %v704 = vadd.f32 0.0, %v703
  %v705 = vpop.f32.mrf.mxu0
  %706 = vmatprep.mubr.f32.mxu0 0.0
  %707 = vmatmul.mubr.f32.gmra.mxu0 %v437
  %v708 = vpop.f32.mrf.mxu0
  %v709 = vadd.f32 0.0, %v708
  %v710 = vpop.f32.mrf.mxu0
  %711 = vmatprep.mubr.f32.mxu0 0.0
  %712 = vmatmul.mubr.f32.gmra.mxu0 %v438
  %v713 = vpop.f32.mrf.mxu0
  %v714 = vadd.f32 0.0, %v713
  %v715 = vpop.f32.mrf.mxu0
  %716 = vmatprep.mubr.f32.mxu0 0.0
  %717 = vmatmul.mubr.f32.gmra.mxu0 %v439
  %v718 = vpop.f32.mrf.mxu0
  %v719 = vadd.f32 0.0, %v718
  %v720 = vpop.f32.mrf.mxu0
  %721 = vmatprep.mubr.f32.mxu0 0.0
  %722 = vmatmul.mubr.f32.gmra.mxu0 %v440
  %v723 = vpop.f32.mrf.mxu0
  %v724 = vadd.f32 0.0, %v723
  %v725 = vpop.f32.mrf.mxu0
  %726 = vmatprep.mubr.f32.mxu0 0.0
  %727 = vmatmul.mubr.f32.gmra.mxu0 %v441
  %v728 = vpop.f32.mrf.mxu0
  %v729 = vadd.f32 0.0, %v728
  %v730 = vpop.f32.mrf.mxu0
  %731 = vmatprep.mubr.f32.mxu0 0.0
  %732 = vmatmul.mubr.f32.gmra.mxu0 %v442
  %v733 = vpop.f32.mrf.mxu0
  %v734 = vadd.f32 0.0, %v733
  %v735 = vpop.f32.mrf.mxu0
  %736 = vmatprep.mubr.f32.mxu0 0.0
  %737 = vmatmul.mubr.f32.gmra.mxu0 %v443
  %v738 = vpop.f32.mrf.mxu0
  %v739 = vadd.f32 0.0, %v738
  %v740 = vpop.f32.mrf.mxu0
  %741 = vmatprep.mubr.f32.mxu0 0.0
  %742 = vmatmul.mubr.f32.gmra.mxu0 %v444
  %v743 = vpop.f32.mrf.mxu0
  %v744 = vadd.f32 0.0, %v743
  %v745 = vpop.f32.mrf.mxu0
  %746 = vmatprep.mubr.f32.mxu0 0.0
  %747 = vmatmul.mubr.f32.gmra.mxu0 %v445
  %v748 = vpop.f32.mrf.mxu0
  %v749 = vadd.f32 0.0, %v748
  %v750 = vpop.f32.mrf.mxu0
  %751 = vmatprep.mubr.f32.mxu0 0.0
  %752 = vmatmul.mubr.f32.gmra.mxu0 %v446
  %v753 = vpop.f32.mrf.mxu0
  %v754 = vadd.f32 0.0, %v753
  %v755 = vpop.f32.mrf.mxu0
  %756 = vdwg.mxu0
  %v757 = vmax.f32 %v155, %v514
  %v758 = vmax.f32 %v160, %v519
  %v759 = vmax.f32 %v165, %v524
  %v760 = vmax.f32 %v170, %v529
  %v761 = vmax.f32 %v175, %v534
  %v762 = vmax.f32 %v180, %v539
  %v763 = vmax.f32 %v185, %v544
  %v764 = vmax.f32 %v190, %v549
  %v765 = vmax.f32 %v195, %v554
  %v766 = vmax.f32 %v200, %v559
  %v767 = vmax.f32 %v205, %v564
  %v768 = vmax.f32 %v210, %v569
  %v769 = vmax.f32 %v215, %v574
  %v770 = vmax.f32 %v220, %v579
  %v771 = vmax.f32 %v225, %v584
  %v772 = vmax.f32 %v230, %v589
  %v773 = vmax.f32 %v235, %v594
  %v774 = vmax.f32 %v240, %v599
  %v775 = vmax.f32 %v245, %v604
  %v776 = vmax.f32 %v250, %v609
  %v777 = vmax.f32 %v255, %v614
  %v778 = vmax.f32 %v260, %v619
  %v779 = vmax.f32 %v265, %v624
  %v780 = vmax.f32 %v270, %v629
  %v781 = vmax.f32 %v275, %v634
  %v782 = vmax.f32 %v280, %v639
  %v783 = vmax.f32 %v285, %v644
  %v784 = vmax.f32 %v290, %v649
  %v785 = vmax.f32 %v295, %v654
  %v786 = vmax.f32 %v300, %v659
  %v787 = vmax.f32 %v305, %v664
  %v788 = vmax.f32 %v310, %v669
  %v789 = vmax.f32 %v315, %v674
  %v790 = vmax.f32 %v320, %v679
  %v791 = vmax.f32 %v325, %v684
  %v792 = vmax.f32 %v330, %v689
  %v793 = vmax.f32 %v335, %v694
  %v794 = vmax.f32 %v340, %v699
  %v795 = vmax.f32 %v345, %v704
  %v796 = vmax.f32 %v350, %v709
  %v797 = vmax.f32 %v355, %v714
  %v798 = vmax.f32 %v360, %v719
  %v799 = vmax.f32 %v365, %v724
  %v800 = vmax.f32 %v370, %v729
  %v801 = vmax.f32 %v375, %v734
  %v802 = vmax.f32 %v380, %v739
  %v803 = vmax.f32 %v385, %v744
  %v804 = vmax.f32 %v390, %v749
  %v805 = vmax.f32 %v395, %v754
  %v806 = vld [vmem:[%s2] sm:$0xff]
  %v807 = vld [vmem:[%s2 + $0x8] sm:$0xff]
  %v808 = vld [vmem:[%s2 + $0x10] sm:$0xff]
  %v809 = vld [vmem:[%s2 + $0x18] sm:$0xff]
  %v810 = vld [vmem:[%s2 + $0x20] sm:$0xff]
  %v811 = vld [vmem:[%s2 + $0x28] sm:$0xff]
  %v812 = vld [vmem:[%s2 + $0x30] sm:$0xff]
  %v813 = vld [vmem:[%s2 + $0x38] sm:$0xff]
  %v814 = vld [vmem:[%s2 + $0x40] sm:$0xff]
  %v815 = vld [vmem:[%s2 + $0x48] sm:$0xff]
  %v816 = vld [vmem:[%s2 + $0x50] sm:$0xff]
  %v817 = vld [vmem:[%s2 + $0x58] sm:$0xff]
  %v818 = vld [vmem:[%s2 + $0x60] sm:$0xff]
  %v819 = vld [vmem:[%s2 + $0x68] sm:$0xff]
  %v820 = vld [vmem:[%s2 + $0x70] sm:$0xff]
  %v821 = vld [vmem:[%s2 + $0x78] sm:$0xff]
  %v822 = vld [vmem:[%s2 + $0x80] sm:$0xff]
  %v823 = vld [vmem:[%s2 + $0x88] sm:$0xff]
  %v824 = vld [vmem:[%s2 + $0x90] sm:$0xff]
  %v825 = vld [vmem:[%s2 + $0x98] sm:$0xff]
  %v826 = vld [vmem:[%s2 + $0xa0] sm:$0xff]
  %v827 = vld [vmem:[%s2 + $0xa8] sm:$0xff]
  %v828 = vld [vmem:[%s2 + $0xb0] sm:$0xff]
  %v829 = vld [vmem:[%s2 + $0xb8] sm:$0xff]
  %v830 = vld [vmem:[%s2 + $0xc0] sm:$0xff]
  %v831 = vld [vmem:[%s2 + $0xc8] sm:$0xff]
  %v832 = vld [vmem:[%s2 + $0xd0] sm:$0xff]
  %v833 = vld [vmem:[%s2 + $0xd8] sm:$0xff]
  %v834 = vld [vmem:[%s2 + $0xe0] sm:$0xff]
  %v835 = vld [vmem:[%s2 + $0xe8] sm:$0xff]
  %v836 = vld [vmem:[%s2 + $0xf0] sm:$0xff]
  %v837 = vld [vmem:[%s2 + $0xf8] sm:$0xff]
  %v838 = vld [vmem:[%s2 + $0x100] sm:$0xff]
  %v839 = vld [vmem:[%s2 + $0x108] sm:$0xff]
  %v840 = vld [vmem:[%s2 + $0x110] sm:$0xff]
  %v841 = vld [vmem:[%s2 + $0x118] sm:$0xff]
  %v842 = vld [vmem:[%s2 + $0x120] sm:$0xff]
  %v843 = vld [vmem:[%s2 + $0x128] sm:$0xff]
  %v844 = vld [vmem:[%s2 + $0x130] sm:$0xff]
  %v845 = vld [vmem:[%s2 + $0x138] sm:$0xff]
  %v846 = vld [vmem:[%s2 + $0x140] sm:$0xff]
  %v847 = vld [vmem:[%s2 + $0x148] sm:$0xff]
  %v848 = vld [vmem:[%s2 + $0x150] sm:$0xff]
  %v849 = vld [vmem:[%s2 + $0x158] sm:$0xff]
  %v850 = vld [vmem:[%s2 + $0x160] sm:$0xff]
  %v851 = vld [vmem:[%s2 + $0x168] sm:$0xff]
  %v852 = vld [vmem:[%s2 + $0x170] sm:$0xff]
  %v853 = vld [vmem:[%s2 + $0x178] sm:$0xff]
  %v854 = vld [vmem:[%s2 + $0x180] sm:$0xff]
  %855 = vmatprep.subr.mxu0 0.0
  %856 = vmatpush1.msra.mxu0 %v38
  %857 = vmatprep.subr.mxu0 0.0
  %858 = vmatpush1.msra.mxu0 %v37
  %859 = vmatprep.subr.mxu0 0.0
  %860 = vmatpush1.msra.mxu0 %v36
  %861 = vmatprep.subr.mxu0 0.0
  %862 = vmatpush1.msra.mxu0 %v35
  %863 = vmatprep.subr.mxu0 0.0
  %864 = vmatpush1.msra.mxu0 %v34
  %865 = vmatprep.subr.mxu0 0.0
  %866 = vmatpush1.msra.mxu0 %v33
  %867 = vmatprep.subr.mxu0 0.0
  %868 = vmatpush1.msra.mxu0 %v32
  %869 = vmatprep.subr.mxu0 0.0
  %870 = vmatpush1.msra.mxu0 %v31
  %871 = vmatprep.subr.mxu0 0.0
  %872 = vmatpush1.msra.mxu0 %v30
  %873 = vmatprep.subr.mxu0 0.0
  %874 = vmatpush1.msra.mxu0 %v29
  %875 = vmatprep.subr.mxu0 0.0
  %876 = vmatpush1.msra.mxu0 %v28
  %877 = vmatprep.subr.mxu0 0.0
  %878 = vmatpush1.msra.mxu0 %v27
  %879 = vmatprep.subr.mxu0 0.0
  %880 = vmatpush1.msra.mxu0 %v26
  %881 = vmatprep.subr.mxu0 0.0
  %882 = vmatpush1.msra.mxu0 %v25
  %883 = vmatprep.subr.mxu0 0.0
  %884 = vmatpush1.msra.mxu0 %v24
  %885 = vmatprep.subr.mxu0 0.0
  %886 = vmatpush1.msra.mxu0 %v23
  %887 = vmatprep.subr.mxu0 0.0
  %888 = vmatpush2.msra.mxu0 0.0
  %889 = vmatprep.subr.mxu0 0.0
  %890 = vmatpush2.msra.mxu0 0.0
  %891 = vmatprep.subr.mxu0 0.0
  %892 = vmatpush2.msra.mxu0 0.0
  %893 = vmatprep.subr.mxu0 0.0
  %894 = vmatpush2.msra.mxu0 0.0
  %895 = vmatprep.subr.mxu0 0.0
  %896 = vmatpush2.msra.mxu0 0.0
  %897 = vmatprep.subr.mxu0 0.0
  %898 = vmatpush2.msra.mxu0 0.0
  %899 = vmatprep.subr.mxu0 0.0
  %900 = vmatpush2.msra.mxu0 0.0
  %901 = vmatprep.subr.mxu0 0.0
  %902 = vmatpush2.msra.mxu0 0.0
  %903 = vmatprep.subr.mxu0 0.0
  %904 = vmatpush2.msra.mxu0 0.0
  %905 = vmatprep.subr.mxu0 0.0
  %906 = vmatpush2.msra.mxu0 0.0
  %907 = vmatprep.subr.mxu0 0.0
  %908 = vmatpush2.msra.mxu0 0.0
  %909 = vmatprep.subr.mxu0 0.0
  %910 = vmatpush2.msra.mxu0 0.0
  %911 = vmatprep.subr.mxu0 0.0
  %912 = vmatpush2.msra.mxu0 0.0
  %913 = vmatprep.subr.mxu0 0.0
  %914 = vmatpush2.msra.mxu0 0.0
  %915 = vmatprep.subr.mxu0 0.0
  %916 = vmatpush2.msra.mxu0 0.0
  %917 = vmatprep.subr.mxu0 0.0
  %918 = vmatpush2.msra.mxu0 0.0
  %919 = vmatprep.mubr.f32.mxu0 0.0
  %920 = vmatmul.mubr.f32.gmra.mxu0 %v806
  %v921 = vpop.f32.mrf.mxu0
  %v922 = vadd.f32 0.0, %v921
  %v923 = vpop.f32.mrf.mxu0
  %924 = vmatprep.mubr.f32.mxu0 0.0
  %925 = vmatmul.mubr.f32.gmra.mxu0 %v807
  %v926 = vpop.f32.mrf.mxu0
  %v927 = vadd.f32 0.0, %v926
  %v928 = vpop.f32.mrf.mxu0
  %929 = vmatprep.mubr.f32.mxu0 0.0
  %930 = vmatmul.mubr.f32.gmra.mxu0 %v808
  %v931 = vpop.f32.mrf.mxu0
  %v932 = vadd.f32 0.0, %v931
  %v933 = vpop.f32.mrf.mxu0
  %934 = vmatprep.mubr.f32.mxu0 0.0
  %935 = vmatmul.mubr.f32.gmra.mxu0 %v809
  %v936 = vpop.f32.mrf.mxu0
  %v937 = vadd.f32 0.0, %v936
  %v938 = vpop.f32.mrf.mxu0
  %939 = vmatprep.mubr.f32.mxu0 0.0
  %940 = vmatmul.mubr.f32.gmra.mxu0 %v810
  %v941 = vpop.f32.mrf.mxu0
  %v942 = vadd.f32 0.0, %v941
  %v943 = vpop.f32.mrf.mxu0
  %944 = vmatprep.mubr.f32.mxu0 0.0
  %945 = vmatmul.mubr.f32.gmra.mxu0 %v811
  %v946 = vpop.f32.mrf.mxu0
  %v947 = vadd.f32 0.0, %v946
  %v948 = vpop.f32.mrf.mxu0
  %949 = vmatprep.mubr.f32.mxu0 0.0
  %950 = vmatmul.mubr.f32.gmra.mxu0 %v812
  %v951 = vpop.f32.mrf.mxu0
  %v952 = vadd.f32 0.0, %v951
  %v953 = vpop.f32.mrf.mxu0
  %954 = vmatprep.mubr.f32.mxu0 0.0
  %955 = vmatmul.mubr.f32.gmra.mxu0 %v813
  %v956 = vpop.f32.mrf.mxu0
  %v957 = vadd.f32 0.0, %v956
  %v958 = vpop.f32.mrf.mxu0
  %959 = vmatprep.mubr.f32.mxu0 0.0
  %960 = vmatmul.mubr.f32.gmra.mxu0 %v814
  %v961 = vpop.f32.mrf.mxu0
  %v962 = vadd.f32 0.0, %v961
  %v963 = vpop.f32.mrf.mxu0
  %964 = vmatprep.mubr.f32.mxu0 0.0
  %965 = vmatmul.mubr.f32.gmra.mxu0 %v815
  %v966 = vpop.f32.mrf.mxu0
  %v967 = vadd.f32 0.0, %v966
  %v968 = vpop.f32.mrf.mxu0
  %969 = vmatprep.mubr.f32.mxu0 0.0
  %970 = vmatmul.mubr.f32.gmra.mxu0 %v816
  %v971 = vpop.f32.mrf.mxu0
  %v972 = vadd.f32 0.0, %v971
  %v973 = vpop.f32.mrf.mxu0
  %974 = vmatprep.mubr.f32.mxu0 0.0
  %975 = vmatmul.mubr.f32.gmra.mxu0 %v817
  %v976 = vpop.f32.mrf.mxu0
  %v977 = vadd.f32 0.0, %v976
  %v978 = vpop.f32.mrf.mxu0
  %979 = vmatprep.mubr.f32.mxu0 0.0
  %980 = vmatmul.mubr.f32.gmra.mxu0 %v818
  %v981 = vpop.f32.mrf.mxu0
  %v982 = vadd.f32 0.0, %v981
  %v983 = vpop.f32.mrf.mxu0
  %984 = vmatprep.mubr.f32.mxu0 0.0
  %985 = vmatmul.mubr.f32.gmra.mxu0 %v819
  %v986 = vpop.f32.mrf.mxu0
  %v987 = vadd.f32 0.0, %v986
  %v988 = vpop.f32.mrf.mxu0
  %989 = vmatprep.mubr.f32.mxu0 0.0
  %990 = vmatmul.mubr.f32.gmra.mxu0 %v820
  %v991 = vpop.f32.mrf.mxu0
  %v992 = vadd.f32 0.0, %v991
  %v993 = vpop.f32.mrf.mxu0
  %994 = vmatprep.mubr.f32.mxu0 0.0
  %995 = vmatmul.mubr.f32.gmra.mxu0 %v821
  %v996 = vpop.f32.mrf.mxu0
  %v997 = vadd.f32 0.0, %v996
  %v998 = vpop.f32.mrf.mxu0
  %999 = vmatprep.mubr.f32.mxu0 0.0
  %1000 = vmatmul.mubr.f32.gmra.mxu0 %v822
  %v1001 = vpop.f32.mrf.mxu0
  %v1002 = vadd.f32 0.0, %v1001
  %v1003 = vpop.f32.mrf.mxu0
  %1004 = vmatprep.mubr.f32.mxu0 0.0
  %1005 = vmatmul.mubr.f32.gmra.mxu0 %v823
  %v1006 = vpop.f32.mrf.mxu0
  %v1007 = vadd.f32 0.0, %v1006
  %v1008 = vpop.f32.mrf.mxu0
  %1009 = vmatprep.mubr.f32.mxu0 0.0
  %1010 = vmatmul.mubr.f32.gmra.mxu0 %v824
  %v1011 = vpop.f32.mrf.mxu0
  %v1012 = vadd.f32 0.0, %v1011
  %v1013 = vpop.f32.mrf.mxu0
  %1014 = vmatprep.mubr.f32.mxu0 0.0
  %1015 = vmatmul.mubr.f32.gmra.mxu0 %v825
  %v1016 = vpop.f32.mrf.mxu0
  %v1017 = vadd.f32 0.0, %v1016
  %v1018 = vpop.f32.mrf.mxu0
  %1019 = vmatprep.mubr.f32.mxu0 0.0
  %1020 = vmatmul.mubr.f32.gmra.mxu0 %v826
  %v1021 = vpop.f32.mrf.mxu0
  %v1022 = vadd.f32 0.0, %v1021
  %v1023 = vpop.f32.mrf.mxu0
  %1024 = vmatprep.mubr.f32.mxu0 0.0
  %1025 = vmatmul.mubr.f32.gmra.mxu0 %v827
  %v1026 = vpop.f32.mrf.mxu0
  %v1027 = vadd.f32 0.0, %v1026
  %v1028 = vpop.f32.mrf.mxu0
  %1029 = vmatprep.mubr.f32.mxu0 0.0
  %1030 = vmatmul.mubr.f32.gmra.mxu0 %v828
  %v1031 = vpop.f32.mrf.mxu0
  %v1032 = vadd.f32 0.0, %v1031
  %v1033 = vpop.f32.mrf.mxu0
  %1034 = vmatprep.mubr.f32.mxu0 0.0
  %1035 = vmatmul.mubr.f32.gmra.mxu0 %v829
  %v1036 = vpop.f32.mrf.mxu0
  %v1037 = vadd.f32 0.0, %v1036
  %v1038 = vpop.f32.mrf.mxu0
  %1039 = vmatprep.mubr.f32.mxu0 0.0
  %1040 = vmatmul.mubr.f32.gmra.mxu0 %v830
  %v1041 = vpop.f32.mrf.mxu0
  %v1042 = vadd.f32 0.0, %v1041
  %v1043 = vpop.f32.mrf.mxu0
  %1044 = vmatprep.mubr.f32.mxu0 0.0
  %1045 = vmatmul.mubr.f32.gmra.mxu0 %v831
  %v1046 = vpop.f32.mrf.mxu0
  %v1047 = vadd.f32 0.0, %v1046
  %v1048 = vpop.f32.mrf.mxu0
  %1049 = vmatprep.mubr.f32.mxu0 0.0
  %1050 = vmatmul.mubr.f32.gmra.mxu0 %v832
  %v1051 = vpop.f32.mrf.mxu0
  %v1052 = vadd.f32 0.0, %v1051
  %v1053 = vpop.f32.mrf.mxu0
  %1054 = vmatprep.mubr.f32.mxu0 0.0
  %1055 = vmatmul.mubr.f32.gmra.mxu0 %v833
  %v1056 = vpop.f32.mrf.mxu0
  %v1057 = vadd.f32 0.0, %v1056
  %v1058 = vpop.f32.mrf.mxu0
  %1059 = vmatprep.mubr.f32.mxu0 0.0
  %1060 = vmatmul.mubr.f32.gmra.mxu0 %v834
  %v1061 = vpop.f32.mrf.mxu0
  %v1062 = vadd.f32 0.0, %v1061
  %v1063 = vpop.f32.mrf.mxu0
  %1064 = vmatprep.mubr.f32.mxu0 0.0
  %1065 = vmatmul.mubr.f32.gmra.mxu0 %v835
  %v1066 = vpop.f32.mrf.mxu0
  %v1067 = vadd.f32 0.0, %v1066
  %v1068 = vpop.f32.mrf.mxu0
  %1069 = vmatprep.mubr.f32.mxu0 0.0
  %1070 = vmatmul.mubr.f32.gmra.mxu0 %v836
  %v1071 = vpop.f32.mrf.mxu0
  %v1072 = vadd.f32 0.0, %v1071
  %v1073 = vpop.f32.mrf.mxu0
  %1074 = vmatprep.mubr.f32.mxu0 0.0
  %1075 = vmatmul.mubr.f32.gmra.mxu0 %v837
  %v1076 = vpop.f32.mrf.mxu0
  %v1077 = vadd.f32 0.0, %v1076
  %v1078 = vpop.f32.mrf.mxu0
  %1079 = vmatprep.mubr.f32.mxu0 0.0
  %1080 = vmatmul.mubr.f32.gmra.mxu0 %v838
  %v1081 = vpop.f32.mrf.mxu0
  %v1082 = vadd.f32 0.0, %v1081
  %v1083 = vpop.f32.mrf.mxu0
  %1084 = vmatprep.mubr.f32.mxu0 0.0
  %1085 = vmatmul.mubr.f32.gmra.mxu0 %v839
  %v1086 = vpop.f32.mrf.mxu0
  %v1087 = vadd.f32 0.0, %v1086
  %v1088 = vpop.f32.mrf.mxu0
  %1089 = vmatprep.mubr.f32.mxu0 0.0
  %1090 = vmatmul.mubr.f32.gmra.mxu0 %v840
  %v1091 = vpop.f32.mrf.mxu0
  %v1092 = vadd.f32 0.0, %v1091
  %v1093 = vpop.f32.mrf.mxu0
  %1094 = vmatprep.mubr.f32.mxu0 0.0
  %1095 = vmatmul.mubr.f32.gmra.mxu0 %v841
  %v1096 = vpop.f32.mrf.mxu0
  %v1097 = vadd.f32 0.0, %v1096
  %v1098 = vpop.f32.mrf.mxu0
  %1099 = vmatprep.mubr.f32.mxu0 0.0
  %1100 = vmatmul.mubr.f32.gmra.mxu0 %v842
  %v1101 = vpop.f32.mrf.mxu0
  %v1102 = vadd.f32 0.0, %v1101
  %v1103 = vpop.f32.mrf.mxu0
  %1104 = vmatprep.mubr.f32.mxu0 0.0
  %1105 = vmatmul.mubr.f32.gmra.mxu0 %v843
  %v1106 = vpop.f32.mrf.mxu0
  %v1107 = vadd.f32 0.0, %v1106
  %v1108 = vpop.f32.mrf.mxu0
  %1109 = vmatprep.mubr.f32.mxu0 0.0
  %1110 = vmatmul.mubr.f32.gmra.mxu0 %v844
  %v1111 = vpop.f32.mrf.mxu0
  %v1112 = vadd.f32 0.0, %v1111
  %v1113 = vpop.f32.mrf.mxu0
  %1114 = vmatprep.mubr.f32.mxu0 0.0
  %1115 = vmatmul.mubr.f32.gmra.mxu0 %v845
  %v1116 = vpop.f32.mrf.mxu0
  %v1117 = vadd.f32 0.0, %v1116
  %v1118 = vpop.f32.mrf.mxu0
  %1119 = vmatprep.mubr.f32.mxu0 0.0
  %1120 = vmatmul.mubr.f32.gmra.mxu0 %v846
  %v1121 = vpop.f32.mrf.mxu0
  %v1122 = vadd.f32 0.0, %v1121
  %v1123 = vpop.f32.mrf.mxu0
  %1124 = vmatprep.mubr.f32.mxu0 0.0
  %1125 = vmatmul.mubr.f32.gmra.mxu0 %v847
  %v1126 = vpop.f32.mrf.mxu0
  %v1127 = vadd.f32 0.0, %v1126
  %v1128 = vpop.f32.mrf.mxu0
  %1129 = vmatprep.mubr.f32.mxu0 0.0
  %1130 = vmatmul.mubr.f32.gmra.mxu0 %v848
  %v1131 = vpop.f32.mrf.mxu0
  %v1132 = vadd.f32 0.0, %v1131
  %v1133 = vpop.f32.mrf.mxu0
  %1134 = vmatprep.mubr.f32.mxu0 0.0
  %1135 = vmatmul.mubr.f32.gmra.mxu0 %v849
  %v1136 = vpop.f32.mrf.mxu0
  %v1137 = vadd.f32 0.0, %v1136
  %v1138 = vpop.f32.mrf.mxu0
  %1139 = vmatprep.mubr.f32.mxu0 0.0
  %1140 = vmatmul.mubr.f32.gmra.mxu0 %v850
  %v1141 = vpop.f32.mrf.mxu0
  %v1142 = vadd.f32 0.0, %v1141
  %v1143 = vpop.f32.mrf.mxu0
  %1144 = vmatprep.mubr.f32.mxu0 0.0
  %1145 = vmatmul.mubr.f32.gmra.mxu0 %v851
  %v1146 = vpop.f32.mrf.mxu0
  %v1147 = vadd.f32 0.0, %v1146
  %v1148 = vpop.f32.mrf.mxu0
  %1149 = vmatprep.mubr.f32.mxu0 0.0
  %1150 = vmatmul.mubr.f32.gmra.mxu0 %v852
  %v1151 = vpop.f32.mrf.mxu0
  %v1152 = vadd.f32 0.0, %v1151
  %v1153 = vpop.f32.mrf.mxu0
  %1154 = vmatprep.mubr.f32.mxu0 0.0
  %1155 = vmatmul.mubr.f32.gmra.mxu0 %v853
  %v1156 = vpop.f32.mrf.mxu0
  %v1157 = vadd.f32 0.0, %v1156
  %v1158 = vpop.f32.mrf.mxu0
  %1159 = vmatprep.mubr.f32.mxu0 0.0
  %1160 = vmatmul.mubr.f32.gmra.mxu0 %v854
  %v1161 = vpop.f32.mrf.mxu0
  %v1162 = vadd.f32 0.0, %v1161
  %v1163 = vpop.f32.mrf.mxu0
  %1164 = vdwg.mxu0
  %v1165 = vmax.f32 %v757, %v922
  %v1166 = vmax.f32 %v758, %v927
  %v1167 = vmax.f32 %v759, %v932
  %v1168 = vmax.f32 %v760, %v937
  %v1169 = vmax.f32 %v761, %v942
  %v1170 = vmax.f32 %v762, %v947
  %v1171 = vmax.f32 %v763, %v952
  %v1172 = vmax.f32 %v764, %v957
  %v1173 = vmax.f32 %v765, %v962
  %v1174 = vmax.f32 %v766, %v967
  %v1175 = vmax.f32 %v767, %v972
  %v1176 = vmax.f32 %v768, %v977
  %v1177 = vmax.f32 %v769, %v982
  %v1178 = vmax.f32 %v770, %v987
  %v1179 = vmax.f32 %v771, %v992
  %v1180 = vmax.f32 %v772, %v997
  %v1181 = vmax.f32 %v773, %v1002
  %v1182 = vmax.f32 %v774, %v1007
  %v1183 = vmax.f32 %v775, %v1012
  %v1184 = vmax.f32 %v776, %v1017
  %v1185 = vmax.f32 %v777, %v1022
  %v1186 = vmax.f32 %v778, %v1027
  %v1187 = vmax.f32 %v779, %v1032
  %v1188 = vmax.f32 %v780, %v1037
  %v1189 = vmax.f32 %v781, %v1042
  %v1190 = vmax.f32 %v782, %v1047
  %v1191 = vmax.f32 %v783, %v1052
  %v1192 = vmax.f32 %v784, %v1057
  %v1193 = vmax.f32 %v785, %v1062
  %v1194 = vmax.f32 %v786, %v1067
  %v1195 = vmax.f32 %v787, %v1072
  %v1196 = vmax.f32 %v788, %v1077
  %v1197 = vmax.f32 %v789, %v1082
  %v1198 = vmax.f32 %v790, %v1087
  %v1199 = vmax.f32 %v791, %v1092
  %v1200 = vmax.f32 %v792, %v1097
  %v1201 = vmax.f32 %v793, %v1102
  %v1202 = vmax.f32 %v794, %v1107
  %v1203 = vmax.f32 %v795, %v1112
  %v1204 = vmax.f32 %v796, %v1117
  %v1205 = vmax.f32 %v797, %v1122
  %v1206 = vmax.f32 %v798, %v1127
  %v1207 = vmax.f32 %v799, %v1132
  %v1208 = vmax.f32 %v800, %v1137
  %v1209 = vmax.f32 %v801, %v1142
  %v1210 = vmax.f32 %v802, %v1147
  %v1211 = vmax.f32 %v803, %v1152
  %v1212 = vmax.f32 %v804, %v1157
  %v1213 = vmax.f32 %v805, %v1162
  %v1214 = vld [vmem:[%s3] sm:$0xff]
  %v1215 = vld [vmem:[%s3 + $0x8] sm:$0xff]
  %v1216 = vld [vmem:[%s3 + $0x10] sm:$0xff]
  %v1217 = vld [vmem:[%s3 + $0x18] sm:$0xff]
  %v1218 = vld [vmem:[%s3 + $0x20] sm:$0xff]
  %v1219 = vld [vmem:[%s3 + $0x28] sm:$0xff]
  %v1220 = vld [vmem:[%s3 + $0x30] sm:$0xff]
  %v1221 = vld [vmem:[%s3 + $0x38] sm:$0xff]
  %v1222 = vld [vmem:[%s3 + $0x40] sm:$0xff]
  %v1223 = vld [vmem:[%s3 + $0x48] sm:$0xff]
  %v1224 = vld [vmem:[%s3 + $0x50] sm:$0xff]
  %v1225 = vld [vmem:[%s3 + $0x58] sm:$0xff]
  %v1226 = vld [vmem:[%s3 + $0x60] sm:$0xff]
  %v1227 = vld [vmem:[%s3 + $0x68] sm:$0xff]
  %v1228 = vld [vmem:[%s3 + $0x70] sm:$0xff]
  %v1229 = vld [vmem:[%s3 + $0x78] sm:$0xff]
  %v1230 = vld [vmem:[%s3 + $0x80] sm:$0xff]
  %v1231 = vld [vmem:[%s3 + $0x88] sm:$0xff]
  %v1232 = vld [vmem:[%s3 + $0x90] sm:$0xff]
  %v1233 = vld [vmem:[%s3 + $0x98] sm:$0xff]
  %v1234 = vld [vmem:[%s3 + $0xa0] sm:$0xff]
  %v1235 = vld [vmem:[%s3 + $0xa8] sm:$0xff]
  %v1236 = vld [vmem:[%s3 + $0xb0] sm:$0xff]
  %v1237 = vld [vmem:[%s3 + $0xb8] sm:$0xff]
  %v1238 = vld [vmem:[%s3 + $0xc0] sm:$0xff]
  %v1239 = vld [vmem:[%s3 + $0xc8] sm:$0xff]
  %v1240 = vld [vmem:[%s3 + $0xd0] sm:$0xff]
  %v1241 = vld [vmem:[%s3 + $0xd8] sm:$0xff]
  %v1242 = vld [vmem:[%s3 + $0xe0] sm:$0xff]
  %v1243 = vld [vmem:[%s3 + $0xe8] sm:$0xff]
  %v1244 = vld [vmem:[%s3 + $0xf0] sm:$0xff]
  %v1245 = vld [vmem:[%s3 + $0xf8] sm:$0xff]
  %v1246 = vld [vmem:[%s3 + $0x100] sm:$0xff]
  %v1247 = vld [vmem:[%s3 + $0x108] sm:$0xff]
  %v1248 = vld [vmem:[%s3 + $0x110] sm:$0xff]
  %v1249 = vld [vmem:[%s3 + $0x118] sm:$0xff]
  %v1250 = vld [vmem:[%s3 + $0x120] sm:$0xff]
  %v1251 = vld [vmem:[%s3 + $0x128] sm:$0xff]
  %v1252 = vld [vmem:[%s3 + $0x130] sm:$0xff]
  %v1253 = vld [vmem:[%s3 + $0x138] sm:$0xff]
  %v1254 = vld [vmem:[%s3 + $0x140] sm:$0xff]
  %v1255 = vld [vmem:[%s3 + $0x148] sm:$0xff]
  %v1256 = vld [vmem:[%s3 + $0x150] sm:$0xff]
  %v1257 = vld [vmem:[%s3 + $0x158] sm:$0xff]
  %v1258 = vld [vmem:[%s3 + $0x160] sm:$0xff]
  %v1259 = vld [vmem:[%s3 + $0x168] sm:$0xff]
  %v1260 = vld [vmem:[%s3 + $0x170] sm:$0xff]
  %v1261 = vld [vmem:[%s3 + $0x178] sm:$0xff]
  %v1262 = vld [vmem:[%s3 + $0x180] sm:$0xff]
  %1263 = vmatprep.subr.mxu0 0.0
  %1264 = vmatpush1.msra.mxu0 %v38
  %1265 = vmatprep.subr.mxu0 0.0
  %1266 = vmatpush1.msra.mxu0 %v37
  %1267 = vmatprep.subr.mxu0 0.0
  %1268 = vmatpush1.msra.mxu0 %v36
  %1269 = vmatprep.subr.mxu0 0.0
  %1270 = vmatpush1.msra.mxu0 %v35
  %1271 = vmatprep.subr.mxu0 0.0
  %1272 = vmatpush1.msra.mxu0 %v34
  %1273 = vmatprep.subr.mxu0 0.0
  %1274 = vmatpush1.msra.mxu0 %v33
  %1275 = vmatprep.subr.mxu0 0.0
  %1276 = vmatpush1.msra.mxu0 %v32
  %1277 = vmatprep.subr.mxu0 0.0
  %1278 = vmatpush1.msra.mxu0 %v31
  %1279 = vmatprep.subr.mxu0 0.0
  %1280 = vmatpush1.msra.mxu0 %v30
  %1281 = vmatprep.subr.mxu0 0.0
  %1282 = vmatpush1.msra.mxu0 %v29
  %1283 = vmatprep.subr.mxu0 0.0
  %1284 = vmatpush1.msra.mxu0 %v28
  %1285 = vmatprep.subr.mxu0 0.0
  %1286 = vmatpush1.msra.mxu0 %v27
  %1287 = vmatprep.subr.mxu0 0.0
  %1288 = vmatpush1.msra.mxu0 %v26
  %1289 = vmatprep.subr.mxu0 0.0
  %1290 = vmatpush1.msra.mxu0 %v25
  %1291 = vmatprep.subr.mxu0 0.0
  %1292 = vmatpush1.msra.mxu0 %v24
  %1293 = vmatprep.subr.mxu0 0.0
  %1294 = vmatpush1.msra.mxu0 %v23
  %1295 = vmatprep.subr.mxu0 0.0
  %1296 = vmatpush2.msra.mxu0 0.0
  %1297 = vmatprep.subr.mxu0 0.0
  %1298 = vmatpush2.msra.mxu0 0.0
  %1299 = vmatprep.subr.mxu0 0.0
  %1300 = vmatpush2.msra.mxu0 0.0
  %1301 = vmatprep.subr.mxu0 0.0
  %1302 = vmatpush2.msra.mxu0 0.0
  %1303 = vmatprep.subr.mxu0 0.0
  %1304 = vmatpush2.msra.mxu0 0.0
  %1305 = vmatprep.subr.mxu0 0.0
  %1306 = vmatpush2.msra.mxu0 0.0
  %1307 = vmatprep.subr.mxu0 0.0
  %1308 = vmatpush2.msra.mxu0 0.0
  %1309 = vmatprep.subr.mxu0 0.0
  %1310 = vmatpush2.msra.mxu0 0.0
  %1311 = vmatprep.subr.mxu0 0.0
  %1312 = vmatpush2.msra.mxu0 0.0
  %1313 = vmatprep.subr.mxu0 0.0
  %1314 = vmatpush2.msra.mxu0 0.0
  %1315 = vmatprep.subr.mxu0 0.0
  %1316 = vmatpush2.msra.mxu0 0.0
  %1317 = vmatprep.subr.mxu0 0.0
  %1318 = vmatpush2.msra.mxu0 0.0
  %1319 = vmatprep.subr.mxu0 0.0
  %1320 = vmatpush2.msra.mxu0 0.0
  %1321 = vmatprep.subr.mxu0 0.0
  %1322 = vmatpush2.msra.mxu0 0.0
  %1323 = vmatprep.subr.mxu0 0.0
  %1324 = vmatpush2.msra.mxu0 0.0
  %1325 = vmatprep.subr.mxu0 0.0
  %1326 = vmatpush2.msra.mxu0 0.0
  %1327 = vmatprep.mubr.f32.mxu0 0.0
  %1328 = vmatmul.mubr.f32.gmra.mxu0 %v1214
  %v1329 = vpop.f32.mrf.mxu0
  %v1330 = vadd.f32 0.0, %v1329
  %v1331 = vpop.f32.mrf.mxu0
  %1332 = vmatprep.mubr.f32.mxu0 0.0
  %1333 = vmatmul.mubr.f32.gmra.mxu0 %v1215
  %v1334 = vpop.f32.mrf.mxu0
  %v1335 = vadd.f32 0.0, %v1334
  %v1336 = vpop.f32.mrf.mxu0
  %1337 = vmatprep.mubr.f32.mxu0 0.0
  %1338 = vmatmul.mubr.f32.gmra.mxu0 %v1216
  %v1339 = vpop.f32.mrf.mxu0
  %v1340 = vadd.f32 0.0, %v1339
  %v1341 = vpop.f32.mrf.mxu0
  %1342 = vmatprep.mubr.f32.mxu0 0.0
  %1343 = vmatmul.mubr.f32.gmra.mxu0 %v1217
  %v1344 = vpop.f32.mrf.mxu0
  %v1345 = vadd.f32 0.0, %v1344
  %v1346 = vpop.f32.mrf.mxu0
  %1347 = vmatprep.mubr.f32.mxu0 0.0
  %1348 = vmatmul.mubr.f32.gmra.mxu0 %v1218
  %v1349 = vpop.f32.mrf.mxu0
  %v1350 = vadd.f32 0.0, %v1349
  %v1351 = vpop.f32.mrf.mxu0
  %1352 = vmatprep.mubr.f32.mxu0 0.0
  %1353 = vmatmul.mubr.f32.gmra.mxu0 %v1219
  %v1354 = vpop.f32.mrf.mxu0
  %v1355 = vadd.f32 0.0, %v1354
  %v1356 = vpop.f32.mrf.mxu0
  %1357 = vmatprep.mubr.f32.mxu0 0.0
  %1358 = vmatmul.mubr.f32.gmra.mxu0 %v1220
  %v1359 = vpop.f32.mrf.mxu0
  %v1360 = vadd.f32 0.0, %v1359
  %v1361 = vpop.f32.mrf.mxu0
  %1362 = vmatprep.mubr.f32.mxu0 0.0
  %1363 = vmatmul.mubr.f32.gmra.mxu0 %v1221
  %v1364 = vpop.f32.mrf.mxu0
  %v1365 = vadd.f32 0.0, %v1364
  %v1366 = vpop.f32.mrf.mxu0
  %1367 = vmatprep.mubr.f32.mxu0 0.0
  %1368 = vmatmul.mubr.f32.gmra.mxu0 %v1222
  %v1369 = vpop.f32.mrf.mxu0
  %v1370 = vadd.f32 0.0, %v1369
  %v1371 = vpop.f32.mrf.mxu0
  %1372 = vmatprep.mubr.f32.mxu0 0.0
  %1373 = vmatmul.mubr.f32.gmra.mxu0 %v1223
  %v1374 = vpop.f32.mrf.mxu0
  %v1375 = vadd.f32 0.0, %v1374
  %v1376 = vpop.f32.mrf.mxu0
  %1377 = vmatprep.mubr.f32.mxu0 0.0
  %1378 = vmatmul.mubr.f32.gmra.mxu0 %v1224
  %v1379 = vpop.f32.mrf.mxu0
  %v1380 = vadd.f32 0.0, %v1379
  %v1381 = vpop.f32.mrf.mxu0
  %1382 = vmatprep.mubr.f32.mxu0 0.0
  %1383 = vmatmul.mubr.f32.gmra.mxu0 %v1225
  %v1384 = vpop.f32.mrf.mxu0
  %v1385 = vadd.f32 0.0, %v1384
  %v1386 = vpop.f32.mrf.mxu0
  %1387 = vmatprep.mubr.f32.mxu0 0.0
  %1388 = vmatmul.mubr.f32.gmra.mxu0 %v1226
  %v1389 = vpop.f32.mrf.mxu0
  %v1390 = vadd.f32 0.0, %v1389
  %v1391 = vpop.f32.mrf.mxu0
  %1392 = vmatprep.mubr.f32.mxu0 0.0
  %1393 = vmatmul.mubr.f32.gmra.mxu0 %v1227
  %v1394 = vpop.f32.mrf.mxu0
  %v1395 = vadd.f32 0.0, %v1394
  %v1396 = vpop.f32.mrf.mxu0
  %1397 = vmatprep.mubr.f32.mxu0 0.0
  %1398 = vmatmul.mubr.f32.gmra.mxu0 %v1228
  %v1399 = vpop.f32.mrf.mxu0
  %v1400 = vadd.f32 0.0, %v1399
  %v1401 = vpop.f32.mrf.mxu0
  %1402 = vmatprep.mubr.f32.mxu0 0.0
  %1403 = vmatmul.mubr.f32.gmra.mxu0 %v1229
  %v1404 = vpop.f32.mrf.mxu0
  %v1405 = vadd.f32 0.0, %v1404
  %v1406 = vpop.f32.mrf.mxu0
  %1407 = vmatprep.mubr.f32.mxu0 0.0
  %1408 = vmatmul.mubr.f32.gmra.mxu0 %v1230
  %v1409 = vpop.f32.mrf.mxu0
  %v1410 = vadd.f32 0.0, %v1409
  %v1411 = vpop.f32.mrf.mxu0
  %1412 = vmatprep.mubr.f32.mxu0 0.0
  %1413 = vmatmul.mubr.f32.gmra.mxu0 %v1231
  %v1414 = vpop.f32.mrf.mxu0
  %v1415 = vadd.f32 0.0, %v1414
  %v1416 = vpop.f32.mrf.mxu0
  %1417 = vmatprep.mubr.f32.mxu0 0.0
  %1418 = vmatmul.mubr.f32.gmra.mxu0 %v1232
  %v1419 = vpop.f32.mrf.mxu0
  %v1420 = vadd.f32 0.0, %v1419
  %v1421 = vpop.f32.mrf.mxu0
  %1422 = vmatprep.mubr.f32.mxu0 0.0
  %1423 = vmatmul.mubr.f32.gmra.mxu0 %v1233
  %v1424 = vpop.f32.mrf.mxu0
  %v1425 = vadd.f32 0.0, %v1424
  %v1426 = vpop.f32.mrf.mxu0
  %1427 = vmatprep.mubr.f32.mxu0 0.0
  %1428 = vmatmul.mubr.f32.gmra.mxu0 %v1234
  %v1429 = vpop.f32.mrf.mxu0
  %v1430 = vadd.f32 0.0, %v1429
  %v1431 = vpop.f32.mrf.mxu0
  %1432 = vmatprep.mubr.f32.mxu0 0.0
  %1433 = vmatmul.mubr.f32.gmra.mxu0 %v1235
  %v1434 = vpop.f32.mrf.mxu0
  %v1435 = vadd.f32 0.0, %v1434
  %v1436 = vpop.f32.mrf.mxu0
  %1437 = vmatprep.mubr.f32.mxu0 0.0
  %1438 = vmatmul.mubr.f32.gmra.mxu0 %v1236
  %v1439 = vpop.f32.mrf.mxu0
  %v1440 = vadd.f32 0.0, %v1439
  %v1441 = vpop.f32.mrf.mxu0
  %1442 = vmatprep.mubr.f32.mxu0 0.0
  %1443 = vmatmul.mubr.f32.gmra.mxu0 %v1237
  %v1444 = vpop.f32.mrf.mxu0
  %v1445 = vadd.f32 0.0, %v1444
  %v1446 = vpop.f32.mrf.mxu0
  %1447 = vmatprep.mubr.f32.mxu0 0.0
  %1448 = vmatmul.mubr.f32.gmra.mxu0 %v1238
  %v1449 = vpop.f32.mrf.mxu0
  %v1450 = vadd.f32 0.0, %v1449
  %v1451 = vpop.f32.mrf.mxu0
  %1452 = vmatprep.mubr.f32.mxu0 0.0
  %1453 = vmatmul.mubr.f32.gmra.mxu0 %v1239
  %v1454 = vpop.f32.mrf.mxu0
  %v1455 = vadd.f32 0.0, %v1454
  %v1456 = vpop.f32.mrf.mxu0
  %1457 = vmatprep.mubr.f32.mxu0 0.0
  %1458 = vmatmul.mubr.f32.gmra.mxu0 %v1240
  %v1459 = vpop.f32.mrf.mxu0
  %v1460 = vadd.f32 0.0, %v1459
  %v1461 = vpop.f32.mrf.mxu0
  %1462 = vmatprep.mubr.f32.mxu0 0.0
  %1463 = vmatmul.mubr.f32.gmra.mxu0 %v1241
  %v1464 = vpop.f32.mrf.mxu0
  %v1465 = vadd.f32 0.0, %v1464
  %v1466 = vpop.f32.mrf.mxu0
  %1467 = vmatprep.mubr.f32.mxu0 0.0
  %1468 = vmatmul.mubr.f32.gmra.mxu0 %v1242
  %v1469 = vpop.f32.mrf.mxu0
  %v1470 = vadd.f32 0.0, %v1469
  %v1471 = vpop.f32.mrf.mxu0
  %1472 = vmatprep.mubr.f32.mxu0 0.0
  %1473 = vmatmul.mubr.f32.gmra.mxu0 %v1243
  %v1474 = vpop.f32.mrf.mxu0
  %v1475 = vadd.f32 0.0, %v1474
  %v1476 = vpop.f32.mrf.mxu0
  %1477 = vmatprep.mubr.f32.mxu0 0.0
  %1478 = vmatmul.mubr.f32.gmra.mxu0 %v1244
  %v1479 = vpop.f32.mrf.mxu0
  %v1480 = vadd.f32 0.0, %v1479
  %v1481 = vpop.f32.mrf.mxu0
  %1482 = vmatprep.mubr.f32.mxu0 0.0
  %1483 = vmatmul.mubr.f32.gmra.mxu0 %v1245
  %v1484 = vpop.f32.mrf.mxu0
  %v1485 = vadd.f32 0.0, %v1484
  %v1486 = vpop.f32.mrf.mxu0
  %1487 = vmatprep.mubr.f32.mxu0 0.0
  %1488 = vmatmul.mubr.f32.gmra.mxu0 %v1246
  %v1489 = vpop.f32.mrf.mxu0
  %v1490 = vadd.f32 0.0, %v1489
  %v1491 = vpop.f32.mrf.mxu0
  %1492 = vmatprep.mubr.f32.mxu0 0.0
  %1493 = vmatmul.mubr.f32.gmra.mxu0 %v1247
  %v1494 = vpop.f32.mrf.mxu0
  %v1495 = vadd.f32 0.0, %v1494
  %v1496 = vpop.f32.mrf.mxu0
  %1497 = vmatprep.mubr.f32.mxu0 0.0
  %1498 = vmatmul.mubr.f32.gmra.mxu0 %v1248
  %v1499 = vpop.f32.mrf.mxu0
  %v1500 = vadd.f32 0.0, %v1499
  %v1501 = vpop.f32.mrf.mxu0
  %1502 = vmatprep.mubr.f32.mxu0 0.0
  %1503 = vmatmul.mubr.f32.gmra.mxu0 %v1249
  %v1504 = vpop.f32.mrf.mxu0
  %v1505 = vadd.f32 0.0, %v1504
  %v1506 = vpop.f32.mrf.mxu0
  %1507 = vmatprep.mubr.f32.mxu0 0.0
  %1508 = vmatmul.mubr.f32.gmra.mxu0 %v1250
  %v1509 = vpop.f32.mrf.mxu0
  %v1510 = vadd.f32 0.0, %v1509
  %v1511 = vpop.f32.mrf.mxu0
  %1512 = vmatprep.mubr.f32.mxu0 0.0
  %1513 = vmatmul.mubr.f32.gmra.mxu0 %v1251
  %v1514 = vpop.f32.mrf.mxu0
  %v1515 = vadd.f32 0.0, %v1514
  %v1516 = vpop.f32.mrf.mxu0
  %1517 = vmatprep.mubr.f32.mxu0 0.0
  %1518 = vmatmul.mubr.f32.gmra.mxu0 %v1252
  %v1519 = vpop.f32.mrf.mxu0
  %v1520 = vadd.f32 0.0, %v1519
  %v1521 = vpop.f32.mrf.mxu0
  %1522 = vmatprep.mubr.f32.mxu0 0.0
  %1523 = vmatmul.mubr.f32.gmra.mxu0 %v1253
  %v1524 = vpop.f32.mrf.mxu0
  %v1525 = vadd.f32 0.0, %v1524
  %v1526 = vpop.f32.mrf.mxu0
  %1527 = vmatprep.mubr.f32.mxu0 0.0
  %1528 = vmatmul.mubr.f32.gmra.mxu0 %v1254
  %v1529 = vpop.f32.mrf.mxu0
  %v1530 = vadd.f32 0.0, %v1529
  %v1531 = vpop.f32.mrf.mxu0
  %1532 = vmatprep.mubr.f32.mxu0 0.0
  %1533 = vmatmul.mubr.f32.gmra.mxu0 %v1255
  %v1534 = vpop.f32.mrf.mxu0
  %v1535 = vadd.f32 0.0, %v1534
  %v1536 = vpop.f32.mrf.mxu0
  %1537 = vmatprep.mubr.f32.mxu0 0.0
  %1538 = vmatmul.mubr.f32.gmra.mxu0 %v1256
  %v1539 = vpop.f32.mrf.mxu0
  %v1540 = vadd.f32 0.0, %v1539
  %v1541 = vpop.f32.mrf.mxu0
  %1542 = vmatprep.mubr.f32.mxu0 0.0
  %1543 = vmatmul.mubr.f32.gmra.mxu0 %v1257
  %v1544 = vpop.f32.mrf.mxu0
  %v1545 = vadd.f32 0.0, %v1544
  %v1546 = vpop.f32.mrf.mxu0
  %1547 = vmatprep.mubr.f32.mxu0 0.0
  %1548 = vmatmul.mubr.f32.gmra.mxu0 %v1258
  %v1549 = vpop.f32.mrf.mxu0
  %v1550 = vadd.f32 0.0, %v1549
  %v1551 = vpop.f32.mrf.mxu0
  %1552 = vmatprep.mubr.f32.mxu0 0.0
  %1553 = vmatmul.mubr.f32.gmra.mxu0 %v1259
  %v1554 = vpop.f32.mrf.mxu0
  %v1555 = vadd.f32 0.0, %v1554
  %v1556 = vpop.f32.mrf.mxu0
  %1557 = vmatprep.mubr.f32.mxu0 0.0
  %1558 = vmatmul.mubr.f32.gmra.mxu0 %v1260
  %v1559 = vpop.f32.mrf.mxu0
  %v1560 = vadd.f32 0.0, %v1559
  %v1561 = vpop.f32.mrf.mxu0
  %1562 = vmatprep.mubr.f32.mxu0 0.0
  %1563 = vmatmul.mubr.f32.gmra.mxu0 %v1261
  %v1564 = vpop.f32.mrf.mxu0
  %v1565 = vadd.f32 0.0, %v1564
  %v1566 = vpop.f32.mrf.mxu0
  %1567 = vmatprep.mubr.f32.mxu0 0.0
  %1568 = vmatmul.mubr.f32.gmra.mxu0 %v1262
  %v1569 = vpop.f32.mrf.mxu0
  %v1570 = vadd.f32 0.0, %v1569
  %v1571 = vpop.f32.mrf.mxu0
  %1572 = vdwg.mxu0
  %v1573 = vmax.f32 %v1165, %v1330
  %v1574 = vmax.f32 %v1166, %v1335
  %v1575 = vmax.f32 %v1167, %v1340
  %v1576 = vmax.f32 %v1168, %v1345
  %v1577 = vmax.f32 %v1169, %v1350
  %v1578 = vmax.f32 %v1170, %v1355
  %v1579 = vmax.f32 %v1171, %v1360
  %v1580 = vmax.f32 %v1172, %v1365
  %v1581 = vmax.f32 %v1173, %v1370
  %v1582 = vmax.f32 %v1174, %v1375
  %v1583 = vmax.f32 %v1175, %v1380
  %v1584 = vmax.f32 %v1176, %v1385
  %v1585 = vmax.f32 %v1177, %v1390
  %v1586 = vmax.f32 %v1178, %v1395
  %v1587 = vmax.f32 %v1179, %v1400
  %v1588 = vmax.f32 %v1180, %v1405
  %v1589 = vmax.f32 %v1181, %v1410
  %v1590 = vmax.f32 %v1182, %v1415
  %v1591 = vmax.f32 %v1183, %v1420
  %v1592 = vmax.f32 %v1184, %v1425
  %v1593 = vmax.f32 %v1185, %v1430
  %v1594 = vmax.f32 %v1186, %v1435
  %v1595 = vmax.f32 %v1187, %v1440
  %v1596 = vmax.f32 %v1188, %v1445
  %v1597 = vmax.f32 %v1189, %v1450
  %v1598 = vmax.f32 %v1190, %v1455
  %v1599 = vmax.f32 %v1191, %v1460
  %v1600 = vmax.f32 %v1192, %v1465
  %v1601 = vmax.f32 %v1193, %v1470
  %v1602 = vmax.f32 %v1194, %v1475
  %v1603 = vmax.f32 %v1195, %v1480
  %v1604 = vmax.f32 %v1196, %v1485
  %v1605 = vmax.f32 %v1197, %v1490
  %v1606 = vmax.f32 %v1198, %v1495
  %v1607 = vmax.f32 %v1199, %v1500
  %v1608 = vmax.f32 %v1200, %v1505
  %v1609 = vmax.f32 %v1201, %v1510
  %v1610 = vmax.f32 %v1202, %v1515
  %v1611 = vmax.f32 %v1203, %v1520
  %v1612 = vmax.f32 %v1204, %v1525
  %v1613 = vmax.f32 %v1205, %v1530
  %v1614 = vmax.f32 %v1206, %v1535
  %v1615 = vmax.f32 %v1207, %v1540
  %v1616 = vmax.f32 %v1208, %v1545
  %v1617 = vmax.f32 %v1209, %v1550
  %v1618 = vmax.f32 %v1210, %v1555
  %v1619 = vmax.f32 %v1211, %v1560
  %v1620 = vmax.f32 %v1212, %v1565
  %v1621 = vmax.f32 %v1213, %v1570
  %v1622 = vld [vmem:[%s5] sm:$0x1]
  %v1624 = vlaneseq
  %v1625 = vshrl.u32 %v1624, 7
  %v1626 = vsub.s32 0, %v1625
  %v1627 = vrot.slane %v1622, %v1626
  %v1629 = vadd.f32 %v1573, %v1627
  %v1630 = vadd.f32 %v1574, %v1627
  %v1631 = vadd.f32 %v1575, %v1627
  %v1632 = vadd.f32 %v1576, %v1627
  %v1633 = vadd.f32 %v1577, %v1627
  %v1634 = vadd.f32 %v1578, %v1627
  %v1635 = vadd.f32 %v1579, %v1627
  %v1636 = vadd.f32 %v1580, %v1627
  %v1637 = vadd.f32 %v1581, %v1627
  %v1638 = vadd.f32 %v1582, %v1627
  %v1639 = vadd.f32 %v1583, %v1627
  %v1640 = vadd.f32 %v1584, %v1627
  %v1641 = vadd.f32 %v1585, %v1627
  %v1642 = vadd.f32 %v1586, %v1627
  %v1643 = vadd.f32 %v1587, %v1627
  %v1644 = vadd.f32 %v1588, %v1627
  %v1645 = vadd.f32 %v1589, %v1627
  %v1646 = vadd.f32 %v1590, %v1627
  %v1647 = vadd.f32 %v1591, %v1627
  %v1648 = vadd.f32 %v1592, %v1627
  %v1649 = vadd.f32 %v1593, %v1627
  %v1650 = vadd.f32 %v1594, %v1627
  %v1651 = vadd.f32 %v1595, %v1627
  %v1652 = vadd.f32 %v1596, %v1627
  %v1653 = vadd.f32 %v1597, %v1627
  %v1654 = vadd.f32 %v1598, %v1627
  %v1655 = vadd.f32 %v1599, %v1627
  %v1656 = vadd.f32 %v1600, %v1627
  %v1657 = vadd.f32 %v1601, %v1627
  %v1658 = vadd.f32 %v1602, %v1627
  %v1659 = vadd.f32 %v1603, %v1627
  %v1660 = vadd.f32 %v1604, %v1627
  %v1661 = vadd.f32 %v1605, %v1627
  %v1662 = vadd.f32 %v1606, %v1627
  %v1663 = vadd.f32 %v1607, %v1627
  %v1664 = vadd.f32 %v1608, %v1627
  %v1665 = vadd.f32 %v1609, %v1627
  %v1666 = vadd.f32 %v1610, %v1627
  %v1667 = vadd.f32 %v1611, %v1627
  %v1668 = vadd.f32 %v1612, %v1627
  %v1669 = vadd.f32 %v1613, %v1627
  %v1670 = vadd.f32 %v1614, %v1627
  %v1671 = vadd.f32 %v1615, %v1627
  %v1672 = vadd.f32 %v1616, %v1627
  %v1673 = vadd.f32 %v1617, %v1627
  %v1674 = vadd.f32 %v1618, %v1627
  %v1675 = vadd.f32 %v1619, %v1627
  %v1676 = vadd.f32 %v1620, %v1627
  %v1677 = vadd.f32 %v1621, %v1627
  %v1678 = vmax.f32 %v1629, 0.0
  %v1679 = vmax.f32 %v1630, 0.0
  %v1680 = vmax.f32 %v1631, 0.0
  %v1681 = vmax.f32 %v1632, 0.0
  %v1682 = vmax.f32 %v1633, 0.0
  %v1683 = vmax.f32 %v1634, 0.0
  %v1684 = vmax.f32 %v1635, 0.0
  %v1685 = vmax.f32 %v1636, 0.0
  %v1686 = vmax.f32 %v1637, 0.0
  %v1687 = vmax.f32 %v1638, 0.0
  %v1688 = vmax.f32 %v1639, 0.0
  %v1689 = vmax.f32 %v1640, 0.0
  %v1690 = vmax.f32 %v1641, 0.0
  %v1691 = vmax.f32 %v1642, 0.0
  %v1692 = vmax.f32 %v1643, 0.0
  %v1693 = vmax.f32 %v1644, 0.0
  %v1694 = vmax.f32 %v1645, 0.0
  %v1695 = vmax.f32 %v1646, 0.0
  %v1696 = vmax.f32 %v1647, 0.0
  %v1697 = vmax.f32 %v1648, 0.0
  %v1698 = vmax.f32 %v1649, 0.0
  %v1699 = vmax.f32 %v1650, 0.0
  %v1700 = vmax.f32 %v1651, 0.0
  %v1701 = vmax.f32 %v1652, 0.0
  %v1702 = vmax.f32 %v1653, 0.0
  %v1703 = vmax.f32 %v1654, 0.0
  %v1704 = vmax.f32 %v1655, 0.0
  %v1705 = vmax.f32 %v1656, 0.0
  %v1706 = vmax.f32 %v1657, 0.0
  %v1707 = vmax.f32 %v1658, 0.0
  %v1708 = vmax.f32 %v1659, 0.0
  %v1709 = vmax.f32 %v1660, 0.0
  %v1710 = vmax.f32 %v1661, 0.0
  %v1711 = vmax.f32 %v1662, 0.0
  %v1712 = vmax.f32 %v1663, 0.0
  %v1713 = vmax.f32 %v1664, 0.0
  %v1714 = vmax.f32 %v1665, 0.0
  %v1715 = vmax.f32 %v1666, 0.0
  %v1716 = vmax.f32 %v1667, 0.0
  %v1717 = vmax.f32 %v1668, 0.0
  %v1718 = vmax.f32 %v1669, 0.0
  %v1719 = vmax.f32 %v1670, 0.0
  %v1720 = vmax.f32 %v1671, 0.0
  %v1721 = vmax.f32 %v1672, 0.0
  %v1722 = vmax.f32 %v1673, 0.0
  %v1723 = vmax.f32 %v1674, 0.0
  %v1724 = vmax.f32 %v1675, 0.0
  %v1725 = vmax.f32 %v1676, 0.0
  %v1726 = vmax.f32 %v1677, 0.0
  %1727 = vst [vmem:[%s6] sm:$0xff] %v1678
  %1728 = vst [vmem:[%s6 + $0x8] sm:$0xff] %v1679
  %1729 = vst [vmem:[%s6 + $0x10] sm:$0xff] %v1680
  %1730 = vst [vmem:[%s6 + $0x18] sm:$0xff] %v1681
  %1731 = vst [vmem:[%s6 + $0x20] sm:$0xff] %v1682
  %1732 = vst [vmem:[%s6 + $0x28] sm:$0xff] %v1683
  %1733 = vst [vmem:[%s6 + $0x30] sm:$0xff] %v1684
  %1734 = vst [vmem:[%s6 + $0x38] sm:$0xff] %v1685
  %1735 = vst [vmem:[%s6 + $0x40] sm:$0xff] %v1686
  %1736 = vst [vmem:[%s6 + $0x48] sm:$0xff] %v1687
  %1737 = vst [vmem:[%s6 + $0x50] sm:$0xff] %v1688
  %1738 = vst [vmem:[%s6 + $0x58] sm:$0xff] %v1689
  %1739 = vst [vmem:[%s6 + $0x60] sm:$0xff] %v1690
  %1740 = vst [vmem:[%s6 + $0x68] sm:$0xff] %v1691
  %1741 = vst [vmem:[%s6 + $0x70] sm:$0xff] %v1692
  %1742 = vst [vmem:[%s6 + $0x78] sm:$0xff] %v1693
  %1743 = vst [vmem:[%s6 + $0x80] sm:$0xff] %v1694
  %1744 = vst [vmem:[%s6 + $0x88] sm:$0xff] %v1695
  %1745 = vst [vmem:[%s6 + $0x90] sm:$0xff] %v1696
  %1746 = vst [vmem:[%s6 + $0x98] sm:$0xff] %v1697
  %1747 = vst [vmem:[%s6 + $0xa0] sm:$0xff] %v1698
  %1748 = vst [vmem:[%s6 + $0xa8] sm:$0xff] %v1699
  %1749 = vst [vmem:[%s6 + $0xb0] sm:$0xff] %v1700
  %1750 = vst [vmem:[%s6 + $0xb8] sm:$0xff] %v1701
  %1751 = vst [vmem:[%s6 + $0xc0] sm:$0xff] %v1702
  %1752 = vst [vmem:[%s6 + $0xc8] sm:$0xff] %v1703
  %1753 = vst [vmem:[%s6 + $0xd0] sm:$0xff] %v1704
  %1754 = vst [vmem:[%s6 + $0xd8] sm:$0xff] %v1705
  %1755 = vst [vmem:[%s6 + $0xe0] sm:$0xff] %v1706
  %1756 = vst [vmem:[%s6 + $0xe8] sm:$0xff] %v1707
  %1757 = vst [vmem:[%s6 + $0xf0] sm:$0xff] %v1708
  %1758 = vst [vmem:[%s6 + $0xf8] sm:$0xff] %v1709
  %1759 = vst [vmem:[%s6 + $0x100] sm:$0xff] %v1710
  %1760 = vst [vmem:[%s6 + $0x108] sm:$0xff] %v1711
  %1761 = vst [vmem:[%s6 + $0x110] sm:$0xff] %v1712
  %1762 = vst [vmem:[%s6 + $0x118] sm:$0xff] %v1713
  %1763 = vst [vmem:[%s6 + $0x120] sm:$0xff] %v1714
  %1764 = vst [vmem:[%s6 + $0x128] sm:$0xff] %v1715
  %1765 = vst [vmem:[%s6 + $0x130] sm:$0xff] %v1716
  %1766 = vst [vmem:[%s6 + $0x138] sm:$0xff] %v1717
  %1767 = vst [vmem:[%s6 + $0x140] sm:$0xff] %v1718
  %1768 = vst [vmem:[%s6 + $0x148] sm:$0xff] %v1719
  %1769 = vst [vmem:[%s6 + $0x150] sm:$0xff] %v1720
  %1770 = vst [vmem:[%s6 + $0x158] sm:$0xff] %v1721
  %1771 = vst [vmem:[%s6 + $0x160] sm:$0xff] %v1722
  %1772 = vst [vmem:[%s6 + $0x168] sm:$0xff] %v1723
  %1773 = vst [vmem:[%s6 + $0x170] sm:$0xff] %v1724
  %1774 = vst [vmem:[%s6 + $0x178] sm:$0xff] %v1725
  %1775 = vst [vmem:[%s6 + $0x180] sm:$0xff] %v1726
  // Predicated region
  $region26: #{net_forward.3} parent=0 // pred_check
    _
  $region27: #{net_forward.3} parent=0 // pred_check_branch
    %1777 = sbr.rel (0) target = $region29
  $region28: #{net_forward.3} parent=0 // pred_region
    _
  $region29: #{net_forward.3} parent=0 // pred_fallthru
    _
  // Predicated region
  $region30: #{net_forward.3} parent=0 // pred_check
    _
  $region31: #{net_forward.3} parent=0 // pred_check_branch
    %1779 = sbr.rel (0) target = $region33
  $region32: #{net_forward.3} parent=0 // pred_region
    _
  $region33: #{net_forward.3} parent=0 // pred_fallthru
    _

// kernel: net_forward.4
$region0: #{net_forward.4}
  #allocation0 [shape = 'u32[]', space=smem, size = 0x4, offset = 0x4, fixed_abs, tag = 'smem constant byte address 0x4 - core index']
  #allocation1 [shape = 'u32[144,128]{1,0:T(1,128)}', space=vmem, size = 0x12000, scoped, tag = 'internal scratch']
  %s0 = inlined_call_operand.vmem [shape: f32[56,256], index: 0, kind: input, shape index: {}]
  %s1 = inlined_call_operand.vmem [shape: f32[56,256], index: 1, kind: input, shape index: {}]
  %s2 = inlined_call_operand.vmem [shape: f32[56,256], index: 2, kind: input, shape index: {}]
  %s3 = inlined_call_operand.vmem [shape: f32[56,256], index: 3, kind: input, shape index: {}]
  %s4 = inlined_call_operand.vmem [shape: f32[256,128], index: 4, kind: input, shape index: {}]
  %s5 = inlined_call_operand.vmem [shape: f32[1,128], index: 5, kind: input, shape index: {}]
  %s6 = inlined_call_operand.vmem [shape: f32[56,128], index: 6, kind: output, shape index: {}]
  %s7 = sld [smem:[#allocation0]]
  $region34: #{net_forward.4} parent=0
    _
  %s9 = ssub.s32 1, %s7
  %s10 = scalar_select 0, %s9, %s7
  // Predicated region
  $region2: #{net_forward.4} parent=0 // pred_check
    _
  $region3: #{net_forward.4} parent=0 // pred_check_branch
    %12 = sbr.rel (0) target = $region5
  $region4: #{net_forward.4} parent=0 // pred_region
    _
  $region5: #{net_forward.4} parent=0 // pred_fallthru
    _
  // Predicated region
  $region6: #{net_forward.4} parent=0 // pred_check
    _
  $region7: #{net_forward.4} parent=0 // pred_check_branch
    %14 = sbr.rel (0) target = $region9
  $region8: #{net_forward.4} parent=0 // pred_region
    _
  $region9: #{net_forward.4} parent=0 // pred_fallthru
    _
  // Predicated region
  $region10: #{net_forward.4} parent=0 // pred_check
    _
  $region11: #{net_forward.4} parent=0 // pred_check_branch
    %16 = sbr.rel (0) target = $region13
  $region12: #{net_forward.4} parent=0 // pred_region
    _
  $region13: #{net_forward.4} parent=0 // pred_fallthru
    _
  // Predicated region
  $region14: #{net_forward.4} parent=0 // pred_check
    _
  $region15: #{net_forward.4} parent=0 // pred_check_branch
    %18 = sbr.rel (0) target = $region17
  $region16: #{net_forward.4} parent=0 // pred_region
    _
  $region17: #{net_forward.4} parent=0 // pred_fallthru
    _
  // Predicated region
  $region18: #{net_forward.4} parent=0 // pred_check
    _
  $region19: #{net_forward.4} parent=0 // pred_check_branch
    %20 = sbr.rel (0) target = $region21
  $region20: #{net_forward.4} parent=0 // pred_region
    _
  $region21: #{net_forward.4} parent=0 // pred_fallthru
    _
  // Predicated region
  $region22: #{net_forward.4} parent=0 // pred_check
    _
  $region23: #{net_forward.4} parent=0 // pred_check_branch
    %22 = sbr.rel (0) target = $region25
  $region24: #{net_forward.4} parent=0 // pred_region
    _
  $region25: #{net_forward.4} parent=0 // pred_fallthru
    _
  %v23 = vld [vmem:[%s4] sm:$0xff]
  %v24 = vld [vmem:[%s4 + $0x8] sm:$0xff]
  %v25 = vld [vmem:[%s4 + $0x10] sm:$0xff]
  %v26 = vld [vmem:[%s4 + $0x18] sm:$0xff]
  %v27 = vld [vmem:[%s4 + $0x20] sm:$0xff]
  %v28 = vld [vmem:[%s4 + $0x28] sm:$0xff]
  %v29 = vld [vmem:[%s4 + $0x30] sm:$0xff]
  %v30 = vld [vmem:[%s4 + $0x38] sm:$0xff]
  %v31 = vld [vmem:[%s4 + $0x40] sm:$0xff]
  %v32 = vld [vmem:[%s4 + $0x48] sm:$0xff]
  %v33 = vld [vmem:[%s4 + $0x50] sm:$0xff]
  %v34 = vld [vmem:[%s4 + $0x58] sm:$0xff]
  %v35 = vld [vmem:[%s4 + $0x60] sm:$0xff]
  %v36 = vld [vmem:[%s4 + $0x68] sm:$0xff]
  %v37 = vld [vmem:[%s4 + $0x70] sm:$0xff]
  %v38 = vld [vmem:[%s4 + $0x78] sm:$0xff]
  %v39 = vld [vmem:[%s4 + $0x80] sm:$0xff]
  %v40 = vld [vmem:[%s4 + $0x88] sm:$0xff]
  %v41 = vld [vmem:[%s4 + $0x90] sm:$0xff]
  %v42 = vld [vmem:[%s4 + $0x98] sm:$0xff]
  %v43 = vld [vmem:[%s4 + $0xa0] sm:$0xff]
  %v44 = vld [vmem:[%s4 + $0xa8] sm:$0xff]
  %v45 = vld [vmem:[%s4 + $0xb0] sm:$0xff]
  %v46 = vld [vmem:[%s4 + $0xb8] sm:$0xff]
  %v47 = vld [vmem:[%s4 + $0xc0] sm:$0xff]
  %v48 = vld [vmem:[%s4 + $0xc8] sm:$0xff]
  %v49 = vld [vmem:[%s4 + $0xd0] sm:$0xff]
  %v50 = vld [vmem:[%s4 + $0xd8] sm:$0xff]
  %v51 = vld [vmem:[%s4 + $0xe0] sm:$0xff]
  %v52 = vld [vmem:[%s4 + $0xe8] sm:$0xff]
  %v53 = vld [vmem:[%s4 + $0xf0] sm:$0xff]
  %v54 = vld [vmem:[%s4 + $0xf8] sm:$0xff]
  %v55 = vld [vmem:[%s0] sm:$0xff]
  %v56 = vld [vmem:[%s0 + $0x8] sm:$0xff]
  %v57 = vld [vmem:[%s0 + $0x10] sm:$0xff]
  %v58 = vld [vmem:[%s0 + $0x18] sm:$0xff]
  %v59 = vld [vmem:[%s0 + $0x20] sm:$0xff]
  %v60 = vld [vmem:[%s0 + $0x28] sm:$0xff]
  %v61 = vld [vmem:[%s0 + $0x30] sm:$0xff]
  %v62 = vld [vmem:[%s0 + $0x38] sm:$0xff]
  %v63 = vld [vmem:[%s0 + $0x40] sm:$0xff]
  %v64 = vld [vmem:[%s0 + $0x48] sm:$0xff]
  %v65 = vld [vmem:[%s0 + $0x50] sm:$0xff]
  %v66 = vld [vmem:[%s0 + $0x58] sm:$0xff]
  %v67 = vld [vmem:[%s0 + $0x60] sm:$0xff]
  %v68 = vld [vmem:[%s0 + $0x68] sm:$0xff]
  %69 = vmatprep.subr.mxu0 0.0
  %70 = vmatpush1.msra.mxu0 %v38
  %71 = vmatprep.subr.mxu0 0.0
  %72 = vmatpush1.msra.mxu0 %v37
  %73 = vmatprep.subr.mxu0 0.0
  %74 = vmatpush1.msra.mxu0 %v36
  %75 = vmatprep.subr.mxu0 0.0
  %76 = vmatpush1.msra.mxu0 %v35
  %77 = vmatprep.subr.mxu0 0.0
  %78 = vmatpush1.msra.mxu0 %v34
  %79 = vmatprep.subr.mxu0 0.0
  %80 = vmatpush1.msra.mxu0 %v33
  %81 = vmatprep.subr.mxu0 0.0
  %82 = vmatpush1.msra.mxu0 %v32
  %83 = vmatprep.subr.mxu0 0.0
  %84 = vmatpush1.msra.mxu0 %v31
  %85 = vmatprep.subr.mxu0 0.0
  %86 = vmatpush1.msra.mxu0 %v30
  %87 = vmatprep.subr.mxu0 0.0
  %88 = vmatpush1.msra.mxu0 %v29
  %89 = vmatprep.subr.mxu0 0.0
  %90 = vmatpush1.msra.mxu0 %v28
  %91 = vmatprep.subr.mxu0 0.0
  %92 = vmatpush1.msra.mxu0 %v27
  %93 = vmatprep.subr.mxu0 0.0
  %94 = vmatpush1.msra.mxu0 %v26
  %95 = vmatprep.subr.mxu0 0.0
  %96 = vmatpush1.msra.mxu0 %v25
  %97 = vmatprep.subr.mxu0 0.0
  %98 = vmatpush1.msra.mxu0 %v24
  %99 = vmatprep.subr.mxu0 0.0
  %100 = vmatpush1.msra.mxu0 %v23
  %101 = vmatprep.subr.mxu0 0.0
  %102 = vmatpush2.msra.mxu0 %v54
  %103 = vmatprep.subr.mxu0 0.0
  %104 = vmatpush2.msra.mxu0 %v53
  %105 = vmatprep.subr.mxu0 0.0
  %106 = vmatpush2.msra.mxu0 %v52
  %107 = vmatprep.subr.mxu0 0.0
  %108 = vmatpush2.msra.mxu0 %v51
  %109 = vmatprep.subr.mxu0 0.0
  %110 = vmatpush2.msra.mxu0 %v50
  %111 = vmatprep.subr.mxu0 0.0
  %112 = vmatpush2.msra.mxu0 %v49
  %113 = vmatprep.subr.mxu0 0.0
  %114 = vmatpush2.msra.mxu0 %v48
  %115 = vmatprep.subr.mxu0 0.0
  %116 = vmatpush2.msra.mxu0 %v47
  %117 = vmatprep.subr.mxu0 0.0
  %118 = vmatpush2.msra.mxu0 %v46
  %119 = vmatprep.subr.mxu0 0.0
  %120 = vmatpush2.msra.mxu0 %v45
  %121 = vmatprep.subr.mxu0 0.0
  %122 = vmatpush2.msra.mxu0 %v44
  %123 = vmatprep.subr.mxu0 0.0
  %124 = vmatpush2.msra.mxu0 %v43
  %125 = vmatprep.subr.mxu0 0.0
  %126 = vmatpush2.msra.mxu0 %v42
  %127 = vmatprep.subr.mxu0 0.0
  %128 = vmatpush2.msra.mxu0 %v41
  %129 = vmatprep.subr.mxu0 0.0
  %130 = vmatpush2.msra.mxu0 %v40
  %131 = vmatprep.subr.mxu0 0.0
  %132 = vmatpush2.msra.mxu0 %v39
  %133 = vmatprep.mubr.f32.mxu0 %v56
  %134 = vmatmul.mubr.f32.gmra.mxu0 %v55
  %v135 = vpop.f32.mrf.mxu0
  %v136 = vadd.f32 0.0, %v135
  %v137 = vpop.f32.mrf.mxu0
  %138 = vmatprep.mubr.f32.mxu0 %v58
  %139 = vmatmul.mubr.f32.gmra.mxu0 %v57
  %v140 = vpop.f32.mrf.mxu0
  %v141 = vadd.f32 0.0, %v140
  %v142 = vpop.f32.mrf.mxu0
  %143 = vmatprep.mubr.f32.mxu0 %v60
  %144 = vmatmul.mubr.f32.gmra.mxu0 %v59
  %v145 = vpop.f32.mrf.mxu0
  %v146 = vadd.f32 0.0, %v145
  %v147 = vpop.f32.mrf.mxu0
  %148 = vmatprep.mubr.f32.mxu0 %v62
  %149 = vmatmul.mubr.f32.gmra.mxu0 %v61
  %v150 = vpop.f32.mrf.mxu0
  %v151 = vadd.f32 0.0, %v150
  %v152 = vpop.f32.mrf.mxu0
  %153 = vmatprep.mubr.f32.mxu0 %v64
  %154 = vmatmul.mubr.f32.gmra.mxu0 %v63
  %v155 = vpop.f32.mrf.mxu0
  %v156 = vadd.f32 0.0, %v155
  %v157 = vpop.f32.mrf.mxu0
  %158 = vmatprep.mubr.f32.mxu0 %v66
  %159 = vmatmul.mubr.f32.gmra.mxu0 %v65
  %v160 = vpop.f32.mrf.mxu0
  %v161 = vadd.f32 0.0, %v160
  %v162 = vpop.f32.mrf.mxu0
  %163 = vmatprep.mubr.f32.mxu0 %v68
  %164 = vmatmul.mubr.f32.gmra.mxu0 %v67
  %v165 = vpop.f32.mrf.mxu0
  %v166 = vadd.f32 0.0, %v165
  %v167 = vpop.f32.mrf.mxu0
  %168 = vdwg.mxu0
  %v169 = vld [vmem:[%s1] sm:$0xff]
  %v170 = vld [vmem:[%s1 + $0x8] sm:$0xff]
  %v171 = vld [vmem:[%s1 + $0x10] sm:$0xff]
  %v172 = vld [vmem:[%s1 + $0x18] sm:$0xff]
  %v173 = vld [vmem:[%s1 + $0x20] sm:$0xff]
  %v174 = vld [vmem:[%s1 + $0x28] sm:$0xff]
  %v175 = vld [vmem:[%s1 + $0x30] sm:$0xff]
  %v176 = vld [vmem:[%s1 + $0x38] sm:$0xff]
  %v177 = vld [vmem:[%s1 + $0x40] sm:$0xff]
  %v178 = vld [vmem:[%s1 + $0x48] sm:$0xff]
  %v179 = vld [vmem:[%s1 + $0x50] sm:$0xff]
  %v180 = vld [vmem:[%s1 + $0x58] sm:$0xff]
  %v181 = vld [vmem:[%s1 + $0x60] sm:$0xff]
  %v182 = vld [vmem:[%s1 + $0x68] sm:$0xff]
  %183 = vmatprep.subr.mxu0 0.0
  %184 = vmatpush1.msra.mxu0 %v38
  %185 = vmatprep.subr.mxu0 0.0
  %186 = vmatpush1.msra.mxu0 %v37
  %187 = vmatprep.subr.mxu0 0.0
  %188 = vmatpush1.msra.mxu0 %v36
  %189 = vmatprep.subr.mxu0 0.0
  %190 = vmatpush1.msra.mxu0 %v35
  %191 = vmatprep.subr.mxu0 0.0
  %192 = vmatpush1.msra.mxu0 %v34
  %193 = vmatprep.subr.mxu0 0.0
  %194 = vmatpush1.msra.mxu0 %v33
  %195 = vmatprep.subr.mxu0 0.0
  %196 = vmatpush1.msra.mxu0 %v32
  %197 = vmatprep.subr.mxu0 0.0
  %198 = vmatpush1.msra.mxu0 %v31
  %199 = vmatprep.subr.mxu0 0.0
  %200 = vmatpush1.msra.mxu0 %v30
  %201 = vmatprep.subr.mxu0 0.0
  %202 = vmatpush1.msra.mxu0 %v29
  %203 = vmatprep.subr.mxu0 0.0
  %204 = vmatpush1.msra.mxu0 %v28
  %205 = vmatprep.subr.mxu0 0.0
  %206 = vmatpush1.msra.mxu0 %v27
  %207 = vmatprep.subr.mxu0 0.0
  %208 = vmatpush1.msra.mxu0 %v26
  %209 = vmatprep.subr.mxu0 0.0
  %210 = vmatpush1.msra.mxu0 %v25
  %211 = vmatprep.subr.mxu0 0.0
  %212 = vmatpush1.msra.mxu0 %v24
  %213 = vmatprep.subr.mxu0 0.0
  %214 = vmatpush1.msra.mxu0 %v23
  %215 = vmatprep.subr.mxu0 0.0
  %216 = vmatpush2.msra.mxu0 %v54
  %217 = vmatprep.subr.mxu0 0.0
  %218 = vmatpush2.msra.mxu0 %v53
  %219 = vmatprep.subr.mxu0 0.0
  %220 = vmatpush2.msra.mxu0 %v52
  %221 = vmatprep.subr.mxu0 0.0
  %222 = vmatpush2.msra.mxu0 %v51
  %223 = vmatprep.subr.mxu0 0.0
  %224 = vmatpush2.msra.mxu0 %v50
  %225 = vmatprep.subr.mxu0 0.0
  %226 = vmatpush2.msra.mxu0 %v49
  %227 = vmatprep.subr.mxu0 0.0
  %228 = vmatpush2.msra.mxu0 %v48
  %229 = vmatprep.subr.mxu0 0.0
  %230 = vmatpush2.msra.mxu0 %v47
  %231 = vmatprep.subr.mxu0 0.0
  %232 = vmatpush2.msra.mxu0 %v46
  %233 = vmatprep.subr.mxu0 0.0
  %234 = vmatpush2.msra.mxu0 %v45
  %235 = vmatprep.subr.mxu0 0.0
  %236 = vmatpush2.msra.mxu0 %v44
  %237 = vmatprep.subr.mxu0 0.0
  %238 = vmatpush2.msra.mxu0 %v43
  %239 = vmatprep.subr.mxu0 0.0
  %240 = vmatpush2.msra.mxu0 %v42
  %241 = vmatprep.subr.mxu0 0.0
  %242 = vmatpush2.msra.mxu0 %v41
  %243 = vmatprep.subr.mxu0 0.0
  %244 = vmatpush2.msra.mxu0 %v40
  %245 = vmatprep.subr.mxu0 0.0
  %246 = vmatpush2.msra.mxu0 %v39
  %247 = vmatprep.mubr.f32.mxu0 %v170
  %248 = vmatmul.mubr.f32.gmra.mxu0 %v169
  %v249 = vpop.f32.mrf.mxu0
  %v250 = vadd.f32 0.0, %v249
  %v251 = vpop.f32.mrf.mxu0
  %252 = vmatprep.mubr.f32.mxu0 %v172
  %253 = vmatmul.mubr.f32.gmra.mxu0 %v171
  %v254 = vpop.f32.mrf.mxu0
  %v255 = vadd.f32 0.0, %v254
  %v256 = vpop.f32.mrf.mxu0
  %257 = vmatprep.mubr.f32.mxu0 %v174
  %258 = vmatmul.mubr.f32.gmra.mxu0 %v173
  %v259 = vpop.f32.mrf.mxu0
  %v260 = vadd.f32 0.0, %v259
  %v261 = vpop.f32.mrf.mxu0
  %262 = vmatprep.mubr.f32.mxu0 %v176
  %263 = vmatmul.mubr.f32.gmra.mxu0 %v175
  %v264 = vpop.f32.mrf.mxu0
  %v265 = vadd.f32 0.0, %v264
  %v266 = vpop.f32.mrf.mxu0
  %267 = vmatprep.mubr.f32.mxu0 %v178
  %268 = vmatmul.mubr.f32.gmra.mxu0 %v177
  %v269 = vpop.f32.mrf.mxu0
  %v270 = vadd.f32 0.0, %v269
  %v271 = vpop.f32.mrf.mxu0
  %272 = vmatprep.mubr.f32.mxu0 %v180
  %273 = vmatmul.mubr.f32.gmra.mxu0 %v179
  %v274 = vpop.f32.mrf.mxu0
  %v275 = vadd.f32 0.0, %v274
  %v276 = vpop.f32.mrf.mxu0
  %277 = vmatprep.mubr.f32.mxu0 %v182
  %278 = vmatmul.mubr.f32.gmra.mxu0 %v181
  %v279 = vpop.f32.mrf.mxu0
  %v280 = vadd.f32 0.0, %v279
  %v281 = vpop.f32.mrf.mxu0
  %282 = vdwg.mxu0
  %v283 = vmax.f32 %v136, %v250
  %v284 = vmax.f32 %v141, %v255
  %v285 = vmax.f32 %v146, %v260
  %v286 = vmax.f32 %v151, %v265
  %v287 = vmax.f32 %v156, %v270
  %v288 = vmax.f32 %v161, %v275
  %v289 = vmax.f32 %v166, %v280
  %v290 = vld [vmem:[%s2] sm:$0xff]
  %v291 = vld [vmem:[%s2 + $0x8] sm:$0xff]
  %v292 = vld [vmem:[%s2 + $0x10] sm:$0xff]
  %v293 = vld [vmem:[%s2 + $0x18] sm:$0xff]
  %v294 = vld [vmem:[%s2 + $0x20] sm:$0xff]
  %v295 = vld [vmem:[%s2 + $0x28] sm:$0xff]
  %v296 = vld [vmem:[%s2 + $0x30] sm:$0xff]
  %v297 = vld [vmem:[%s2 + $0x38] sm:$0xff]
  %v298 = vld [vmem:[%s2 + $0x40] sm:$0xff]
  %v299 = vld [vmem:[%s2 + $0x48] sm:$0xff]
  %v300 = vld [vmem:[%s2 + $0x50] sm:$0xff]
  %v301 = vld [vmem:[%s2 + $0x58] sm:$0xff]
  %v302 = vld [vmem:[%s2 + $0x60] sm:$0xff]
  %v303 = vld [vmem:[%s2 + $0x68] sm:$0xff]
  %304 = vmatprep.subr.mxu0 0.0
  %305 = vmatpush1.msra.mxu0 %v38
  %306 = vmatprep.subr.mxu0 0.0
  %307 = vmatpush1.msra.mxu0 %v37
  %308 = vmatprep.subr.mxu0 0.0
  %309 = vmatpush1.msra.mxu0 %v36
  %310 = vmatprep.subr.mxu0 0.0
  %311 = vmatpush1.msra.mxu0 %v35
  %312 = vmatprep.subr.mxu0 0.0
  %313 = vmatpush1.msra.mxu0 %v34
  %314 = vmatprep.subr.mxu0 0.0
  %315 = vmatpush1.msra.mxu0 %v33
  %316 = vmatprep.subr.mxu0 0.0
  %317 = vmatpush1.msra.mxu0 %v32
  %318 = vmatprep.subr.mxu0 0.0
  %319 = vmatpush1.msra.mxu0 %v31
  %320 = vmatprep.subr.mxu0 0.0
  %321 = vmatpush1.msra.mxu0 %v30
  %322 = vmatprep.subr.mxu0 0.0
  %323 = vmatpush1.msra.mxu0 %v29
  %324 = vmatprep.subr.mxu0 0.0
  %325 = vmatpush1.msra.mxu0 %v28
  %326 = vmatprep.subr.mxu0 0.0
  %327 = vmatpush1.msra.mxu0 %v27
  %328 = vmatprep.subr.mxu0 0.0
  %329 = vmatpush1.msra.mxu0 %v26
  %330 = vmatprep.subr.mxu0 0.0
  %331 = vmatpush1.msra.mxu0 %v25
  %332 = vmatprep.subr.mxu0 0.0
  %333 = vmatpush1.msra.mxu0 %v24
  %334 = vmatprep.subr.mxu0 0.0
  %335 = vmatpush1.msra.mxu0 %v23
  %336 = vmatprep.subr.mxu0 0.0
  %337 = vmatpush2.msra.mxu0 %v54
  %338 = vmatprep.subr.mxu0 0.0
  %339 = vmatpush2.msra.mxu0 %v53
  %340 = vmatprep.subr.mxu0 0.0
  %341 = vmatpush2.msra.mxu0 %v52
  %342 = vmatprep.subr.mxu0 0.0
  %343 = vmatpush2.msra.mxu0 %v51
  %344 = vmatprep.subr.mxu0 0.0
  %345 = vmatpush2.msra.mxu0 %v50
  %346 = vmatprep.subr.mxu0 0.0
  %347 = vmatpush2.msra.mxu0 %v49
  %348 = vmatprep.subr.mxu0 0.0
  %349 = vmatpush2.msra.mxu0 %v48
  %350 = vmatprep.subr.mxu0 0.0
  %351 = vmatpush2.msra.mxu0 %v47
  %352 = vmatprep.subr.mxu0 0.0
  %353 = vmatpush2.msra.mxu0 %v46
  %354 = vmatprep.subr.mxu0 0.0
  %355 = vmatpush2.msra.mxu0 %v45
  %356 = vmatprep.subr.mxu0 0.0
  %357 = vmatpush2.msra.mxu0 %v44
  %358 = vmatprep.subr.mxu0 0.0
  %359 = vmatpush2.msra.mxu0 %v43
  %360 = vmatprep.subr.mxu0 0.0
  %361 = vmatpush2.msra.mxu0 %v42
  %362 = vmatprep.subr.mxu0 0.0
  %363 = vmatpush2.msra.mxu0 %v41
  %364 = vmatprep.subr.mxu0 0.0
  %365 = vmatpush2.msra.mxu0 %v40
  %366 = vmatprep.subr.mxu0 0.0
  %367 = vmatpush2.msra.mxu0 %v39
  %368 = vmatprep.mubr.f32.mxu0 %v291
  %369 = vmatmul.mubr.f32.gmra.mxu0 %v290
  %v370 = vpop.f32.mrf.mxu0
  %v371 = vadd.f32 0.0, %v370
  %v372 = vpop.f32.mrf.mxu0
  %373 = vmatprep.mubr.f32.mxu0 %v293
  %374 = vmatmul.mubr.f32.gmra.mxu0 %v292
  %v375 = vpop.f32.mrf.mxu0
  %v376 = vadd.f32 0.0, %v375
  %v377 = vpop.f32.mrf.mxu0
  %378 = vmatprep.mubr.f32.mxu0 %v295
  %379 = vmatmul.mubr.f32.gmra.mxu0 %v294
  %v380 = vpop.f32.mrf.mxu0
  %v381 = vadd.f32 0.0, %v380
  %v382 = vpop.f32.mrf.mxu0
  %383 = vmatprep.mubr.f32.mxu0 %v297
  %384 = vmatmul.mubr.f32.gmra.mxu0 %v296
  %v385 = vpop.f32.mrf.mxu0
  %v386 = vadd.f32 0.0, %v385
  %v387 = vpop.f32.mrf.mxu0
  %388 = vmatprep.mubr.f32.mxu0 %v299
  %389 = vmatmul.mubr.f32.gmra.mxu0 %v298
  %v390 = vpop.f32.mrf.mxu0
  %v391 = vadd.f32 0.0, %v390
  %v392 = vpop.f32.mrf.mxu0
  %393 = vmatprep.mubr.f32.mxu0 %v301
  %394 = vmatmul.mubr.f32.gmra.mxu0 %v300
  %v395 = vpop.f32.mrf.mxu0
  %v396 = vadd.f32 0.0, %v395
  %v397 = vpop.f32.mrf.mxu0
  %398 = vmatprep.mubr.f32.mxu0 %v303
  %399 = vmatmul.mubr.f32.gmra.mxu0 %v302
  %v400 = vpop.f32.mrf.mxu0
  %v401 = vadd.f32 0.0, %v400
  %v402 = vpop.f32.mrf.mxu0
  %403 = vdwg.mxu0
  %v404 = vmax.f32 %v283, %v371
  %v405 = vmax.f32 %v284, %v376
  %v406 = vmax.f32 %v285, %v381
  %v407 = vmax.f32 %v286, %v386
  %v408 = vmax.f32 %v287, %v391
  %v409 = vmax.f32 %v288, %v396
  %v410 = vmax.f32 %v289, %v401
  %v411 = vld [vmem:[%s3] sm:$0xff]
  %v412 = vld [vmem:[%s3 + $0x8] sm:$0xff]
  %v413 = vld [vmem:[%s3 + $0x10] sm:$0xff]
  %v414 = vld [vmem:[%s3 + $0x18] sm:$0xff]
  %v415 = vld [vmem:[%s3 + $0x20] sm:$0xff]
  %v416 = vld [vmem:[%s3 + $0x28] sm:$0xff]
  %v417 = vld [vmem:[%s3 + $0x30] sm:$0xff]
  %v418 = vld [vmem:[%s3 + $0x38] sm:$0xff]
  %v419 = vld [vmem:[%s3 + $0x40] sm:$0xff]
  %v420 = vld [vmem:[%s3 + $0x48] sm:$0xff]
  %v421 = vld [vmem:[%s3 + $0x50] sm:$0xff]
  %v422 = vld [vmem:[%s3 + $0x58] sm:$0xff]
  %v423 = vld [vmem:[%s3 + $0x60] sm:$0xff]
  %v424 = vld [vmem:[%s3 + $0x68] sm:$0xff]
  %425 = vmatprep.subr.mxu0 0.0
  %426 = vmatpush1.msra.mxu0 %v38
  %427 = vmatprep.subr.mxu0 0.0
  %428 = vmatpush1.msra.mxu0 %v37
  %429 = vmatprep.subr.mxu0 0.0
  %430 = vmatpush1.msra.mxu0 %v36
  %431 = vmatprep.subr.mxu0 0.0
  %432 = vmatpush1.msra.mxu0 %v35
  %433 = vmatprep.subr.mxu0 0.0
  %434 = vmatpush1.msra.mxu0 %v34
  %435 = vmatprep.subr.mxu0 0.0
  %436 = vmatpush1.msra.mxu0 %v33
  %437 = vmatprep.subr.mxu0 0.0
  %438 = vmatpush1.msra.mxu0 %v32
  %439 = vmatprep.subr.mxu0 0.0
  %440 = vmatpush1.msra.mxu0 %v31
  %441 = vmatprep.subr.mxu0 0.0
  %442 = vmatpush1.msra.mxu0 %v30
  %443 = vmatprep.subr.mxu0 0.0
  %444 = vmatpush1.msra.mxu0 %v29
  %445 = vmatprep.subr.mxu0 0.0
  %446 = vmatpush1.msra.mxu0 %v28
  %447 = vmatprep.subr.mxu0 0.0
  %448 = vmatpush1.msra.mxu0 %v27
  %449 = vmatprep.subr.mxu0 0.0
  %450 = vmatpush1.msra.mxu0 %v26
  %451 = vmatprep.subr.mxu0 0.0
  %452 = vmatpush1.msra.mxu0 %v25
  %453 = vmatprep.subr.mxu0 0.0
  %454 = vmatpush1.msra.mxu0 %v24
  %455 = vmatprep.subr.mxu0 0.0
  %456 = vmatpush1.msra.mxu0 %v23
  %457 = vmatprep.subr.mxu0 0.0
  %458 = vmatpush2.msra.mxu0 %v54
  %459 = vmatprep.subr.mxu0 0.0
  %460 = vmatpush2.msra.mxu0 %v53
  %461 = vmatprep.subr.mxu0 0.0
  %462 = vmatpush2.msra.mxu0 %v52
  %463 = vmatprep.subr.mxu0 0.0
  %464 = vmatpush2.msra.mxu0 %v51
  %465 = vmatprep.subr.mxu0 0.0
  %466 = vmatpush2.msra.mxu0 %v50
  %467 = vmatprep.subr.mxu0 0.0
  %468 = vmatpush2.msra.mxu0 %v49
  %469 = vmatprep.subr.mxu0 0.0
  %470 = vmatpush2.msra.mxu0 %v48
  %471 = vmatprep.subr.mxu0 0.0
  %472 = vmatpush2.msra.mxu0 %v47
  %473 = vmatprep.subr.mxu0 0.0
  %474 = vmatpush2.msra.mxu0 %v46
  %475 = vmatprep.subr.mxu0 0.0
  %476 = vmatpush2.msra.mxu0 %v45
  %477 = vmatprep.subr.mxu0 0.0
  %478 = vmatpush2.msra.mxu0 %v44
  %479 = vmatprep.subr.mxu0 0.0
  %480 = vmatpush2.msra.mxu0 %v43
  %481 = vmatprep.subr.mxu0 0.0
  %482 = vmatpush2.msra.mxu0 %v42
  %483 = vmatprep.subr.mxu0 0.0
  %484 = vmatpush2.msra.mxu0 %v41
  %485 = vmatprep.subr.mxu0 0.0
  %486 = vmatpush2.msra.mxu0 %v40
  %487 = vmatprep.subr.mxu0 0.0
  %488 = vmatpush2.msra.mxu0 %v39
  %489 = vmatprep.mubr.f32.mxu0 %v412
  %490 = vmatmul.mubr.f32.gmra.mxu0 %v411
  %v491 = vpop.f32.mrf.mxu0
  %v492 = vadd.f32 0.0, %v491
  %v493 = vpop.f32.mrf.mxu0
  %494 = vmatprep.mubr.f32.mxu0 %v414
  %495 = vmatmul.mubr.f32.gmra.mxu0 %v413
  %v496 = vpop.f32.mrf.mxu0
  %v497 = vadd.f32 0.0, %v496
  %v498 = vpop.f32.mrf.mxu0
  %499 = vmatprep.mubr.f32.mxu0 %v416
  %500 = vmatmul.mubr.f32.gmra.mxu0 %v415
  %v501 = vpop.f32.mrf.mxu0
  %v502 = vadd.f32 0.0, %v501
  %v503 = vpop.f32.mrf.mxu0
  %504 = vmatprep.mubr.f32.mxu0 %v418
  %505 = vmatmul.mubr.f32.gmra.mxu0 %v417
  %v506 = vpop.f32.mrf.mxu0
  %v507 = vadd.f32 0.0, %v506
  %v508 = vpop.f32.mrf.mxu0
  %509 = vmatprep.mubr.f32.mxu0 %v420
  %510 = vmatmul.mubr.f32.gmra.mxu0 %v419
  %v511 = vpop.f32.mrf.mxu0
  %v512 = vadd.f32 0.0, %v511
  %v513 = vpop.f32.mrf.mxu0
  %514 = vmatprep.mubr.f32.mxu0 %v422
  %515 = vmatmul.mubr.f32.gmra.mxu0 %v421
  %v516 = vpop.f32.mrf.mxu0
  %v517 = vadd.f32 0.0, %v516
  %v518 = vpop.f32.mrf.mxu0
  %519 = vmatprep.mubr.f32.mxu0 %v424
  %520 = vmatmul.mubr.f32.gmra.mxu0 %v423
  %v521 = vpop.f32.mrf.mxu0
  %v522 = vadd.f32 0.0, %v521
  %v523 = vpop.f32.mrf.mxu0
  %524 = vdwg.mxu0
  %v525 = vmax.f32 %v404, %v492
  %v526 = vmax.f32 %v405, %v497
  %v527 = vmax.f32 %v406, %v502
  %v528 = vmax.f32 %v407, %v507
  %v529 = vmax.f32 %v408, %v512
  %v530 = vmax.f32 %v409, %v517
  %v531 = vmax.f32 %v410, %v522
  %v532 = vld [vmem:[%s5] sm:$0x1]
  %v534 = vlaneseq
  %v535 = vshrl.u32 %v534, 7
  %v536 = vsub.s32 0, %v535
  %v537 = vrot.slane %v532, %v536
  %v539 = vadd.f32 %v525, %v537
  %v540 = vadd.f32 %v526, %v537
  %v541 = vadd.f32 %v527, %v537
  %v542 = vadd.f32 %v528, %v537
  %v543 = vadd.f32 %v529, %v537
  %v544 = vadd.f32 %v530, %v537
  %v545 = vadd.f32 %v531, %v537
  %v546 = vmax.f32 %v539, 0.0
  %v547 = vmax.f32 %v540, 0.0
  %v548 = vmax.f32 %v541, 0.0
  %v549 = vmax.f32 %v542, 0.0
  %v550 = vmax.f32 %v543, 0.0
  %v551 = vmax.f32 %v544, 0.0
  %v552 = vmax.f32 %v545, 0.0
  %553 = vst [vmem:[%s6] sm:$0xff] %v546
  %554 = vst [vmem:[%s6 + $0x8] sm:$0xff] %v547
  %555 = vst [vmem:[%s6 + $0x10] sm:$0xff] %v548
  %556 = vst [vmem:[%s6 + $0x18] sm:$0xff] %v549
  %557 = vst [vmem:[%s6 + $0x20] sm:$0xff] %v550
  %558 = vst [vmem:[%s6 + $0x28] sm:$0xff] %v551
  %559 = vst [vmem:[%s6 + $0x30] sm:$0xff] %v552
  // Predicated region
  $region26: #{net_forward.4} parent=0 // pred_check
    _
  $region27: #{net_forward.4} parent=0 // pred_check_branch
    %561 = sbr.rel (0) target = $region29
  $region28: #{net_forward.4} parent=0 // pred_region
    _
  $region29: #{net_forward.4} parent=0 // pred_fallthru
    _
  // Predicated region
  $region30: #{net_forward.4} parent=0 // pred_check
    _
  $region31: #{net_forward.4} parent=0 // pred_check_branch
    %563 = sbr.rel (0) target = $region33
  $region32: #{net_forward.4} parent=0 // pred_region
    _
  $region33: #{net_forward.4} parent=0 // pred_fallthru
    _

// kernel: net_forward.5
$region0: #{net_forward.5}
  #allocation0 [shape = 'u32[]', space=smem, size = 0x4, offset = 0x4, fixed_abs, tag = 'smem constant byte address 0x4 - core index']
  #allocation1 [shape = 'u32[144,128]{1,0:T(1,128)}', space=vmem, size = 0x12000, scoped, tag = 'internal scratch']
  %s0 = inlined_call_operand.vmem [shape: f32[8,512], index: 0, kind: input, shape index: {}]
  %s1 = inlined_call_operand.vmem [shape: f32[512,128], index: 1, kind: input, shape index: {}]
  %s2 = inlined_call_operand.vmem [shape: f32[1,128], index: 2, kind: input, shape index: {}]
  %s3 = inlined_call_operand.vmem [shape: f32[128,128], index: 3, kind: input, shape index: {}]
  %s4 = inlined_call_operand.vmem [shape: f32[1,128], index: 4, kind: input, shape index: {}]
  %s5 = inlined_call_operand.vmem [shape: f32[128,128], index: 5, kind: input, shape index: {}]
  %s6 = inlined_call_operand.vmem [shape: f32[1,128], index: 6, kind: input, shape index: {}]
  %s7 = inlined_call_operand.vmem [shape: f32[8,128], index: 7, kind: output, shape index: {}]
  %s8 = sld [smem:[#allocation0]]
  $region38: #{net_forward.5} parent=0
    _
  %s10 = ssub.s32 1, %s8
  %s11 = scalar_select 0, %s10, %s8
  // Predicated region
  $region2: #{net_forward.5} parent=0 // pred_check
    _
  $region3: #{net_forward.5} parent=0 // pred_check_branch
    %13 = sbr.rel (0) target = $region5
  $region4: #{net_forward.5} parent=0 // pred_region
    _
  $region5: #{net_forward.5} parent=0 // pred_fallthru
    _
  // Predicated region
  $region6: #{net_forward.5} parent=0 // pred_check
    _
  $region7: #{net_forward.5} parent=0 // pred_check_branch
    %15 = sbr.rel (0) target = $region9
  $region8: #{net_forward.5} parent=0 // pred_region
    _
  $region9: #{net_forward.5} parent=0 // pred_fallthru
    _
  // Predicated region
  $region10: #{net_forward.5} parent=0 // pred_check
    _
  $region11: #{net_forward.5} parent=0 // pred_check_branch
    %17 = sbr.rel (0) target = $region13
  $region12: #{net_forward.5} parent=0 // pred_region
    _
  $region13: #{net_forward.5} parent=0 // pred_fallthru
    _
  // Predicated region
  $region14: #{net_forward.5} parent=0 // pred_check
    _
  $region15: #{net_forward.5} parent=0 // pred_check_branch
    %19 = sbr.rel (0) target = $region17
  $region16: #{net_forward.5} parent=0 // pred_region
    _
  $region17: #{net_forward.5} parent=0 // pred_fallthru
    _
  // Predicated region
  $region18: #{net_forward.5} parent=0 // pred_check
    _
  $region19: #{net_forward.5} parent=0 // pred_check_branch
    %21 = sbr.rel (0) target = $region21
  $region20: #{net_forward.5} parent=0 // pred_region
    _
  $region21: #{net_forward.5} parent=0 // pred_fallthru
    _
  // Predicated region
  $region22: #{net_forward.5} parent=0 // pred_check
    _
  $region23: #{net_forward.5} parent=0 // pred_check_branch
    %23 = sbr.rel (0) target = $region25
  $region24: #{net_forward.5} parent=0 // pred_region
    _
  $region25: #{net_forward.5} parent=0 // pred_fallthru
    _
  // Predicated region
  $region26: #{net_forward.5} parent=0 // pred_check
    _
  $region27: #{net_forward.5} parent=0 // pred_check_branch
    %25 = sbr.rel (0) target = $region29
  $region28: #{net_forward.5} parent=0 // pred_region
    _
  $region29: #{net_forward.5} parent=0 // pred_fallthru
    _
  %v26 = vld [vmem:[%s0] sm:$0xff]
  %v27 = vld [vmem:[%s0 + $0x8] sm:$0xff]
  %v28 = vld [vmem:[%s0 + $0x10] sm:$0xff]
  %v29 = vld [vmem:[%s0 + $0x18] sm:$0xff]
  %v30 = vld [vmem:[%s1] sm:$0xff]
  %v31 = vld [vmem:[%s1 + $0x8] sm:$0xff]
  %v32 = vld [vmem:[%s1 + $0x10] sm:$0xff]
  %v33 = vld [vmem:[%s1 + $0x18] sm:$0xff]
  %v34 = vld [vmem:[%s1 + $0x20] sm:$0xff]
  %v35 = vld [vmem:[%s1 + $0x28] sm:$0xff]
  %v36 = vld [vmem:[%s1 + $0x30] sm:$0xff]
  %v37 = vld [vmem:[%s1 + $0x38] sm:$0xff]
  %v38 = vld [vmem:[%s1 + $0x40] sm:$0xff]
  %v39 = vld [vmem:[%s1 + $0x48] sm:$0xff]
  %v40 = vld [vmem:[%s1 + $0x50] sm:$0xff]
  %v41 = vld [vmem:[%s1 + $0x58] sm:$0xff]
  %v42 = vld [vmem:[%s1 + $0x60] sm:$0xff]
  %v43 = vld [vmem:[%s1 + $0x68] sm:$0xff]
  %v44 = vld [vmem:[%s1 + $0x70] sm:$0xff]
  %v45 = vld [vmem:[%s1 + $0x78] sm:$0xff]
  %v46 = vld [vmem:[%s1 + $0x80] sm:$0xff]
  %v47 = vld [vmem:[%s1 + $0x88] sm:$0xff]
  %v48 = vld [vmem:[%s1 + $0x90] sm:$0xff]
  %v49 = vld [vmem:[%s1 + $0x98] sm:$0xff]
  %v50 = vld [vmem:[%s1 + $0xa0] sm:$0xff]
  %v51 = vld [vmem:[%s1 + $0xa8] sm:$0xff]
  %v52 = vld [vmem:[%s1 + $0xb0] sm:$0xff]
  %v53 = vld [vmem:[%s1 + $0xb8] sm:$0xff]
  %v54 = vld [vmem:[%s1 + $0xc0] sm:$0xff]
  %v55 = vld [vmem:[%s1 + $0xc8] sm:$0xff]
  %v56 = vld [vmem:[%s1 + $0xd0] sm:$0xff]
  %v57 = vld [vmem:[%s1 + $0xd8] sm:$0xff]
  %v58 = vld [vmem:[%s1 + $0xe0] sm:$0xff]
  %v59 = vld [vmem:[%s1 + $0xe8] sm:$0xff]
  %v60 = vld [vmem:[%s1 + $0xf0] sm:$0xff]
  %v61 = vld [vmem:[%s1 + $0xf8] sm:$0xff]
  %v62 = vld [vmem:[%s1 + $0x100] sm:$0xff]
  %v63 = vld [vmem:[%s1 + $0x108] sm:$0xff]
  %v64 = vld [vmem:[%s1 + $0x110] sm:$0xff]
  %v65 = vld [vmem:[%s1 + $0x118] sm:$0xff]
  %v66 = vld [vmem:[%s1 + $0x120] sm:$0xff]
  %v67 = vld [vmem:[%s1 + $0x128] sm:$0xff]
  %v68 = vld [vmem:[%s1 + $0x130] sm:$0xff]
  %v69 = vld [vmem:[%s1 + $0x138] sm:$0xff]
  %v70 = vld [vmem:[%s1 + $0x140] sm:$0xff]
  %v71 = vld [vmem:[%s1 + $0x148] sm:$0xff]
  %v72 = vld [vmem:[%s1 + $0x150] sm:$0xff]
  %v73 = vld [vmem:[%s1 + $0x158] sm:$0xff]
  %v74 = vld [vmem:[%s1 + $0x160] sm:$0xff]
  %v75 = vld [vmem:[%s1 + $0x168] sm:$0xff]
  %v76 = vld [vmem:[%s1 + $0x170] sm:$0xff]
  %v77 = vld [vmem:[%s1 + $0x178] sm:$0xff]
  %v78 = vld [vmem:[%s1 + $0x180] sm:$0xff]
  %v79 = vld [vmem:[%s1 + $0x188] sm:$0xff]
  %v80 = vld [vmem:[%s1 + $0x190] sm:$0xff]
  %v81 = vld [vmem:[%s1 + $0x198] sm:$0xff]
  %v82 = vld [vmem:[%s1 + $0x1a0] sm:$0xff]
  %v83 = vld [vmem:[%s1 + $0x1a8] sm:$0xff]
  %v84 = vld [vmem:[%s1 + $0x1b0] sm:$0xff]
  %v85 = vld [vmem:[%s1 + $0x1b8] sm:$0xff]
  %v86 = vld [vmem:[%s1 + $0x1c0] sm:$0xff]
  %v87 = vld [vmem:[%s1 + $0x1c8] sm:$0xff]
  %v88 = vld [vmem:[%s1 + $0x1d0] sm:$0xff]
  %v89 = vld [vmem:[%s1 + $0x1d8] sm:$0xff]
  %v90 = vld [vmem:[%s1 + $0x1e0] sm:$0xff]
  %v91 = vld [vmem:[%s1 + $0x1e8] sm:$0xff]
  %v92 = vld [vmem:[%s1 + $0x1f0] sm:$0xff]
  %v93 = vld [vmem:[%s1 + $0x1f8] sm:$0xff]
  %v94 = vld [vmem:[%s2] sm:$0x1]
  %v96 = vlaneseq
  %v97 = vshrl.u32 %v96, 7
  %v98 = vsub.s32 0, %v97
  %v99 = vrot.slane %v94, %v98
  %101 = vmatprep.subr.mxu0 0.0
  %102 = vmatpush1.msra.mxu0 %v45
  %103 = vmatprep.subr.mxu0 0.0
  %104 = vmatpush1.msra.mxu0 %v44
  %105 = vmatprep.subr.mxu0 0.0
  %106 = vmatpush1.msra.mxu0 %v43
  %107 = vmatprep.subr.mxu0 0.0
  %108 = vmatpush1.msra.mxu0 %v42
  %109 = vmatprep.subr.mxu0 0.0
  %110 = vmatpush1.msra.mxu0 %v41
  %111 = vmatprep.subr.mxu0 0.0
  %112 = vmatpush1.msra.mxu0 %v40
  %113 = vmatprep.subr.mxu0 0.0
  %114 = vmatpush1.msra.mxu0 %v39
  %115 = vmatprep.subr.mxu0 0.0
  %116 = vmatpush1.msra.mxu0 %v38
  %117 = vmatprep.subr.mxu0 0.0
  %118 = vmatpush1.msra.mxu0 %v37
  %119 = vmatprep.subr.mxu0 0.0
  %120 = vmatpush1.msra.mxu0 %v36
  %121 = vmatprep.subr.mxu0 0.0
  %122 = vmatpush1.msra.mxu0 %v35
  %123 = vmatprep.subr.mxu0 0.0
  %124 = vmatpush1.msra.mxu0 %v34
  %125 = vmatprep.subr.mxu0 0.0
  %126 = vmatpush1.msra.mxu0 %v33
  %127 = vmatprep.subr.mxu0 0.0
  %128 = vmatpush1.msra.mxu0 %v32
  %129 = vmatprep.subr.mxu0 0.0
  %130 = vmatpush1.msra.mxu0 %v31
  %131 = vmatprep.subr.mxu0 0.0
  %132 = vmatpush1.msra.mxu0 %v30
  %133 = vmatprep.subr.mxu0 0.0
  %134 = vmatpush2.msra.mxu0 %v61
  %135 = vmatprep.subr.mxu0 0.0
  %136 = vmatpush2.msra.mxu0 %v60
  %137 = vmatprep.subr.mxu0 0.0
  %138 = vmatpush2.msra.mxu0 %v59
  %139 = vmatprep.subr.mxu0 0.0
  %140 = vmatpush2.msra.mxu0 %v58
  %141 = vmatprep.subr.mxu0 0.0
  %142 = vmatpush2.msra.mxu0 %v57
  %143 = vmatprep.subr.mxu0 0.0
  %144 = vmatpush2.msra.mxu0 %v56
  %145 = vmatprep.subr.mxu0 0.0
  %146 = vmatpush2.msra.mxu0 %v55
  %147 = vmatprep.subr.mxu0 0.0
  %148 = vmatpush2.msra.mxu0 %v54
  %149 = vmatprep.subr.mxu0 0.0
  %150 = vmatpush2.msra.mxu0 %v53
  %151 = vmatprep.subr.mxu0 0.0
  %152 = vmatpush2.msra.mxu0 %v52
  %153 = vmatprep.subr.mxu0 0.0
  %154 = vmatpush2.msra.mxu0 %v51
  %155 = vmatprep.subr.mxu0 0.0
  %156 = vmatpush2.msra.mxu0 %v50
  %157 = vmatprep.subr.mxu0 0.0
  %158 = vmatpush2.msra.mxu0 %v49
  %159 = vmatprep.subr.mxu0 0.0
  %160 = vmatpush2.msra.mxu0 %v48
  %161 = vmatprep.subr.mxu0 0.0
  %162 = vmatpush2.msra.mxu0 %v47
  %163 = vmatprep.subr.mxu0 0.0
  %164 = vmatpush2.msra.mxu0 %v46
  %165 = vmatprep.mubr.f32.mxu0 %v27
  %166 = vmatmul.mubr.f32.gmra.mxu0 %v26
  %v167 = vpop.f32.mrf.mxu0
  %v168 = vadd.f32 %v99, %v167
  %v169 = vpop.f32.mrf.mxu0
  %170 = vdwg.mxu0
  %171 = vmatprep.subr.mxu0 0.0
  %172 = vmatpush1.msra.mxu0 %v77
  %173 = vmatprep.subr.mxu0 0.0
  %174 = vmatpush1.msra.mxu0 %v76
  %175 = vmatprep.subr.mxu0 0.0
  %176 = vmatpush1.msra.mxu0 %v75
  %177 = vmatprep.subr.mxu0 0.0
  %178 = vmatpush1.msra.mxu0 %v74
  %179 = vmatprep.subr.mxu0 0.0
  %180 = vmatpush1.msra.mxu0 %v73
  %181 = vmatprep.subr.mxu0 0.0
  %182 = vmatpush1.msra.mxu0 %v72
  %183 = vmatprep.subr.mxu0 0.0
  %184 = vmatpush1.msra.mxu0 %v71
  %185 = vmatprep.subr.mxu0 0.0
  %186 = vmatpush1.msra.mxu0 %v70
  %187 = vmatprep.subr.mxu0 0.0
  %188 = vmatpush1.msra.mxu0 %v69
  %189 = vmatprep.subr.mxu0 0.0
  %190 = vmatpush1.msra.mxu0 %v68
  %191 = vmatprep.subr.mxu0 0.0
  %192 = vmatpush1.msra.mxu0 %v67
  %193 = vmatprep.subr.mxu0 0.0
  %194 = vmatpush1.msra.mxu0 %v66
  %195 = vmatprep.subr.mxu0 0.0
  %196 = vmatpush1.msra.mxu0 %v65
  %197 = vmatprep.subr.mxu0 0.0
  %198 = vmatpush1.msra.mxu0 %v64
  %199 = vmatprep.subr.mxu0 0.0
  %200 = vmatpush1.msra.mxu0 %v63
  %201 = vmatprep.subr.mxu0 0.0
  %202 = vmatpush1.msra.mxu0 %v62
  %203 = vmatprep.subr.mxu0 0.0
  %204 = vmatpush2.msra.mxu0 %v93
  %205 = vmatprep.subr.mxu0 0.0
  %206 = vmatpush2.msra.mxu0 %v92
  %207 = vmatprep.subr.mxu0 0.0
  %208 = vmatpush2.msra.mxu0 %v91
  %209 = vmatprep.subr.mxu0 0.0
  %210 = vmatpush2.msra.mxu0 %v90
  %211 = vmatprep.subr.mxu0 0.0
  %212 = vmatpush2.msra.mxu0 %v89
  %213 = vmatprep.subr.mxu0 0.0
  %214 = vmatpush2.msra.mxu0 %v88
  %215 = vmatprep.subr.mxu0 0.0
  %216 = vmatpush2.msra.mxu0 %v87
  %217 = vmatprep.subr.mxu0 0.0
  %218 = vmatpush2.msra.mxu0 %v86
  %219 = vmatprep.subr.mxu0 0.0
  %220 = vmatpush2.msra.mxu0 %v85
  %221 = vmatprep.subr.mxu0 0.0
  %222 = vmatpush2.msra.mxu0 %v84
  %223 = vmatprep.subr.mxu0 0.0
  %224 = vmatpush2.msra.mxu0 %v83
  %225 = vmatprep.subr.mxu0 0.0
  %226 = vmatpush2.msra.mxu0 %v82
  %227 = vmatprep.subr.mxu0 0.0
  %228 = vmatpush2.msra.mxu0 %v81
  %229 = vmatprep.subr.mxu0 0.0
  %230 = vmatpush2.msra.mxu0 %v80
  %231 = vmatprep.subr.mxu0 0.0
  %232 = vmatpush2.msra.mxu0 %v79
  %233 = vmatprep.subr.mxu0 0.0
  %234 = vmatpush2.msra.mxu0 %v78
  %235 = vmatprep.mubr.f32.mxu0 %v29
  %236 = vmatmul.mubr.f32.gmra.mxu0 %v28
  %v237 = vpop.f32.mrf.mxu0
  %v238 = vadd.f32 %v168, %v237
  %v239 = vpop.f32.mrf.mxu0
  %240 = vdwg.mxu0
  %v241 = vmax.f32 %v238, 0.0
  %v242 = vld [vmem:[%s3] sm:$0xff]
  %v243 = vld [vmem:[%s3 + $0x8] sm:$0xff]
  %v244 = vld [vmem:[%s3 + $0x10] sm:$0xff]
  %v245 = vld [vmem:[%s3 + $0x18] sm:$0xff]
  %v246 = vld [vmem:[%s3 + $0x20] sm:$0xff]
  %v247 = vld [vmem:[%s3 + $0x28] sm:$0xff]
  %v248 = vld [vmem:[%s3 + $0x30] sm:$0xff]
  %v249 = vld [vmem:[%s3 + $0x38] sm:$0xff]
  %v250 = vld [vmem:[%s3 + $0x40] sm:$0xff]
  %v251 = vld [vmem:[%s3 + $0x48] sm:$0xff]
  %v252 = vld [vmem:[%s3 + $0x50] sm:$0xff]
  %v253 = vld [vmem:[%s3 + $0x58] sm:$0xff]
  %v254 = vld [vmem:[%s3 + $0x60] sm:$0xff]
  %v255 = vld [vmem:[%s3 + $0x68] sm:$0xff]
  %v256 = vld [vmem:[%s3 + $0x70] sm:$0xff]
  %v257 = vld [vmem:[%s3 + $0x78] sm:$0xff]
  %v258 = vld [vmem:[%s4] sm:$0x1]
  %v260 = vlaneseq
  %v261 = vshrl.u32 %v260, 7
  %v262 = vsub.s32 0, %v261
  %v263 = vrot.slane %v258, %v262
  %265 = vmatprep.subr.mxu0 0.0
  %266 = vmatpush1.msra.mxu0 %v257
  %267 = vmatprep.subr.mxu0 0.0
  %268 = vmatpush1.msra.mxu0 %v256
  %269 = vmatprep.subr.mxu0 0.0
  %270 = vmatpush1.msra.mxu0 %v255
  %271 = vmatprep.subr.mxu0 0.0
  %272 = vmatpush1.msra.mxu0 %v254
  %273 = vmatprep.subr.mxu0 0.0
  %274 = vmatpush1.msra.mxu0 %v253
  %275 = vmatprep.subr.mxu0 0.0
  %276 = vmatpush1.msra.mxu0 %v252
  %277 = vmatprep.subr.mxu0 0.0
  %278 = vmatpush1.msra.mxu0 %v251
  %279 = vmatprep.subr.mxu0 0.0
  %280 = vmatpush1.msra.mxu0 %v250
  %281 = vmatprep.subr.mxu0 0.0
  %282 = vmatpush1.msra.mxu0 %v249
  %283 = vmatprep.subr.mxu0 0.0
  %284 = vmatpush1.msra.mxu0 %v248
  %285 = vmatprep.subr.mxu0 0.0
  %286 = vmatpush1.msra.mxu0 %v247
  %287 = vmatprep.subr.mxu0 0.0
  %288 = vmatpush1.msra.mxu0 %v246
  %289 = vmatprep.subr.mxu0 0.0
  %290 = vmatpush1.msra.mxu0 %v245
  %291 = vmatprep.subr.mxu0 0.0
  %292 = vmatpush1.msra.mxu0 %v244
  %293 = vmatprep.subr.mxu0 0.0
  %294 = vmatpush1.msra.mxu0 %v243
  %295 = vmatprep.subr.mxu0 0.0
  %296 = vmatpush1.msra.mxu0 %v242
  %297 = vmatprep.subr.mxu0 0.0
  %298 = vmatpush2.msra.mxu0 0.0
  %299 = vmatprep.subr.mxu0 0.0
  %300 = vmatpush2.msra.mxu0 0.0
  %301 = vmatprep.subr.mxu0 0.0
  %302 = vmatpush2.msra.mxu0 0.0
  %303 = vmatprep.subr.mxu0 0.0
  %304 = vmatpush2.msra.mxu0 0.0
  %305 = vmatprep.subr.mxu0 0.0
  %306 = vmatpush2.msra.mxu0 0.0
  %307 = vmatprep.subr.mxu0 0.0
  %308 = vmatpush2.msra.mxu0 0.0
  %309 = vmatprep.subr.mxu0 0.0
  %310 = vmatpush2.msra.mxu0 0.0
  %311 = vmatprep.subr.mxu0 0.0
  %312 = vmatpush2.msra.mxu0 0.0
  %313 = vmatprep.subr.mxu0 0.0
  %314 = vmatpush2.msra.mxu0 0.0
  %315 = vmatprep.subr.mxu0 0.0
  %316 = vmatpush2.msra.mxu0 0.0
  %317 = vmatprep.subr.mxu0 0.0
  %318 = vmatpush2.msra.mxu0 0.0
  %319 = vmatprep.subr.mxu0 0.0
  %320 = vmatpush2.msra.mxu0 0.0
  %321 = vmatprep.subr.mxu0 0.0
  %322 = vmatpush2.msra.mxu0 0.0
  %323 = vmatprep.subr.mxu0 0.0
  %324 = vmatpush2.msra.mxu0 0.0
  %325 = vmatprep.subr.mxu0 0.0
  %326 = vmatpush2.msra.mxu0 0.0
  %327 = vmatprep.subr.mxu0 0.0
  %328 = vmatpush2.msra.mxu0 0.0
  %329 = vmatprep.mubr.f32.mxu0 0.0
  %330 = vmatmul.mubr.f32.gmra.mxu0 %v241
  %v331 = vpop.f32.mrf.mxu0
  %v332 = vadd.f32 %v263, %v331
  %v333 = vpop.f32.mrf.mxu0
  %334 = vdwg.mxu0
  %v335 = vmax.f32 %v332, 0.0
  %v336 = vld [vmem:[%s5] sm:$0xff]
  %v337 = vld [vmem:[%s5 + $0x8] sm:$0xff]
  %v338 = vld [vmem:[%s5 + $0x10] sm:$0xff]
  %v339 = vld [vmem:[%s5 + $0x18] sm:$0xff]
  %v340 = vld [vmem:[%s5 + $0x20] sm:$0xff]
  %v341 = vld [vmem:[%s5 + $0x28] sm:$0xff]
  %v342 = vld [vmem:[%s5 + $0x30] sm:$0xff]
  %v343 = vld [vmem:[%s5 + $0x38] sm:$0xff]
  %v344 = vld [vmem:[%s5 + $0x40] sm:$0xff]
  %v345 = vld [vmem:[%s5 + $0x48] sm:$0xff]
  %v346 = vld [vmem:[%s5 + $0x50] sm:$0xff]
  %v347 = vld [vmem:[%s5 + $0x58] sm:$0xff]
  %v348 = vld [vmem:[%s5 + $0x60] sm:$0xff]
  %v349 = vld [vmem:[%s5 + $0x68] sm:$0xff]
  %v350 = vld [vmem:[%s5 + $0x70] sm:$0xff]
  %v351 = vld [vmem:[%s5 + $0x78] sm:$0xff]
  %v352 = vld [vmem:[%s6] sm:$0x1]
  %v354 = vlaneseq
  %v355 = vshrl.u32 %v354, 7
  %v356 = vsub.s32 0, %v355
  %v357 = vrot.slane %v352, %v356
  %359 = vmatprep.subr.mxu0 0.0
  %360 = vmatpush1.msra.mxu0 %v351
  %361 = vmatprep.subr.mxu0 0.0
  %362 = vmatpush1.msra.mxu0 %v350
  %363 = vmatprep.subr.mxu0 0.0
  %364 = vmatpush1.msra.mxu0 %v349
  %365 = vmatprep.subr.mxu0 0.0
  %366 = vmatpush1.msra.mxu0 %v348
  %367 = vmatprep.subr.mxu0 0.0
  %368 = vmatpush1.msra.mxu0 %v347
  %369 = vmatprep.subr.mxu0 0.0
  %370 = vmatpush1.msra.mxu0 %v346
  %371 = vmatprep.subr.mxu0 0.0
  %372 = vmatpush1.msra.mxu0 %v345
  %373 = vmatprep.subr.mxu0 0.0
  %374 = vmatpush1.msra.mxu0 %v344
  %375 = vmatprep.subr.mxu0 0.0
  %376 = vmatpush1.msra.mxu0 %v343
  %377 = vmatprep.subr.mxu0 0.0
  %378 = vmatpush1.msra.mxu0 %v342
  %379 = vmatprep.subr.mxu0 0.0
  %380 = vmatpush1.msra.mxu0 %v341
  %381 = vmatprep.subr.mxu0 0.0
  %382 = vmatpush1.msra.mxu0 %v340
  %383 = vmatprep.subr.mxu0 0.0
  %384 = vmatpush1.msra.mxu0 %v339
  %385 = vmatprep.subr.mxu0 0.0
  %386 = vmatpush1.msra.mxu0 %v338
  %387 = vmatprep.subr.mxu0 0.0
  %388 = vmatpush1.msra.mxu0 %v337
  %389 = vmatprep.subr.mxu0 0.0
  %390 = vmatpush1.msra.mxu0 %v336
  %391 = vmatprep.subr.mxu0 0.0
  %392 = vmatpush2.msra.mxu0 0.0
  %393 = vmatprep.subr.mxu0 0.0
  %394 = vmatpush2.msra.mxu0 0.0
  %395 = vmatprep.subr.mxu0 0.0
  %396 = vmatpush2.msra.mxu0 0.0
  %397 = vmatprep.subr.mxu0 0.0
  %398 = vmatpush2.msra.mxu0 0.0
  %399 = vmatprep.subr.mxu0 0.0
  %400 = vmatpush2.msra.mxu0 0.0
  %401 = vmatprep.subr.mxu0 0.0
  %402 = vmatpush2.msra.mxu0 0.0
  %403 = vmatprep.subr.mxu0 0.0
  %404 = vmatpush2.msra.mxu0 0.0
  %405 = vmatprep.subr.mxu0 0.0
  %406 = vmatpush2.msra.mxu0 0.0
  %407 = vmatprep.subr.mxu0 0.0
  %408 = vmatpush2.msra.mxu0 0.0
  %409 = vmatprep.subr.mxu0 0.0
  %410 = vmatpush2.msra.mxu0 0.0
  %411 = vmatprep.subr.mxu0 0.0
  %412 = vmatpush2.msra.mxu0 0.0
  %413 = vmatprep.subr.mxu0 0.0
  %414 = vmatpush2.msra.mxu0 0.0
  %415 = vmatprep.subr.mxu0 0.0
  %416 = vmatpush2.msra.mxu0 0.0
  %417 = vmatprep.subr.mxu0 0.0
  %418 = vmatpush2.msra.mxu0 0.0
  %419 = vmatprep.subr.mxu0 0.0
  %420 = vmatpush2.msra.mxu0 0.0
  %421 = vmatprep.subr.mxu0 0.0
  %422 = vmatpush2.msra.mxu0 0.0
  %423 = vmatprep.mubr.f32.mxu0 0.0
  %424 = vmatmul.mubr.f32.gmra.mxu0 %v335
  %v425 = vpop.f32.mrf.mxu0
  %v426 = vadd.f32 %v357, %v425
  %v427 = vpop.f32.mrf.mxu0
  %428 = vdwg.mxu0
  %429 = vst [vmem:[%s7] sm:$0xff] %v426
  // Predicated region
  $region30: #{net_forward.5} parent=0 // pred_check
    _
  $region31: #{net_forward.5} parent=0 // pred_check_branch
    %431 = sbr.rel (0) target = $region33
  $region32: #{net_forward.5} parent=0 // pred_region
    _
  $region33: #{net_forward.5} parent=0 // pred_fallthru
    _
  // Predicated region
  $region34: #{net_forward.5} parent=0 // pred_check
    _
  $region35: #{net_forward.5} parent=0 // pred_check_branch
    %433 = sbr.rel (0) target = $region37
  $region36: #{net_forward.5} parent=0 // pred_region
    _
  $region37: #{net_forward.5} parent=0 // pred_fallthru
    _

</llo_original>
